<compile_context>
chip_gen: v7x
topology: tpu7x:2x2x1
jax: 0.10.0
libtpu: 0.0.40
codegen_flags: <defaults>
</compile_context>

<pallas_src>
import math
import functools

import jax
import jax.numpy as jnp
import numpy as np
from jax import lax
from jax.experimental import pallas as pl
from jax.experimental.pallas import tpu as pltpu

# ----------------------------- configuration (opt) ---------------------------
VOCAB = 20            # dicts.size()
WORD_VEC_SIZE = 32    # opt.word_vec_size
RNN_SIZE = 64         # opt.rnn_size
LAYERS = 2            # opt.layers
BRNN = True           # opt.brnn
NUM_DIRECTIONS = 2 if BRNN else 1
HIDDEN = RNN_SIZE // NUM_DIRECTIONS
PAD = 0               # onmt.Constants.PAD
BATCH = 2
SEQ = 8

assert NUM_DIRECTIONS == 2, "fused kernel below is written for opt.brnn=True"


# ------------------------------ fused encoder kernel -------------------------
def _encoder_kernel(ids_ref, ew0_ref, wih_ref, whh_ref, bias_ref,
                    out_ref, hn_ref, cn_ref, hid_sc, *, T, B, H, L):
    """Everything time-major and 2-D (row = t*B + b) to keep stores dense.

    ids_ref : (T*B, 1) int32                time-major token ids
    ew0_ref : (2, V, 4H)                    emb_table @ W_ih(layer0, dir)^T
    wih_ref : (max(L-1,1), 2, 2H, 4H)       W_ih^T for layers >= 1
    whh_ref : (L, 2, H, 4H)                 W_hh^T
    bias_ref: (L*2, 4H)                     b_ih + b_hh, row = 2*layer + dir
    out_ref : (T*B, 2H)                     last-layer outputs
    hn_ref  : (L*2*B, H), cn_ref: same      final hidden / cell states
    hid_sc  : VMEM (T*B, 2H)                inter-layer activations
    """
    TB = T * B
    V = ew0_ref.shape[1]

    ids = ids_ref[...]                                           # (TB, 1)
    onehot = (lax.broadcasted_iota(jnp.int32, (TB, V), 1) == ids
              ).astype(jnp.float32)                              # (TB, V)

    def cell(gates, c_prev):
        # Whole-vreg transcendentals (EUP), then static lane slices.
        sig = jax.nn.sigmoid(gates)
        th = jnp.tanh(gates)
        i_g = sig[:, 0 * H:1 * H]
        f_g = sig[:, 1 * H:2 * H]
        g_g = th[:, 2 * H:3 * H]
        o_g = sig[:, 3 * H:4 * H]
        c_new = f_g * c_prev + i_g * g_g
        h_new = o_g * jnp.tanh(c_new)
        return h_new, c_new

    # -- layer 0 input projection: embedding folded into W_ih (one big matmul)
    gxf = jnp.dot(onehot, ew0_ref[0],
                  preferred_element_type=jnp.float32) + bias_ref[0:1, :]
    gxb = jnp.dot(onehot, ew0_ref[1],
                  preferred_element_type=jnp.float32) + bias_ref[1:2, :]

    for l in range(L):                       # static (trace-time) layer loop
        dst_ref = out_ref if l == L - 1 else hid_sc
        whh_f = whh_ref[l, 0]                # (H, 4H), loaded once per layer
        whh_b = whh_ref[l, 1]

        h_f = jnp.zeros((B, H), jnp.float32)
        c_f = jnp.zeros((B, H), jnp.float32)
        h_b = jnp.zeros((B, H), jnp.float32)
        c_b = jnp.zeros((B, H), jnp.float32)

        for s in range(T):                   # static unrolled time loop
            tf, tb = s, T - 1 - s            # fwd / bwd timestep
            g_f = gxf[tf * B:(tf + 1) * B, :] + jnp.dot(
                h_f, whh_f, preferred_element_type=jnp.float32)
            g_b = gxb[tb * B:(tb + 1) * B, :] + jnp.dot(
                h_b, whh_b, preferred_element_type=jnp.float32)
            h_f, c_f = cell(g_f, c_f)
            h_b, c_b = cell(g_b, c_b)
            # forward hidden -> lanes [0:H] of row-block tf,
            # backward hidden -> lanes [H:2H] of row-block tb (VMEM stores).
            dst_ref[tf * B:(tf + 1) * B, 0:H] = h_f
            dst_ref[tb * B:(tb + 1) * B, H:2 * H] = h_b

        base = 2 * l * B                     # PyTorch (h_n, c_n) ordering
        hn_ref[base:base + B, :] = h_f
        cn_ref[base:base + B, :] = c_f
        hn_ref[base + B:base + 2 * B, :] = h_b
        cn_ref[base + B:base + 2 * B, :] = c_b

        if l + 1 < L:
            # Hoisted input projection for the next layer: one (TB,2H)x(2H,4H)
            # matmul per direction on the full sequence.
            hid = dst_ref[...]                               # (TB, 2H)
            r = 2 * (l + 1)
            gxf = jnp.dot(hid, wih_ref[l, 0],
                          preferred_element_type=jnp.float32) + bias_ref[r:r + 1, :]
            gxb = jnp.dot(hid, wih_ref[l, 1],
                          preferred_element_type=jnp.float32) + bias_ref[r + 1:r + 2, :]


# ------------------------------- parameters ----------------------------------
def make_params(key):
    keys = jax.random.split(key, 1 + 4 * LAYERS * NUM_DIRECTIONS)
    # Embedding ~ N(0,1), padding row zeroed (padding_idx=PAD)
    emb = jax.random.normal(keys[0], (VOCAB, WORD_VEC_SIZE), jnp.float32)
    emb = emb.at[PAD].set(0.0)

    stdv = 1.0 / math.sqrt(HIDDEN)
    lstm = {}
    k = 1
    for layer in range(LAYERS):
        in_size = WORD_VEC_SIZE if layer == 0 else HIDDEN * NUM_DIRECTIONS
        for d in range(NUM_DIRECTIONS):
            w_ih = jax.random.uniform(keys[k], (4 * HIDDEN, in_size),
                                      jnp.float32, -stdv, stdv); k += 1
            w_hh = jax.random.uniform(keys[k], (4 * HIDDEN, HIDDEN),
                                      jnp.float32, -stdv, stdv); k += 1
            b_ih = jax.random.uniform(keys[k], (4 * HIDDEN,),
                                      jnp.float32, -stdv, stdv); k += 1
            b_hh = jax.random.uniform(keys[k], (4 * HIDDEN,),
                                      jnp.float32, -stdv, stdv); k += 1
            # pre-transposed for x @ W.T style matmuls; biases combined
            lstm[(layer, d)] = (w_ih.T, w_hh.T, (b_ih + b_hh).reshape(1, -1))
    return {"embedding": emb, "lstm": lstm}


# ------------------------------ encoder forward -------------------------------
def encoder_forward(params, input_ids):
    """input_ids: (batch, seq_len) int32 ->  ((h_n, c_n), outputs)."""
    B, T = input_ids.shape
    H, L, ND = HIDDEN, LAYERS, NUM_DIRECTIONS
    table = params["embedding"]
    V = table.shape[0]

    # --- tiny one-time host-side parameter packing ---------------------------
    # Fold the embedding into layer-0's input projection: (V, 4H) per direction.
    ew0 = jnp.stack([table @ params["lstm"][(0, d)][0] for d in range(ND)])
    if L > 1:
        wih = jnp.stack([jnp.stack([params["lstm"][(l, d)][0]
                                    for d in range(ND)])
                         for l in range(1, L)])              # (L-1, ND, 2H, 4H)
    else:
        wih = jnp.zeros((1, ND, ND * H, 4 * H), jnp.float32)  # dummy, unused
    whh = jnp.stack([jnp.stack([params["lstm"][(l, d)][1] for d in range(ND)])
                     for l in range(L)])                     # (L, ND, H, 4H)
    bias = jnp.concatenate([params["lstm"][(l, d)][2]
                            for l in range(L) for d in range(ND)], axis=0)

    # time-major token ids, row = t*B + b  (only 16 int32s; negligible)
    ids_tm = jnp.transpose(input_ids).reshape(T * B, 1).astype(jnp.int32)

    kernel = functools.partial(_encoder_kernel, T=T, B=B, H=H, L=L)
    out2d, hn2d, cn2d = pl.pallas_call(
        kernel,
        out_shape=(jax.ShapeDtypeStruct((T * B, ND * H), jnp.float32),
                   jax.ShapeDtypeStruct((L * ND * B, H), jnp.float32),
                   jax.ShapeDtypeStruct((L * ND * B, H), jnp.float32)),
        in_specs=[pl.BlockSpec(ids_tm.shape, lambda: (0, 0)),
                  pl.BlockSpec(ew0.shape, lambda: (0, 0, 0)),
                  pl.BlockSpec(wih.shape, lambda: (0, 0, 0, 0)),
                  pl.BlockSpec(whh.shape, lambda: (0, 0, 0, 0)),
                  pl.BlockSpec(bias.shape, lambda: (0, 0))],
        out_specs=(pl.BlockSpec((T * B, ND * H), lambda: (0, 0)),
                   pl.BlockSpec((L * ND * B, H), lambda: (0, 0)),
                   pl.BlockSpec((L * ND * B, H), lambda: (0, 0))),
        scratch_shapes=[pltpu.VMEM((T * B, ND * H), jnp.float32)],
    )(ids_tm, ew0, wih, whh, bias)

    outputs = out2d.reshape(T, B, ND * H)       # time-major, like nn.LSTM
    h_n = hn2d.reshape(L * ND, B, H)            # PyTorch (layer, dir) ordering
    c_n = cn2d.reshape(L * ND, B, H)
    return (h_n, c_n), outputs


# ------------------------- pure-JAX reference (check) -------------------------
def _ref_lstm_layer(x_seq, wih_t, whh_t, bias):
    T, B, _ = x_seq.shape
    H = whh_t.shape[0]

    def step(carry, x):
        h, c = carry
        gates = x @ wih_t + h @ whh_t + bias
        i = jax.nn.sigmoid(gates[:, 0 * H:1 * H])
        f = jax.nn.sigmoid(gates[:, 1 * H:2 * H])
        g = jnp.tanh(gates[:, 2 * H:3 * H])
        o = jax.nn.sigmoid(gates[:, 3 * H:4 * H])
        c = f * c + i * g
        h = o * jnp.tanh(c)
        return (h, c), h

    init = (jnp.zeros((B, H), jnp.float32), jnp.zeros((B, H), jnp.float32))
    (h_T, c_T), out = lax.scan(step, init, x_seq)
    return out, h_T, c_T


def encoder_forward_ref(params, input_ids):
    B, T = input_ids.shape
    emb = jnp.take(params["embedding"], input_ids, axis=0)      # (B, T, D)
    layer_in = emb.transpose(1, 0, 2)
    h_list, c_list = [], []
    for layer in range(LAYERS):
        dir_outs = []
        for d in range(NUM_DIRECTIONS):
            wih_t, whh_t, bias = params["lstm"][(layer, d)]
            x = layer_in if d == 0 else layer_in[::-1]
            out, h_T, c_T = _ref_lstm_layer(x, wih_t, whh_t, bias)
            if d == 1:
                out = out[::-1]
            dir_outs.append(out)
            h_list.append(h_T)
            c_list.append(c_T)
        layer_in = jnp.concatenate(dir_outs, axis=-1)
    return (jnp.stack(h_list, 0), jnp.stack(c_list, 0)), layer_in


# ----------------------------------- main -------------------------------------
if __name__ == "__main__":
    key = jax.random.PRNGKey(0)
    pkey, ikey = jax.random.split(key)
    params = make_params(pkey)

    # (batch, seq_len) token ids, with a couple of PAD tokens.
    input_ids = jax.random.randint(ikey, (BATCH, SEQ), 0, VOCAB, jnp.int32)
    input_ids = input_ids.at[0, -1].set(PAD).at[1, -2:].set(PAD)

    (h_n, c_n), outputs = encoder_forward(params, input_ids)
    jax.block_until_ready((h_n, c_n, outputs))

    assert h_n.shape == (LAYERS * NUM_DIRECTIONS, BATCH, HIDDEN)
    assert c_n.shape == (LAYERS * NUM_DIRECTIONS, BATCH, HIDDEN)
    assert outputs.shape == (SEQ, BATCH, HIDDEN * NUM_DIRECTIONS)

    (h_r, c_r), out_r = encoder_forward_ref(params, input_ids)
    np.testing.assert_allclose(np.asarray(outputs), np.asarray(out_r),
                               rtol=5e-3, atol=5e-3)
    np.testing.assert_allclose(np.asarray(h_n), np.asarray(h_r),
                               rtol=5e-3, atol=5e-3)
    np.testing.assert_allclose(np.asarray(c_n), np.asarray(c_r),
                               rtol=5e-3, atol=5e-3)

    print("KERNEL_OK")
</pallas_src>

<mosaic_0001>
module attributes {stable_mosaic.version = 11 : i64} {
  func.func @_encoder_kernel(%arg0: memref<16x1xi32, #tpu.memory_space<vmem>>, %arg1: memref<2x20x128xf32, #tpu.memory_space<vmem>>, %arg2: memref<1x2x64x128xf32, #tpu.memory_space<vmem>>, %arg3: memref<2x2x32x128xf32, #tpu.memory_space<vmem>>, %arg4: memref<4x128xf32, #tpu.memory_space<vmem>>, %arg5: memref<16x64xf32, #tpu.memory_space<vmem>>, %arg6: memref<8x32xf32, #tpu.memory_space<vmem>>, %arg7: memref<8x32xf32, #tpu.memory_space<vmem>>, %arg8: memref<16x64xf32, #tpu.memory_space<vmem>>) attributes {dimension_semantics = [], scalar_prefetch = 0 : i64, scratch_operands = 1 : i64, tpu.core_type = #tpu.core_type<tc>} {
    %c0 = arith.constant 0 : index
    %c0_0 = arith.constant 0 : index
    %0 = vector.load %arg0[%c0, %c0_0] : memref<16x1xi32, #tpu.memory_space<vmem>>, vector<16x1xi32>
    %1 = tpu.iota {dimensions = array<i32: 1>} : vector<16x20xi32>
    %2 = vector.broadcast %0 : vector<16x1xi32> to vector<16x20xi32>
    %3 = arith.cmpi eq, %1, %2 : vector<16x20xi32>
    %4 = arith.extui %3 : vector<16x20xi1> to vector<16x20xi32>
    %5 = arith.sitofp %4 : vector<16x20xi32> to vector<16x20xf32>
    %c0_1 = arith.constant 0 : index
    %c0_2 = arith.constant 0 : index
    %c0_3 = arith.constant 0 : index
    %6 = vector.load %arg1[%c0_1, %c0_2, %c0_3] : memref<2x20x128xf32, #tpu.memory_space<vmem>>, vector<1x20x128xf32>
    %7 = vector.shape_cast %6 : vector<1x20x128xf32> to vector<20x128xf32>
    %cst = arith.constant dense<0.000000e+00> : vector<16x128xf32>
    %8 = tpu.matmul %5, %7, %cst {dimension_numbers = #tpu.dot_dimension_numbers<[1], [0], [0], [1], [0, 0, 1, 1], [], []>} : vector<16x20xf32>, vector<20x128xf32>, vector<16x128xf32> -> vector<16x128xf32>
    %c0_4 = arith.constant 0 : index
    %c0_5 = arith.constant 0 : index
    %9 = vector.load %arg4[%c0_4, %c0_5] : memref<4x128xf32, #tpu.memory_space<vmem>>, vector<1x128xf32>
    %10 = vector.broadcast %9 : vector<1x128xf32> to vector<16x128xf32>
    %11 = arith.addf %8, %10 : vector<16x128xf32>
    %c1 = arith.constant 1 : index
    %c0_6 = arith.constant 0 : index
    %c0_7 = arith.constant 0 : index
    %12 = vector.load %arg1[%c1, %c0_6, %c0_7] : memref<2x20x128xf32, #tpu.memory_space<vmem>>, vector<1x20x128xf32>
    %13 = vector.shape_cast %12 : vector<1x20x128xf32> to vector<20x128xf32>
    %cst_8 = arith.constant dense<0.000000e+00> : vector<16x128xf32>
    %14 = tpu.matmul %5, %13, %cst_8 {dimension_numbers = #tpu.dot_dimension_numbers<[1], [0], [0], [1], [0, 0, 1, 1], [], []>} : vector<16x20xf32>, vector<20x128xf32>, vector<16x128xf32> -> vector<16x128xf32>
    %c1_9 = arith.constant 1 : index
    %c0_10 = arith.constant 0 : index
    %15 = vector.load %arg4[%c1_9, %c0_10] : memref<4x128xf32, #tpu.memory_space<vmem>>, vector<1x128xf32>
    %16 = vector.broadcast %15 : vector<1x128xf32> to vector<16x128xf32>
    %17 = arith.addf %14, %16 : vector<16x128xf32>
    %c0_11 = arith.constant 0 : index
    %c0_12 = arith.constant 0 : index
    %c0_13 = arith.constant 0 : index
    %c0_14 = arith.constant 0 : index
    %18 = vector.load %arg3[%c0_11, %c0_12, %c0_13, %c0_14] : memref<2x2x32x128xf32, #tpu.memory_space<vmem>>, vector<1x1x32x128xf32>
    %19 = vector.shape_cast %18 : vector<1x1x32x128xf32> to vector<32x128xf32>
    %c0_15 = arith.constant 0 : index
    %c1_16 = arith.constant 1 : index
    %c0_17 = arith.constant 0 : index
    %c0_18 = arith.constant 0 : index
    %20 = vector.load %arg3[%c0_15, %c1_16, %c0_17, %c0_18] : memref<2x2x32x128xf32, #tpu.memory_space<vmem>>, vector<1x1x32x128xf32>
    %21 = vector.shape_cast %20 : vector<1x1x32x128xf32> to vector<32x128xf32>
    %cst_19 = arith.constant 0.000000e+00 : f32
    %22 = vector.broadcast %cst_19 : f32 to vector<2x32xf32>
    %cst_20 = arith.constant 0.000000e+00 : f32
    %23 = vector.broadcast %cst_20 : f32 to vector<2x32xf32>
    %cst_21 = arith.constant 0.000000e+00 : f32
    %24 = vector.broadcast %cst_21 : f32 to vector<2x32xf32>
    %cst_22 = arith.constant 0.000000e+00 : f32
    %25 = vector.broadcast %cst_22 : f32 to vector<2x32xf32>
    %26 = vector.extract_strided_slice %11 {offsets = [0, 0], sizes = [2, 128], strides = [1, 1]} : vector<16x128xf32> to vector<2x128xf32>
    %cst_23 = arith.constant dense<0.000000e+00> : vector<2x128xf32>
    %27 = tpu.matmul %22, %19, %cst_23 {dimension_numbers = #tpu.dot_dimension_numbers<[1], [0], [0], [1], [0, 0, 1, 1], [], []>} : vector<2x32xf32>, vector<32x128xf32>, vector<2x128xf32> -> vector<2x128xf32>
    %28 = arith.addf %26, %27 : vector<2x128xf32>
    %29 = vector.extract_strided_slice %17 {offsets = [14, 0], sizes = [2, 128], strides = [1, 1]} : vector<16x128xf32> to vector<2x128xf32>
    %cst_24 = arith.constant dense<0.000000e+00> : vector<2x128xf32>
    %30 = tpu.matmul %24, %21, %cst_24 {dimension_numbers = #tpu.dot_dimension_numbers<[1], [0], [0], [1], [0, 0, 1, 1], [], []>} : vector<2x32xf32>, vector<32x128xf32>, vector<2x128xf32> -> vector<2x128xf32>
    %31 = arith.addf %29, %30 : vector<2x128xf32>
    %32 = arith.negf %28 : vector<2x128xf32>
    %33 = math.exp %32 : vector<2x128xf32>
    %cst_25 = arith.constant 1.000000e+00 : f32
    %34 = vector.broadcast %cst_25 : f32 to vector<2x128xf32>
    %35 = arith.addf %34, %33 : vector<2x128xf32>
    %36 = arith.divf %34, %35 : vector<2x128xf32>
    %37 = math.tanh %28 : vector<2x128xf32>
    %38 = vector.extract_strided_slice %36 {offsets = [0, 0], sizes = [2, 32], strides = [1, 1]} : vector<2x128xf32> to vector<2x32xf32>
    %39 = vector.extract_strided_slice %36 {offsets = [0, 32], sizes = [2, 32], strides = [1, 1]} : vector<2x128xf32> to vector<2x32xf32>
    %40 = vector.extract_strided_slice %37 {offsets = [0, 64], sizes = [2, 32], strides = [1, 1]} : vector<2x128xf32> to vector<2x32xf32>
    %41 = vector.extract_strided_slice %36 {offsets = [0, 96], sizes = [2, 32], strides = [1, 1]} : vector<2x128xf32> to vector<2x32xf32>
    %42 = arith.mulf %39, %23 : vector<2x32xf32>
    %43 = arith.mulf %38, %40 : vector<2x32xf32>
    %44 = arith.addf %42, %43 : vector<2x32xf32>
    %45 = math.tanh %44 : vector<2x32xf32>
    %46 = arith.mulf %41, %45 : vector<2x32xf32>
    %47 = arith.negf %31 : vector<2x128xf32>
    %48 = math.exp %47 : vector<2x128xf32>
    %cst_26 = arith.constant 1.000000e+00 : f32
    %49 = vector.broadcast %cst_26 : f32 to vector<2x128xf32>
    %50 = arith.addf %49, %48 : vector<2x128xf32>
    %51 = arith.divf %49, %50 : vector<2x128xf32>
    %52 = math.tanh %31 : vector<2x128xf32>
    %53 = vector.extract_strided_slice %51 {offsets = [0, 0], sizes = [2, 32], strides = [1, 1]} : vector<2x128xf32> to vector<2x32xf32>
    %54 = vector.extract_strided_slice %51 {offsets = [0, 32], sizes = [2, 32], strides = [1, 1]} : vector<2x128xf32> to vector<2x32xf32>
    %55 = vector.extract_strided_slice %52 {offsets = [0, 64], sizes = [2, 32], strides = [1, 1]} : vector<2x128xf32> to vector<2x32xf32>
    %56 = vector.extract_strided_slice %51 {offsets = [0, 96], sizes = [2, 32], strides = [1, 1]} : vector<2x128xf32> to vector<2x32xf32>
    %57 = arith.mulf %54, %25 : vector<2x32xf32>
    %58 = arith.mulf %53, %55 : vector<2x32xf32>
    %59 = arith.addf %57, %58 : vector<2x32xf32>
    %60 = math.tanh %59 : vector<2x32xf32>
    %61 = arith.mulf %56, %60 : vector<2x32xf32>
    %c0_27 = arith.constant 0 : index
    %c0_28 = arith.constant 0 : index
    %62 = vector.load %arg8[%c0_27, %c0_28] : memref<16x64xf32, #tpu.memory_space<vmem>>, vector<2x32xf32>
    tpu.vector_store %arg8[%c0_27, %c0_28], %46 {strides = array<i32>} : memref<16x64xf32, #tpu.memory_space<vmem>>, vector<2x32xf32>,
    %c14 = arith.constant 14 : index
    %c32 = arith.constant 32 : index
    %63 = vector.load %arg8[%c14, %c32] : memref<16x64xf32, #tpu.memory_space<vmem>>, vector<2x32xf32>
    tpu.vector_store %arg8[%c14, %c32], %61 {strides = array<i32>} : memref<16x64xf32, #tpu.memory_space<vmem>>, vector<2x32xf32>,
    %64 = vector.extract_strided_slice %11 {offsets = [2, 0], sizes = [2, 128], strides = [1, 1]} : vector<16x128xf32> to vector<2x128xf32>
    %cst_29 = arith.constant dense<0.000000e+00> : vector<2x128xf32>
    %65 = tpu.matmul %46, %19, %cst_29 {dimension_numbers = #tpu.dot_dimension_numbers<[1], [0], [0], [1], [0, 0, 1, 1], [], []>} : vector<2x32xf32>, vector<32x128xf32>, vector<2x128xf32> -> vector<2x128xf32>
    %66 = arith.addf %64, %65 : vector<2x128xf32>
    %67 = vector.extract_strided_slice %17 {offsets = [12, 0], sizes = [2, 128], strides = [1, 1]} : vector<16x128xf32> to vector<2x128xf32>
    %cst_30 = arith.constant dense<0.000000e+00> : vector<2x128xf32>
    %68 = tpu.matmul %61, %21, %cst_30 {dimension_numbers = #tpu.dot_dimension_numbers<[1], [0], [0], [1], [0, 0, 1, 1], [], []>} : vector<2x32xf32>, vector<32x128xf32>, vector<2x128xf32> -> vector<2x128xf32>
    %69 = arith.addf %67, %68 : vector<2x128xf32>
    %70 = arith.negf %66 : vector<2x128xf32>
    %71 = math.exp %70 : vector<2x128xf32>
    %cst_31 = arith.constant 1.000000e+00 : f32
    %72 = vector.broadcast %cst_31 : f32 to vector<2x128xf32>
    %73 = arith.addf %72, %71 : vector<2x128xf32>
    %74 = arith.divf %72, %73 : vector<2x128xf32>
    %75 = math.tanh %66 : vector<2x128xf32>
    %76 = vector.extract_strided_slice %74 {offsets = [0, 0], sizes = [2, 32], strides = [1, 1]} : vector<2x128xf32> to vector<2x32xf32>
    %77 = vector.extract_strided_slice %74 {offsets = [0, 32], sizes = [2, 32], strides = [1, 1]} : vector<2x128xf32> to vector<2x32xf32>
    %78 = vector.extract_strided_slice %75 {offsets = [0, 64], sizes = [2, 32], strides = [1, 1]} : vector<2x128xf32> to vector<2x32xf32>
    %79 = vector.extract_strided_slice %74 {offsets = [0, 96], sizes = [2, 32], strides = [1, 1]} : vector<2x128xf32> to vector<2x32xf32>
    %80 = arith.mulf %77, %44 : vector<2x32xf32>
    %81 = arith.mulf %76, %78 : vector<2x32xf32>
    %82 = arith.addf %80, %81 : vector<2x32xf32>
    %83 = math.tanh %82 : vector<2x32xf32>
    %84 = arith.mulf %79, %83 : vector<2x32xf32>
    %85 = arith.negf %69 : vector<2x128xf32>
    %86 = math.exp %85 : vector<2x128xf32>
    %cst_32 = arith.constant 1.000000e+00 : f32
    %87 = vector.broadcast %cst_32 : f32 to vector<2x128xf32>
    %88 = arith.addf %87, %86 : vector<2x128xf32>
    %89 = arith.divf %87, %88 : vector<2x128xf32>
    %90 = math.tanh %69 : vector<2x128xf32>
    %91 = vector.extract_strided_slice %89 {offsets = [0, 0], sizes = [2, 32], strides = [1, 1]} : vector<2x128xf32> to vector<2x32xf32>
    %92 = vector.extract_strided_slice %89 {offsets = [0, 32], sizes = [2, 32], strides = [1, 1]} : vector<2x128xf32> to vector<2x32xf32>
    %93 = vector.extract_strided_slice %90 {offsets = [0, 64], sizes = [2, 32], strides = [1, 1]} : vector<2x128xf32> to vector<2x32xf32>
    %94 = vector.extract_strided_slice %89 {offsets = [0, 96], sizes = [2, 32], strides = [1, 1]} : vector<2x128xf32> to vector<2x32xf32>
    %95 = arith.mulf %92, %59 : vector<2x32xf32>
    %96 = arith.mulf %91, %93 : vector<2x32xf32>
    %97 = arith.addf %95, %96 : vector<2x32xf32>
    %98 = math.tanh %97 : vector<2x32xf32>
    %99 = arith.mulf %94, %98 : vector<2x32xf32>
    %c2 = arith.constant 2 : index
    %c0_33 = arith.constant 0 : index
    %100 = vector.load %arg8[%c2, %c0_33] : memref<16x64xf32, #tpu.memory_space<vmem>>, vector<2x32xf32>
    tpu.vector_store %arg8[%c2, %c0_33], %84 {strides = array<i32>} : memref<16x64xf32, #tpu.memory_space<vmem>>, vector<2x32xf32>,
    %c12 = arith.constant 12 : index
    %c32_34 = arith.constant 32 : index
    %101 = vector.load %arg8[%c12, %c32_34] : memref<16x64xf32, #tpu.memory_space<vmem>>, vector<2x32xf32>
    tpu.vector_store %arg8[%c12, %c32_34], %99 {strides = array<i32>} : memref<16x64xf32, #tpu.memory_space<vmem>>, vector<2x32xf32>,
    %102 = vector.extract_strided_slice %11 {offsets = [4, 0], sizes = [2, 128], strides = [1, 1]} : vector<16x128xf32> to vector<2x128xf32>
    %cst_35 = arith.constant dense<0.000000e+00> : vector<2x128xf32>
    %103 = tpu.matmul %84, %19, %cst_35 {dimension_numbers = #tpu.dot_dimension_numbers<[1], [0], [0], [1], [0, 0, 1, 1], [], []>} : vector<2x32xf32>, vector<32x128xf32>, vector<2x128xf32> -> vector<2x128xf32>
    %104 = arith.addf %102, %103 : vector<2x128xf32>
    %105 = vector.extract_strided_slice %17 {offsets = [10, 0], sizes = [2, 128], strides = [1, 1]} : vector<16x128xf32> to vector<2x128xf32>
    %cst_36 = arith.constant dense<0.000000e+00> : vector<2x128xf32>
    %106 = tpu.matmul %99, %21, %cst_36 {dimension_numbers = #tpu.dot_dimension_numbers<[1], [0], [0], [1], [0, 0, 1, 1], [], []>} : vector<2x32xf32>, vector<32x128xf32>, vector<2x128xf32> -> vector<2x128xf32>
    %107 = arith.addf %105, %106 : vector<2x128xf32>
    %108 = arith.negf %104 : vector<2x128xf32>
    %109 = math.exp %108 : vector<2x128xf32>
    %cst_37 = arith.constant 1.000000e+00 : f32
    %110 = vector.broadcast %cst_37 : f32 to vector<2x128xf32>
    %111 = arith.addf %110, %109 : vector<2x128xf32>
    %112 = arith.divf %110, %111 : vector<2x128xf32>
    %113 = math.tanh %104 : vector<2x128xf32>
    %114 = vector.extract_strided_slice %112 {offsets = [0, 0], sizes = [2, 32], strides = [1, 1]} : vector<2x128xf32> to vector<2x32xf32>
    %115 = vector.extract_strided_slice %112 {offsets = [0, 32], sizes = [2, 32], strides = [1, 1]} : vector<2x128xf32> to vector<2x32xf32>
    %116 = vector.extract_strided_slice %113 {offsets = [0, 64], sizes = [2, 32], strides = [1, 1]} : vector<2x128xf32> to vector<2x32xf32>
    %117 = vector.extract_strided_slice %112 {offsets = [0, 96], sizes = [2, 32], strides = [1, 1]} : vector<2x128xf32> to vector<2x32xf32>
    %118 = arith.mulf %115, %82 : vector<2x32xf32>
    %119 = arith.mulf %114, %116 : vector<2x32xf32>
    %120 = arith.addf %118, %119 : vector<2x32xf32>
    %121 = math.tanh %120 : vector<2x32xf32>
    %122 = arith.mulf %117, %121 : vector<2x32xf32>
    %123 = arith.negf %107 : vector<2x128xf32>
    %124 = math.exp %123 : vector<2x128xf32>
    %cst_38 = arith.constant 1.000000e+00 : f32
    %125 = vector.broadcast %cst_38 : f32 to vector<2x128xf32>
    %126 = arith.addf %125, %124 : vector<2x128xf32>
    %127 = arith.divf %125, %126 : vector<2x128xf32>
    %128 = math.tanh %107 : vector<2x128xf32>
    %129 = vector.extract_strided_slice %127 {offsets = [0, 0], sizes = [2, 32], strides = [1, 1]} : vector<2x128xf32> to vector<2x32xf32>
    %130 = vector.extract_strided_slice %127 {offsets = [0, 32], sizes = [2, 32], strides = [1, 1]} : vector<2x128xf32> to vector<2x32xf32>
    %131 = vector.extract_strided_slice %128 {offsets = [0, 64], sizes = [2, 32], strides = [1, 1]} : vector<2x128xf32> to vector<2x32xf32>
    %132 = vector.extract_strided_slice %127 {offsets = [0, 96], sizes = [2, 32], strides = [1, 1]} : vector<2x128xf32> to vector<2x32xf32>
    %133 = arith.mulf %130, %97 : vector<2x32xf32>
    %134 = arith.mulf %129, %131 : vector<2x32xf32>
    %135 = arith.addf %133, %134 : vector<2x32xf32>
    %136 = math.tanh %135 : vector<2x32xf32>
    %137 = arith.mulf %132, %136 : vector<2x32xf32>
    %c4 = arith.constant 4 : index
    %c0_39 = arith.constant 0 : index
    %138 = vector.load %arg8[%c4, %c0_39] : memref<16x64xf32, #tpu.memory_space<vmem>>, vector<2x32xf32>
    tpu.vector_store %arg8[%c4, %c0_39], %122 {strides = array<i32>} : memref<16x64xf32, #tpu.memory_space<vmem>>, vector<2x32xf32>,
    %c10 = arith.constant 10 : index
    %c32_40 = arith.constant 32 : index
    %139 = vector.load %arg8[%c10, %c32_40] : memref<16x64xf32, #tpu.memory_space<vmem>>, vector<2x32xf32>
    tpu.vector_store %arg8[%c10, %c32_40], %137 {strides = array<i32>} : memref<16x64xf32, #tpu.memory_space<vmem>>, vector<2x32xf32>,
    %140 = vector.extract_strided_slice %11 {offsets = [6, 0], sizes = [2, 128], strides = [1, 1]} : vector<16x128xf32> to vector<2x128xf32>
    %cst_41 = arith.constant dense<0.000000e+00> : vector<2x128xf32>
    %141 = tpu.matmul %122, %19, %cst_41 {dimension_numbers = #tpu.dot_dimension_numbers<[1], [0], [0], [1], [0, 0, 1, 1], [], []>} : vector<2x32xf32>, vector<32x128xf32>, vector<2x128xf32> -> vector<2x128xf32>
    %142 = arith.addf %140, %141 : vector<2x128xf32>
    %143 = vector.extract_strided_slice %17 {offsets = [8, 0], sizes = [2, 128], strides = [1, 1]} : vector<16x128xf32> to vector<2x128xf32>
    %cst_42 = arith.constant dense<0.000000e+00> : vector<2x128xf32>
    %144 = tpu.matmul %137, %21, %cst_42 {dimension_numbers = #tpu.dot_dimension_numbers<[1], [0], [0], [1], [0, 0, 1, 1], [], []>} : vector<2x32xf32>, vector<32x128xf32>, vector<2x128xf32> -> vector<2x128xf32>
    %145 = arith.addf %143, %144 : vector<2x128xf32>
    %146 = arith.negf %142 : vector<2x128xf32>
    %147 = math.exp %146 : vector<2x128xf32>
    %cst_43 = arith.constant 1.000000e+00 : f32
    %148 = vector.broadcast %cst_43 : f32 to vector<2x128xf32>
    %149 = arith.addf %148, %147 : vector<2x128xf32>
    %150 = arith.divf %148, %149 : vector<2x128xf32>
    %151 = math.tanh %142 : vector<2x128xf32>
    %152 = vector.extract_strided_slice %150 {offsets = [0, 0], sizes = [2, 32], strides = [1, 1]} : vector<2x128xf32> to vector<2x32xf32>
    %153 = vector.extract_strided_slice %150 {offsets = [0, 32], sizes = [2, 32], strides = [1, 1]} : vector<2x128xf32> to vector<2x32xf32>
    %154 = vector.extract_strided_slice %151 {offsets = [0, 64], sizes = [2, 32], strides = [1, 1]} : vector<2x128xf32> to vector<2x32xf32>
    %155 = vector.extract_strided_slice %150 {offsets = [0, 96], sizes = [2, 32], strides = [1, 1]} : vector<2x128xf32> to vector<2x32xf32>
    %156 = arith.mulf %153, %120 : vector<2x32xf32>
    %157 = arith.mulf %152, %154 : vector<2x32xf32>
    %158 = arith.addf %156, %157 : vector<2x32xf32>
    %159 = math.tanh %158 : vector<2x32xf32>
    %160 = arith.mulf %155, %159 : vector<2x32xf32>
    %161 = arith.negf %145 : vector<2x128xf32>
    %162 = math.exp %161 : vector<2x128xf32>
    %cst_44 = arith.constant 1.000000e+00 : f32
    %163 = vector.broadcast %cst_44 : f32 to vector<2x128xf32>
    %164 = arith.addf %163, %162 : vector<2x128xf32>
    %165 = arith.divf %163, %164 : vector<2x128xf32>
    %166 = math.tanh %145 : vector<2x128xf32>
    %167 = vector.extract_strided_slice %165 {offsets = [0, 0], sizes = [2, 32], strides = [1, 1]} : vector<2x128xf32> to vector<2x32xf32>
    %168 = vector.extract_strided_slice %165 {offsets = [0, 32], sizes = [2, 32], strides = [1, 1]} : vector<2x128xf32> to vector<2x32xf32>
    %169 = vector.extract_strided_slice %166 {offsets = [0, 64], sizes = [2, 32], strides = [1, 1]} : vector<2x128xf32> to vector<2x32xf32>
    %170 = vector.extract_strided_slice %165 {offsets = [0, 96], sizes = [2, 32], strides = [1, 1]} : vector<2x128xf32> to vector<2x32xf32>
    %171 = arith.mulf %168, %135 : vector<2x32xf32>
    %172 = arith.mulf %167, %169 : vector<2x32xf32>
    %173 = arith.addf %171, %172 : vector<2x32xf32>
    %174 = math.tanh %173 : vector<2x32xf32>
    %175 = arith.mulf %170, %174 : vector<2x32xf32>
    %c6 = arith.constant 6 : index
    %c0_45 = arith.constant 0 : index
    %176 = vector.load %arg8[%c6, %c0_45] : memref<16x64xf32, #tpu.memory_space<vmem>>, vector<2x32xf32>
    tpu.vector_store %arg8[%c6, %c0_45], %160 {strides = array<i32>} : memref<16x64xf32, #tpu.memory_space<vmem>>, vector<2x32xf32>,
    %c8 = arith.constant 8 : index
    %c32_46 = arith.constant 32 : index
    %177 = vector.load %arg8[%c8, %c32_46] : memref<16x64xf32, #tpu.memory_space<vmem>>, vector<2x32xf32>
    tpu.vector_store %arg8[%c8, %c32_46], %175 {strides = array<i32>} : memref<16x64xf32, #tpu.memory_space<vmem>>, vector<2x32xf32>,
    %178 = vector.extract_strided_slice %11 {offsets = [8, 0], sizes = [2, 128], strides = [1, 1]} : vector<16x128xf32> to vector<2x128xf32>
    %cst_47 = arith.constant dense<0.000000e+00> : vector<2x128xf32>
    %179 = tpu.matmul %160, %19, %cst_47 {dimension_numbers = #tpu.dot_dimension_numbers<[1], [0], [0], [1], [0, 0, 1, 1], [], []>} : vector<2x32xf32>, vector<32x128xf32>, vector<2x128xf32> -> vector<2x128xf32>
    %180 = arith.addf %178, %179 : vector<2x128xf32>
    %181 = vector.extract_strided_slice %17 {offsets = [6, 0], sizes = [2, 128], strides = [1, 1]} : vector<16x128xf32> to vector<2x128xf32>
    %cst_48 = arith.constant dense<0.000000e+00> : vector<2x128xf32>
    %182 = tpu.matmul %175, %21, %cst_48 {dimension_numbers = #tpu.dot_dimension_numbers<[1], [0], [0], [1], [0, 0, 1, 1], [], []>} : vector<2x32xf32>, vector<32x128xf32>, vector<2x128xf32> -> vector<2x128xf32>
    %183 = arith.addf %181, %182 : vector<2x128xf32>
    %184 = arith.negf %180 : vector<2x128xf32>
    %185 = math.exp %184 : vector<2x128xf32>
    %cst_49 = arith.constant 1.000000e+00 : f32
    %186 = vector.broadcast %cst_49 : f32 to vector<2x128xf32>
    %187 = arith.addf %186, %185 : vector<2x128xf32>
    %188 = arith.divf %186, %187 : vector<2x128xf32>
    %189 = math.tanh %180 : vector<2x128xf32>
    %190 = vector.extract_strided_slice %188 {offsets = [0, 0], sizes = [2, 32], strides = [1, 1]} : vector<2x128xf32> to vector<2x32xf32>
    %191 = vector.extract_strided_slice %188 {offsets = [0, 32], sizes = [2, 32], strides = [1, 1]} : vector<2x128xf32> to vector<2x32xf32>
    %192 = vector.extract_strided_slice %189 {offsets = [0, 64], sizes = [2, 32], strides = [1, 1]} : vector<2x128xf32> to vector<2x32xf32>
    %193 = vector.extract_strided_slice %188 {offsets = [0, 96], sizes = [2, 32], strides = [1, 1]} : vector<2x128xf32> to vector<2x32xf32>
    %194 = arith.mulf %191, %158 : vector<2x32xf32>
    %195 = arith.mulf %190, %192 : vector<2x32xf32>
    %196 = arith.addf %194, %195 : vector<2x32xf32>
    %197 = math.tanh %196 : vector<2x32xf32>
    %198 = arith.mulf %193, %197 : vector<2x32xf32>
    %199 = arith.negf %183 : vector<2x128xf32>
    %200 = math.exp %199 : vector<2x128xf32>
    %cst_50 = arith.constant 1.000000e+00 : f32
    %201 = vector.broadcast %cst_50 : f32 to vector<2x128xf32>
    %202 = arith.addf %201, %200 : vector<2x128xf32>
    %203 = arith.divf %201, %202 : vector<2x128xf32>
    %204 = math.tanh %183 : vector<2x128xf32>
    %205 = vector.extract_strided_slice %203 {offsets = [0, 0], sizes = [2, 32], strides = [1, 1]} : vector<2x128xf32> to vector<2x32xf32>
    %206 = vector.extract_strided_slice %203 {offsets = [0, 32], sizes = [2, 32], strides = [1, 1]} : vector<2x128xf32> to vector<2x32xf32>
    %207 = vector.extract_strided_slice %204 {offsets = [0, 64], sizes = [2, 32], strides = [1, 1]} : vector<2x128xf32> to vector<2x32xf32>
    %208 = vector.extract_strided_slice %203 {offsets = [0, 96], sizes = [2, 32], strides = [1, 1]} : vector<2x128xf32> to vector<2x32xf32>
    %209 = arith.mulf %206, %173 : vector<2x32xf32>
    %210 = arith.mulf %205, %207 : vector<2x32xf32>
    %211 = arith.addf %209, %210 : vector<2x32xf32>
    %212 = math.tanh %211 : vector<2x32xf32>
    %213 = arith.mulf %208, %212 : vector<2x32xf32>
    %c8_51 = arith.constant 8 : index
    %c0_52 = arith.constant 0 : index
    %214 = vector.load %arg8[%c8_51, %c0_52] : memref<16x64xf32, #tpu.memory_space<vmem>>, vector<2x32xf32>
    tpu.vector_store %arg8[%c8_51, %c0_52], %198 {strides = array<i32>} : memref<16x64xf32, #tpu.memory_space<vmem>>, vector<2x32xf32>,
    %c6_53 = arith.constant 6 : index
    %c32_54 = arith.constant 32 : index
    %215 = vector.load %arg8[%c6_53, %c32_54] : memref<16x64xf32, #tpu.memory_space<vmem>>, vector<2x32xf32>
    tpu.vector_store %arg8[%c6_53, %c32_54], %213 {strides = array<i32>} : memref<16x64xf32, #tpu.memory_space<vmem>>, vector<2x32xf32>,
    %216 = vector.extract_strided_slice %11 {offsets = [10, 0], sizes = [2, 128], strides = [1, 1]} : vector<16x128xf32> to vector<2x128xf32>
    %cst_55 = arith.constant dense<0.000000e+00> : vector<2x128xf32>
    %217 = tpu.matmul %198, %19, %cst_55 {dimension_numbers = #tpu.dot_dimension_numbers<[1], [0], [0], [1], [0, 0, 1, 1], [], []>} : vector<2x32xf32>, vector<32x128xf32>, vector<2x128xf32> -> vector<2x128xf32>
    %218 = arith.addf %216, %217 : vector<2x128xf32>
    %219 = vector.extract_strided_slice %17 {offsets = [4, 0], sizes = [2, 128], strides = [1, 1]} : vector<16x128xf32> to vector<2x128xf32>
    %cst_56 = arith.constant dense<0.000000e+00> : vector<2x128xf32>
    %220 = tpu.matmul %213, %21, %cst_56 {dimension_numbers = #tpu.dot_dimension_numbers<[1], [0], [0], [1], [0, 0, 1, 1], [], []>} : vector<2x32xf32>, vector<32x128xf32>, vector<2x128xf32> -> vector<2x128xf32>
    %221 = arith.addf %219, %220 : vector<2x128xf32>
    %222 = arith.negf %218 : vector<2x128xf32>
    %223 = math.exp %222 : vector<2x128xf32>
    %cst_57 = arith.constant 1.000000e+00 : f32
    %224 = vector.broadcast %cst_57 : f32 to vector<2x128xf32>
    %225 = arith.addf %224, %223 : vector<2x128xf32>
    %226 = arith.divf %224, %225 : vector<2x128xf32>
    %227 = math.tanh %218 : vector<2x128xf32>
    %228 = vector.extract_strided_slice %226 {offsets = [0, 0], sizes = [2, 32], strides = [1, 1]} : vector<2x128xf32> to vector<2x32xf32>
    %229 = vector.extract_strided_slice %226 {offsets = [0, 32], sizes = [2, 32], strides = [1, 1]} : vector<2x128xf32> to vector<2x32xf32>
    %230 = vector.extract_strided_slice %227 {offsets = [0, 64], sizes = [2, 32], strides = [1, 1]} : vector<2x128xf32> to vector<2x32xf32>
    %231 = vector.extract_strided_slice %226 {offsets = [0, 96], sizes = [2, 32], strides = [1, 1]} : vector<2x128xf32> to vector<2x32xf32>
    %232 = arith.mulf %229, %196 : vector<2x32xf32>
    %233 = arith.mulf %228, %230 : vector<2x32xf32>
    %234 = arith.addf %232, %233 : vector<2x32xf32>
    %235 = math.tanh %234 : vector<2x32xf32>
    %236 = arith.mulf %231, %235 : vector<2x32xf32>
    %237 = arith.negf %221 : vector<2x128xf32>
    %238 = math.exp %237 : vector<2x128xf32>
    %cst_58 = arith.constant 1.000000e+00 : f32
    %239 = vector.broadcast %cst_58 : f32 to vector<2x128xf32>
    %240 = arith.addf %239, %238 : vector<2x128xf32>
    %241 = arith.divf %239, %240 : vector<2x128xf32>
    %242 = math.tanh %221 : vector<2x128xf32>
    %243 = vector.extract_strided_slice %241 {offsets = [0, 0], sizes = [2, 32], strides = [1, 1]} : vector<2x128xf32> to vector<2x32xf32>
    %244 = vector.extract_strided_slice %241 {offsets = [0, 32], sizes = [2, 32], strides = [1, 1]} : vector<2x128xf32> to vector<2x32xf32>
    %245 = vector.extract_strided_slice %242 {offsets = [0, 64], sizes = [2, 32], strides = [1, 1]} : vector<2x128xf32> to vector<2x32xf32>
    %246 = vector.extract_strided_slice %241 {offsets = [0, 96], sizes = [2, 32], strides = [1, 1]} : vector<2x128xf32> to vector<2x32xf32>
    %247 = arith.mulf %244, %211 : vector<2x32xf32>
    %248 = arith.mulf %243, %245 : vector<2x32xf32>
    %249 = arith.addf %247, %248 : vector<2x32xf32>
    %250 = math.tanh %249 : vector<2x32xf32>
    %251 = arith.mulf %246, %250 : vector<2x32xf32>
    %c10_59 = arith.constant 10 : index
    %c0_60 = arith.constant 0 : index
    %252 = vector.load %arg8[%c10_59, %c0_60] : memref<16x64xf32, #tpu.memory_space<vmem>>, vector<2x32xf32>
    tpu.vector_store %arg8[%c10_59, %c0_60], %236 {strides = array<i32>} : memref<16x64xf32, #tpu.memory_space<vmem>>, vector<2x32xf32>,
    %c4_61 = arith.constant 4 : index
    %c32_62 = arith.constant 32 : index
    %253 = vector.load %arg8[%c4_61, %c32_62] : memref<16x64xf32, #tpu.memory_space<vmem>>, vector<2x32xf32>
    tpu.vector_store %arg8[%c4_61, %c32_62], %251 {strides = array<i32>} : memref<16x64xf32, #tpu.memory_space<vmem>>, vector<2x32xf32>,
    %254 = vector.extract_strided_slice %11 {offsets = [12, 0], sizes = [2, 128], strides = [1, 1]} : vector<16x128xf32> to vector<2x128xf32>
    %cst_63 = arith.constant dense<0.000000e+00> : vector<2x128xf32>
    %255 = tpu.matmul %236, %19, %cst_63 {dimension_numbers = #tpu.dot_dimension_numbers<[1], [0], [0], [1], [0, 0, 1, 1], [], []>} : vector<2x32xf32>, vector<32x128xf32>, vector<2x128xf32> -> vector<2x128xf32>
    %256 = arith.addf %254, %255 : vector<2x128xf32>
    %257 = vector.extract_strided_slice %17 {offsets = [2, 0], sizes = [2, 128], strides = [1, 1]} : vector<16x128xf32> to vector<2x128xf32>
    %cst_64 = arith.constant dense<0.000000e+00> : vector<2x128xf32>
    %258 = tpu.matmul %251, %21, %cst_64 {dimension_numbers = #tpu.dot_dimension_numbers<[1], [0], [0], [1], [0, 0, 1, 1], [], []>} : vector<2x32xf32>, vector<32x128xf32>, vector<2x128xf32> -> vector<2x128xf32>
    %259 = arith.addf %257, %258 : vector<2x128xf32>
    %260 = arith.negf %256 : vector<2x128xf32>
    %261 = math.exp %260 : vector<2x128xf32>
    %cst_65 = arith.constant 1.000000e+00 : f32
    %262 = vector.broadcast %cst_65 : f32 to vector<2x128xf32>
    %263 = arith.addf %262, %261 : vector<2x128xf32>
    %264 = arith.divf %262, %263 : vector<2x128xf32>
    %265 = math.tanh %256 : vector<2x128xf32>
    %266 = vector.extract_strided_slice %264 {offsets = [0, 0], sizes = [2, 32], strides = [1, 1]} : vector<2x128xf32> to vector<2x32xf32>
    %267 = vector.extract_strided_slice %264 {offsets = [0, 32], sizes = [2, 32], strides = [1, 1]} : vector<2x128xf32> to vector<2x32xf32>
    %268 = vector.extract_strided_slice %265 {offsets = [0, 64], sizes = [2, 32], strides = [1, 1]} : vector<2x128xf32> to vector<2x32xf32>
    %269 = vector.extract_strided_slice %264 {offsets = [0, 96], sizes = [2, 32], strides = [1, 1]} : vector<2x128xf32> to vector<2x32xf32>
    %270 = arith.mulf %267, %234 : vector<2x32xf32>
    %271 = arith.mulf %266, %268 : vector<2x32xf32>
    %272 = arith.addf %270, %271 : vector<2x32xf32>
    %273 = math.tanh %272 : vector<2x32xf32>
    %274 = arith.mulf %269, %273 : vector<2x32xf32>
    %275 = arith.negf %259 : vector<2x128xf32>
    %276 = math.exp %275 : vector<2x128xf32>
    %cst_66 = arith.constant 1.000000e+00 : f32
    %277 = vector.broadcast %cst_66 : f32 to vector<2x128xf32>
    %278 = arith.addf %277, %276 : vector<2x128xf32>
    %279 = arith.divf %277, %278 : vector<2x128xf32>
    %280 = math.tanh %259 : vector<2x128xf32>
    %281 = vector.extract_strided_slice %279 {offsets = [0, 0], sizes = [2, 32], strides = [1, 1]} : vector<2x128xf32> to vector<2x32xf32>
    %282 = vector.extract_strided_slice %279 {offsets = [0, 32], sizes = [2, 32], strides = [1, 1]} : vector<2x128xf32> to vector<2x32xf32>
    %283 = vector.extract_strided_slice %280 {offsets = [0, 64], sizes = [2, 32], strides = [1, 1]} : vector<2x128xf32> to vector<2x32xf32>
    %284 = vector.extract_strided_slice %279 {offsets = [0, 96], sizes = [2, 32], strides = [1, 1]} : vector<2x128xf32> to vector<2x32xf32>
    %285 = arith.mulf %282, %249 : vector<2x32xf32>
    %286 = arith.mulf %281, %283 : vector<2x32xf32>
    %287 = arith.addf %285, %286 : vector<2x32xf32>
    %288 = math.tanh %287 : vector<2x32xf32>
    %289 = arith.mulf %284, %288 : vector<2x32xf32>
    %c12_67 = arith.constant 12 : index
    %c0_68 = arith.constant 0 : index
    %290 = vector.load %arg8[%c12_67, %c0_68] : memref<16x64xf32, #tpu.memory_space<vmem>>, vector<2x32xf32>
    tpu.vector_store %arg8[%c12_67, %c0_68], %274 {strides = array<i32>} : memref<16x64xf32, #tpu.memory_space<vmem>>, vector<2x32xf32>,
    %c2_69 = arith.constant 2 : index
    %c32_70 = arith.constant 32 : index
    %291 = vector.load %arg8[%c2_69, %c32_70] : memref<16x64xf32, #tpu.memory_space<vmem>>, vector<2x32xf32>
    tpu.vector_store %arg8[%c2_69, %c32_70], %289 {strides = array<i32>} : memref<16x64xf32, #tpu.memory_space<vmem>>, vector<2x32xf32>,
    %292 = vector.extract_strided_slice %11 {offsets = [14, 0], sizes = [2, 128], strides = [1, 1]} : vector<16x128xf32> to vector<2x128xf32>
    %cst_71 = arith.constant dense<0.000000e+00> : vector<2x128xf32>
    %293 = tpu.matmul %274, %19, %cst_71 {dimension_numbers = #tpu.dot_dimension_numbers<[1], [0], [0], [1], [0, 0, 1, 1], [], []>} : vector<2x32xf32>, vector<32x128xf32>, vector<2x128xf32> -> vector<2x128xf32>
    %294 = arith.addf %292, %293 : vector<2x128xf32>
    %295 = vector.extract_strided_slice %17 {offsets = [0, 0], sizes = [2, 128], strides = [1, 1]} : vector<16x128xf32> to vector<2x128xf32>
    %cst_72 = arith.constant dense<0.000000e+00> : vector<2x128xf32>
    %296 = tpu.matmul %289, %21, %cst_72 {dimension_numbers = #tpu.dot_dimension_numbers<[1], [0], [0], [1], [0, 0, 1, 1], [], []>} : vector<2x32xf32>, vector<32x128xf32>, vector<2x128xf32> -> vector<2x128xf32>
    %297 = arith.addf %295, %296 : vector<2x128xf32>
    %298 = arith.negf %294 : vector<2x128xf32>
    %299 = math.exp %298 : vector<2x128xf32>
    %cst_73 = arith.constant 1.000000e+00 : f32
    %300 = vector.broadcast %cst_73 : f32 to vector<2x128xf32>
    %301 = arith.addf %300, %299 : vector<2x128xf32>
    %302 = arith.divf %300, %301 : vector<2x128xf32>
    %303 = math.tanh %294 : vector<2x128xf32>
    %304 = vector.extract_strided_slice %302 {offsets = [0, 0], sizes = [2, 32], strides = [1, 1]} : vector<2x128xf32> to vector<2x32xf32>
    %305 = vector.extract_strided_slice %302 {offsets = [0, 32], sizes = [2, 32], strides = [1, 1]} : vector<2x128xf32> to vector<2x32xf32>
    %306 = vector.extract_strided_slice %303 {offsets = [0, 64], sizes = [2, 32], strides = [1, 1]} : vector<2x128xf32> to vector<2x32xf32>
    %307 = vector.extract_strided_slice %302 {offsets = [0, 96], sizes = [2, 32], strides = [1, 1]} : vector<2x128xf32> to vector<2x32xf32>
    %308 = arith.mulf %305, %272 : vector<2x32xf32>
    %309 = arith.mulf %304, %306 : vector<2x32xf32>
    %310 = arith.addf %308, %309 : vector<2x32xf32>
    %311 = math.tanh %310 : vector<2x32xf32>
    %312 = arith.mulf %307, %311 : vector<2x32xf32>
    %313 = arith.negf %297 : vector<2x128xf32>
    %314 = math.exp %313 : vector<2x128xf32>
    %cst_74 = arith.constant 1.000000e+00 : f32
    %315 = vector.broadcast %cst_74 : f32 to vector<2x128xf32>
    %316 = arith.addf %315, %314 : vector<2x128xf32>
    %317 = arith.divf %315, %316 : vector<2x128xf32>
    %318 = math.tanh %297 : vector<2x128xf32>
    %319 = vector.extract_strided_slice %317 {offsets = [0, 0], sizes = [2, 32], strides = [1, 1]} : vector<2x128xf32> to vector<2x32xf32>
    %320 = vector.extract_strided_slice %317 {offsets = [0, 32], sizes = [2, 32], strides = [1, 1]} : vector<2x128xf32> to vector<2x32xf32>
    %321 = vector.extract_strided_slice %318 {offsets = [0, 64], sizes = [2, 32], strides = [1, 1]} : vector<2x128xf32> to vector<2x32xf32>
    %322 = vector.extract_strided_slice %317 {offsets = [0, 96], sizes = [2, 32], strides = [1, 1]} : vector<2x128xf32> to vector<2x32xf32>
    %323 = arith.mulf %320, %287 : vector<2x32xf32>
    %324 = arith.mulf %319, %321 : vector<2x32xf32>
    %325 = arith.addf %323, %324 : vector<2x32xf32>
    %326 = math.tanh %325 : vector<2x32xf32>
    %327 = arith.mulf %322, %326 : vector<2x32xf32>
    %c14_75 = arith.constant 14 : index
    %c0_76 = arith.constant 0 : index
    %328 = vector.load %arg8[%c14_75, %c0_76] : memref<16x64xf32, #tpu.memory_space<vmem>>, vector<2x32xf32>
    tpu.vector_store %arg8[%c14_75, %c0_76], %312 {strides = array<i32>} : memref<16x64xf32, #tpu.memory_space<vmem>>, vector<2x32xf32>,
    %c0_77 = arith.constant 0 : index
    %c32_78 = arith.constant 32 : index
    %329 = vector.load %arg8[%c0_77, %c32_78] : memref<16x64xf32, #tpu.memory_space<vmem>>, vector<2x32xf32>
    tpu.vector_store %arg8[%c0_77, %c32_78], %327 {strides = array<i32>} : memref<16x64xf32, #tpu.memory_space<vmem>>, vector<2x32xf32>,
    %c0_79 = arith.constant 0 : index
    %c0_80 = arith.constant 0 : index
    %330 = vector.load %arg6[%c0_79, %c0_80] : memref<8x32xf32, #tpu.memory_space<vmem>>, vector<2x32xf32>
    tpu.vector_store %arg6[%c0_79, %c0_80], %312 {strides = array<i32>} : memref<8x32xf32, #tpu.memory_space<vmem>>, vector<2x32xf32>,
    %c0_81 = arith.constant 0 : index
    %c0_82 = arith.constant 0 : index
    %331 = vector.load %arg7[%c0_81, %c0_82] : memref<8x32xf32, #tpu.memory_space<vmem>>, vector<2x32xf32>
    tpu.vector_store %arg7[%c0_81, %c0_82], %310 {strides = array<i32>} : memref<8x32xf32, #tpu.memory_space<vmem>>, vector<2x32xf32>,
    %c2_83 = arith.constant 2 : index
    %c0_84 = arith.constant 0 : index
    %332 = vector.load %arg6[%c2_83, %c0_84] : memref<8x32xf32, #tpu.memory_space<vmem>>, vector<2x32xf32>
    tpu.vector_store %arg6[%c2_83, %c0_84], %327 {strides = array<i32>} : memref<8x32xf32, #tpu.memory_space<vmem>>, vector<2x32xf32>,
    %c2_85 = arith.constant 2 : index
    %c0_86 = arith.constant 0 : index
    %333 = vector.load %arg7[%c2_85, %c0_86] : memref<8x32xf32, #tpu.memory_space<vmem>>, vector<2x32xf32>
    tpu.vector_store %arg7[%c2_85, %c0_86], %325 {strides = array<i32>} : memref<8x32xf32, #tpu.memory_space<vmem>>, vector<2x32xf32>,
    %c0_87 = arith.constant 0 : index
    %c0_88 = arith.constant 0 : index
    %334 = vector.load %arg8[%c0_87, %c0_88] : memref<16x64xf32, #tpu.memory_space<vmem>>, vector<16x64xf32>
    %c0_89 = arith.constant 0 : index
    %c0_90 = arith.constant 0 : index
    %c0_91 = arith.constant 0 : index
    %c0_92 = arith.constant 0 : index
    %335 = vector.load %arg2[%c0_89, %c0_90, %c0_91, %c0_92] : memref<1x2x64x128xf32, #tpu.memory_space<vmem>>, vector<1x1x64x128xf32>
    %336 = vector.shape_cast %335 : vector<1x1x64x128xf32> to vector<64x128xf32>
    %cst_93 = arith.constant dense<0.000000e+00> : vector<16x128xf32>
    %337 = tpu.matmul %334, %336, %cst_93 {dimension_numbers = #tpu.dot_dimension_numbers<[1], [0], [0], [1], [0, 0, 1, 1], [], []>} : vector<16x64xf32>, vector<64x128xf32>, vector<16x128xf32> -> vector<16x128xf32>
    %c2_94 = arith.constant 2 : index
    %c0_95 = arith.constant 0 : index
    %338 = vector.load %arg4[%c2_94, %c0_95] : memref<4x128xf32, #tpu.memory_space<vmem>>, vector<1x128xf32>
    %339 = vector.broadcast %338 : vector<1x128xf32> to vector<16x128xf32>
    %340 = arith.addf %337, %339 : vector<16x128xf32>
    %c0_96 = arith.constant 0 : index
    %c1_97 = arith.constant 1 : index
    %c0_98 = arith.constant 0 : index
    %c0_99 = arith.constant 0 : index
    %341 = vector.load %arg2[%c0_96, %c1_97, %c0_98, %c0_99] : memref<1x2x64x128xf32, #tpu.memory_space<vmem>>, vector<1x1x64x128xf32>
    %342 = vector.shape_cast %341 : vector<1x1x64x128xf32> to vector<64x128xf32>
    %cst_100 = arith.constant dense<0.000000e+00> : vector<16x128xf32>
    %343 = tpu.matmul %334, %342, %cst_100 {dimension_numbers = #tpu.dot_dimension_numbers<[1], [0], [0], [1], [0, 0, 1, 1], [], []>} : vector<16x64xf32>, vector<64x128xf32>, vector<16x128xf32> -> vector<16x128xf32>
    %c3 = arith.constant 3 : index
    %c0_101 = arith.constant 0 : index
    %344 = vector.load %arg4[%c3, %c0_101] : memref<4x128xf32, #tpu.memory_space<vmem>>, vector<1x128xf32>
    %345 = vector.broadcast %344 : vector<1x128xf32> to vector<16x128xf32>
    %346 = arith.addf %343, %345 : vector<16x128xf32>
    %c1_102 = arith.constant 1 : index
    %c0_103 = arith.constant 0 : index
    %c0_104 = arith.constant 0 : index
    %c0_105 = arith.constant 0 : index
    %347 = vector.load %arg3[%c1_102, %c0_103, %c0_104, %c0_105] : memref<2x2x32x128xf32, #tpu.memory_space<vmem>>, vector<1x1x32x128xf32>
    %348 = vector.shape_cast %347 : vector<1x1x32x128xf32> to vector<32x128xf32>
    %c1_106 = arith.constant 1 : index
    %c1_107 = arith.constant 1 : index
    %c0_108 = arith.constant 0 : index
    %c0_109 = arith.constant 0 : index
    %349 = vector.load %arg3[%c1_106, %c1_107, %c0_108, %c0_109] : memref<2x2x32x128xf32, #tpu.memory_space<vmem>>, vector<1x1x32x128xf32>
    %350 = vector.shape_cast %349 : vector<1x1x32x128xf32> to vector<32x128xf32>
    %cst_110 = arith.constant 0.000000e+00 : f32
    %351 = vector.broadcast %cst_110 : f32 to vector<2x32xf32>
    %cst_111 = arith.constant 0.000000e+00 : f32
    %352 = vector.broadcast %cst_111 : f32 to vector<2x32xf32>
    %cst_112 = arith.constant 0.000000e+00 : f32
    %353 = vector.broadcast %cst_112 : f32 to vector<2x32xf32>
    %cst_113 = arith.constant 0.000000e+00 : f32
    %354 = vector.broadcast %cst_113 : f32 to vector<2x32xf32>
    %355 = vector.extract_strided_slice %340 {offsets = [0, 0], sizes = [2, 128], strides = [1, 1]} : vector<16x128xf32> to vector<2x128xf32>
    %cst_114 = arith.constant dense<0.000000e+00> : vector<2x128xf32>
    %356 = tpu.matmul %351, %348, %cst_114 {dimension_numbers = #tpu.dot_dimension_numbers<[1], [0], [0], [1], [0, 0, 1, 1], [], []>} : vector<2x32xf32>, vector<32x128xf32>, vector<2x128xf32> -> vector<2x128xf32>
    %357 = arith.addf %355, %356 : vector<2x128xf32>
    %358 = vector.extract_strided_slice %346 {offsets = [14, 0], sizes = [2, 128], strides = [1, 1]} : vector<16x128xf32> to vector<2x128xf32>
    %cst_115 = arith.constant dense<0.000000e+00> : vector<2x128xf32>
    %359 = tpu.matmul %353, %350, %cst_115 {dimension_numbers = #tpu.dot_dimension_numbers<[1], [0], [0], [1], [0, 0, 1, 1], [], []>} : vector<2x32xf32>, vector<32x128xf32>, vector<2x128xf32> -> vector<2x128xf32>
    %360 = arith.addf %358, %359 : vector<2x128xf32>
    %361 = arith.negf %357 : vector<2x128xf32>
    %362 = math.exp %361 : vector<2x128xf32>
    %cst_116 = arith.constant 1.000000e+00 : f32
    %363 = vector.broadcast %cst_116 : f32 to vector<2x128xf32>
    %364 = arith.addf %363, %362 : vector<2x128xf32>
    %365 = arith.divf %363, %364 : vector<2x128xf32>
    %366 = math.tanh %357 : vector<2x128xf32>
    %367 = vector.extract_strided_slice %365 {offsets = [0, 0], sizes = [2, 32], strides = [1, 1]} : vector<2x128xf32> to vector<2x32xf32>
    %368 = vector.extract_strided_slice %365 {offsets = [0, 32], sizes = [2, 32], strides = [1, 1]} : vector<2x128xf32> to vector<2x32xf32>
    %369 = vector.extract_strided_slice %366 {offsets = [0, 64], sizes = [2, 32], strides = [1, 1]} : vector<2x128xf32> to vector<2x32xf32>
    %370 = vector.extract_strided_slice %365 {offsets = [0, 96], sizes = [2, 32], strides = [1, 1]} : vector<2x128xf32> to vector<2x32xf32>
    %371 = arith.mulf %368, %352 : vector<2x32xf32>
    %372 = arith.mulf %367, %369 : vector<2x32xf32>
    %373 = arith.addf %371, %372 : vector<2x32xf32>
    %374 = math.tanh %373 : vector<2x32xf32>
    %375 = arith.mulf %370, %374 : vector<2x32xf32>
    %376 = arith.negf %360 : vector<2x128xf32>
    %377 = math.exp %376 : vector<2x128xf32>
    %cst_117 = arith.constant 1.000000e+00 : f32
    %378 = vector.broadcast %cst_117 : f32 to vector<2x128xf32>
    %379 = arith.addf %378, %377 : vector<2x128xf32>
    %380 = arith.divf %378, %379 : vector<2x128xf32>
    %381 = math.tanh %360 : vector<2x128xf32>
    %382 = vector.extract_strided_slice %380 {offsets = [0, 0], sizes = [2, 32], strides = [1, 1]} : vector<2x128xf32> to vector<2x32xf32>
    %383 = vector.extract_strided_slice %380 {offsets = [0, 32], sizes = [2, 32], strides = [1, 1]} : vector<2x128xf32> to vector<2x32xf32>
    %384 = vector.extract_strided_slice %381 {offsets = [0, 64], sizes = [2, 32], strides = [1, 1]} : vector<2x128xf32> to vector<2x32xf32>
    %385 = vector.extract_strided_slice %380 {offsets = [0, 96], sizes = [2, 32], strides = [1, 1]} : vector<2x128xf32> to vector<2x32xf32>
    %386 = arith.mulf %383, %354 : vector<2x32xf32>
    %387 = arith.mulf %382, %384 : vector<2x32xf32>
    %388 = arith.addf %386, %387 : vector<2x32xf32>
    %389 = math.tanh %388 : vector<2x32xf32>
    %390 = arith.mulf %385, %389 : vector<2x32xf32>
    %c0_118 = arith.constant 0 : index
    %c0_119 = arith.constant 0 : index
    %391 = vector.load %arg5[%c0_118, %c0_119] : memref<16x64xf32, #tpu.memory_space<vmem>>, vector<2x32xf32>
    tpu.vector_store %arg5[%c0_118, %c0_119], %375 {strides = array<i32>} : memref<16x64xf32, #tpu.memory_space<vmem>>, vector<2x32xf32>,
    %c14_120 = arith.constant 14 : index
    %c32_121 = arith.constant 32 : index
    %392 = vector.load %arg5[%c14_120, %c32_121] : memref<16x64xf32, #tpu.memory_space<vmem>>, vector<2x32xf32>
    tpu.vector_store %arg5[%c14_120, %c32_121], %390 {strides = array<i32>} : memref<16x64xf32, #tpu.memory_space<vmem>>, vector<2x32xf32>,
    %393 = vector.extract_strided_slice %340 {offsets = [2, 0], sizes = [2, 128], strides = [1, 1]} : vector<16x128xf32> to vector<2x128xf32>
    %cst_122 = arith.constant dense<0.000000e+00> : vector<2x128xf32>
    %394 = tpu.matmul %375, %348, %cst_122 {dimension_numbers = #tpu.dot_dimension_numbers<[1], [0], [0], [1], [0, 0, 1, 1], [], []>} : vector<2x32xf32>, vector<32x128xf32>, vector<2x128xf32> -> vector<2x128xf32>
    %395 = arith.addf %393, %394 : vector<2x128xf32>
    %396 = vector.extract_strided_slice %346 {offsets = [12, 0], sizes = [2, 128], strides = [1, 1]} : vector<16x128xf32> to vector<2x128xf32>
    %cst_123 = arith.constant dense<0.000000e+00> : vector<2x128xf32>
    %397 = tpu.matmul %390, %350, %cst_123 {dimension_numbers = #tpu.dot_dimension_numbers<[1], [0], [0], [1], [0, 0, 1, 1], [], []>} : vector<2x32xf32>, vector<32x128xf32>, vector<2x128xf32> -> vector<2x128xf32>
    %398 = arith.addf %396, %397 : vector<2x128xf32>
    %399 = arith.negf %395 : vector<2x128xf32>
    %400 = math.exp %399 : vector<2x128xf32>
    %cst_124 = arith.constant 1.000000e+00 : f32
    %401 = vector.broadcast %cst_124 : f32 to vector<2x128xf32>
    %402 = arith.addf %401, %400 : vector<2x128xf32>
    %403 = arith.divf %401, %402 : vector<2x128xf32>
    %404 = math.tanh %395 : vector<2x128xf32>
    %405 = vector.extract_strided_slice %403 {offsets = [0, 0], sizes = [2, 32], strides = [1, 1]} : vector<2x128xf32> to vector<2x32xf32>
    %406 = vector.extract_strided_slice %403 {offsets = [0, 32], sizes = [2, 32], strides = [1, 1]} : vector<2x128xf32> to vector<2x32xf32>
    %407 = vector.extract_strided_slice %404 {offsets = [0, 64], sizes = [2, 32], strides = [1, 1]} : vector<2x128xf32> to vector<2x32xf32>
    %408 = vector.extract_strided_slice %403 {offsets = [0, 96], sizes = [2, 32], strides = [1, 1]} : vector<2x128xf32> to vector<2x32xf32>
    %409 = arith.mulf %406, %373 : vector<2x32xf32>
    %410 = arith.mulf %405, %407 : vector<2x32xf32>
    %411 = arith.addf %409, %410 : vector<2x32xf32>
    %412 = math.tanh %411 : vector<2x32xf32>
    %413 = arith.mulf %408, %412 : vector<2x32xf32>
    %414 = arith.negf %398 : vector<2x128xf32>
    %415 = math.exp %414 : vector<2x128xf32>
    %cst_125 = arith.constant 1.000000e+00 : f32
    %416 = vector.broadcast %cst_125 : f32 to vector<2x128xf32>
    %417 = arith.addf %416, %415 : vector<2x128xf32>
    %418 = arith.divf %416, %417 : vector<2x128xf32>
    %419 = math.tanh %398 : vector<2x128xf32>
    %420 = vector.extract_strided_slice %418 {offsets = [0, 0], sizes = [2, 32], strides = [1, 1]} : vector<2x128xf32> to vector<2x32xf32>
    %421 = vector.extract_strided_slice %418 {offsets = [0, 32], sizes = [2, 32], strides = [1, 1]} : vector<2x128xf32> to vector<2x32xf32>
    %422 = vector.extract_strided_slice %419 {offsets = [0, 64], sizes = [2, 32], strides = [1, 1]} : vector<2x128xf32> to vector<2x32xf32>
    %423 = vector.extract_strided_slice %418 {offsets = [0, 96], sizes = [2, 32], strides = [1, 1]} : vector<2x128xf32> to vector<2x32xf32>
    %424 = arith.mulf %421, %388 : vector<2x32xf32>
    %425 = arith.mulf %420, %422 : vector<2x32xf32>
    %426 = arith.addf %424, %425 : vector<2x32xf32>
    %427 = math.tanh %426 : vector<2x32xf32>
    %428 = arith.mulf %423, %427 : vector<2x32xf32>
    %c2_126 = arith.constant 2 : index
    %c0_127 = arith.constant 0 : index
    %429 = vector.load %arg5[%c2_126, %c0_127] : memref<16x64xf32, #tpu.memory_space<vmem>>, vector<2x32xf32>
    tpu.vector_store %arg5[%c2_126, %c0_127], %413 {strides = array<i32>} : memref<16x64xf32, #tpu.memory_space<vmem>>, vector<2x32xf32>,
    %c12_128 = arith.constant 12 : index
    %c32_129 = arith.constant 32 : index
    %430 = vector.load %arg5[%c12_128, %c32_129] : memref<16x64xf32, #tpu.memory_space<vmem>>, vector<2x32xf32>
    tpu.vector_store %arg5[%c12_128, %c32_129], %428 {strides = array<i32>} : memref<16x64xf32, #tpu.memory_space<vmem>>, vector<2x32xf32>,
    %431 = vector.extract_strided_slice %340 {offsets = [4, 0], sizes = [2, 128], strides = [1, 1]} : vector<16x128xf32> to vector<2x128xf32>
    %cst_130 = arith.constant dense<0.000000e+00> : vector<2x128xf32>
    %432 = tpu.matmul %413, %348, %cst_130 {dimension_numbers = #tpu.dot_dimension_numbers<[1], [0], [0], [1], [0, 0, 1, 1], [], []>} : vector<2x32xf32>, vector<32x128xf32>, vector<2x128xf32> -> vector<2x128xf32>
    %433 = arith.addf %431, %432 : vector<2x128xf32>
    %434 = vector.extract_strided_slice %346 {offsets = [10, 0], sizes = [2, 128], strides = [1, 1]} : vector<16x128xf32> to vector<2x128xf32>
    %cst_131 = arith.constant dense<0.000000e+00> : vector<2x128xf32>
    %435 = tpu.matmul %428, %350, %cst_131 {dimension_numbers = #tpu.dot_dimension_numbers<[1], [0], [0], [1], [0, 0, 1, 1], [], []>} : vector<2x32xf32>, vector<32x128xf32>, vector<2x128xf32> -> vector<2x128xf32>
    %436 = arith.addf %434, %435 : vector<2x128xf32>
    %437 = arith.negf %433 : vector<2x128xf32>
    %438 = math.exp %437 : vector<2x128xf32>
    %cst_132 = arith.constant 1.000000e+00 : f32
    %439 = vector.broadcast %cst_132 : f32 to vector<2x128xf32>
    %440 = arith.addf %439, %438 : vector<2x128xf32>
    %441 = arith.divf %439, %440 : vector<2x128xf32>
    %442 = math.tanh %433 : vector<2x128xf32>
    %443 = vector.extract_strided_slice %441 {offsets = [0, 0], sizes = [2, 32], strides = [1, 1]} : vector<2x128xf32> to vector<2x32xf32>
    %444 = vector.extract_strided_slice %441 {offsets = [0, 32], sizes = [2, 32], strides = [1, 1]} : vector<2x128xf32> to vector<2x32xf32>
    %445 = vector.extract_strided_slice %442 {offsets = [0, 64], sizes = [2, 32], strides = [1, 1]} : vector<2x128xf32> to vector<2x32xf32>
    %446 = vector.extract_strided_slice %441 {offsets = [0, 96], sizes = [2, 32], strides = [1, 1]} : vector<2x128xf32> to vector<2x32xf32>
    %447 = arith.mulf %444, %411 : vector<2x32xf32>
    %448 = arith.mulf %443, %445 : vector<2x32xf32>
    %449 = arith.addf %447, %448 : vector<2x32xf32>
    %450 = math.tanh %449 : vector<2x32xf32>
    %451 = arith.mulf %446, %450 : vector<2x32xf32>
    %452 = arith.negf %436 : vector<2x128xf32>
    %453 = math.exp %452 : vector<2x128xf32>
    %cst_133 = arith.constant 1.000000e+00 : f32
    %454 = vector.broadcast %cst_133 : f32 to vector<2x128xf32>
    %455 = arith.addf %454, %453 : vector<2x128xf32>
    %456 = arith.divf %454, %455 : vector<2x128xf32>
    %457 = math.tanh %436 : vector<2x128xf32>
    %458 = vector.extract_strided_slice %456 {offsets = [0, 0], sizes = [2, 32], strides = [1, 1]} : vector<2x128xf32> to vector<2x32xf32>
    %459 = vector.extract_strided_slice %456 {offsets = [0, 32], sizes = [2, 32], strides = [1, 1]} : vector<2x128xf32> to vector<2x32xf32>
    %460 = vector.extract_strided_slice %457 {offsets = [0, 64], sizes = [2, 32], strides = [1, 1]} : vector<2x128xf32> to vector<2x32xf32>
    %461 = vector.extract_strided_slice %456 {offsets = [0, 96], sizes = [2, 32], strides = [1, 1]} : vector<2x128xf32> to vector<2x32xf32>
    %462 = arith.mulf %459, %426 : vector<2x32xf32>
    %463 = arith.mulf %458, %460 : vector<2x32xf32>
    %464 = arith.addf %462, %463 : vector<2x32xf32>
    %465 = math.tanh %464 : vector<2x32xf32>
    %466 = arith.mulf %461, %465 : vector<2x32xf32>
    %c4_134 = arith.constant 4 : index
    %c0_135 = arith.constant 0 : index
    %467 = vector.load %arg5[%c4_134, %c0_135] : memref<16x64xf32, #tpu.memory_space<vmem>>, vector<2x32xf32>
    tpu.vector_store %arg5[%c4_134, %c0_135], %451 {strides = array<i32>} : memref<16x64xf32, #tpu.memory_space<vmem>>, vector<2x32xf32>,
    %c10_136 = arith.constant 10 : index
    %c32_137 = arith.constant 32 : index
    %468 = vector.load %arg5[%c10_136, %c32_137] : memref<16x64xf32, #tpu.memory_space<vmem>>, vector<2x32xf32>
    tpu.vector_store %arg5[%c10_136, %c32_137], %466 {strides = array<i32>} : memref<16x64xf32, #tpu.memory_space<vmem>>, vector<2x32xf32>,
    %469 = vector.extract_strided_slice %340 {offsets = [6, 0], sizes = [2, 128], strides = [1, 1]} : vector<16x128xf32> to vector<2x128xf32>
    %cst_138 = arith.constant dense<0.000000e+00> : vector<2x128xf32>
    %470 = tpu.matmul %451, %348, %cst_138 {dimension_numbers = #tpu.dot_dimension_numbers<[1], [0], [0], [1], [0, 0, 1, 1], [], []>} : vector<2x32xf32>, vector<32x128xf32>, vector<2x128xf32> -> vector<2x128xf32>
    %471 = arith.addf %469, %470 : vector<2x128xf32>
    %472 = vector.extract_strided_slice %346 {offsets = [8, 0], sizes = [2, 128], strides = [1, 1]} : vector<16x128xf32> to vector<2x128xf32>
    %cst_139 = arith.constant dense<0.000000e+00> : vector<2x128xf32>
    %473 = tpu.matmul %466, %350, %cst_139 {dimension_numbers = #tpu.dot_dimension_numbers<[1], [0], [0], [1], [0, 0, 1, 1], [], []>} : vector<2x32xf32>, vector<32x128xf32>, vector<2x128xf32> -> vector<2x128xf32>
    %474 = arith.addf %472, %473 : vector<2x128xf32>
    %475 = arith.negf %471 : vector<2x128xf32>
    %476 = math.exp %475 : vector<2x128xf32>
    %cst_140 = arith.constant 1.000000e+00 : f32
    %477 = vector.broadcast %cst_140 : f32 to vector<2x128xf32>
    %478 = arith.addf %477, %476 : vector<2x128xf32>
    %479 = arith.divf %477, %478 : vector<2x128xf32>
    %480 = math.tanh %471 : vector<2x128xf32>
    %481 = vector.extract_strided_slice %479 {offsets = [0, 0], sizes = [2, 32], strides = [1, 1]} : vector<2x128xf32> to vector<2x32xf32>
    %482 = vector.extract_strided_slice %479 {offsets = [0, 32], sizes = [2, 32], strides = [1, 1]} : vector<2x128xf32> to vector<2x32xf32>
    %483 = vector.extract_strided_slice %480 {offsets = [0, 64], sizes = [2, 32], strides = [1, 1]} : vector<2x128xf32> to vector<2x32xf32>
    %484 = vector.extract_strided_slice %479 {offsets = [0, 96], sizes = [2, 32], strides = [1, 1]} : vector<2x128xf32> to vector<2x32xf32>
    %485 = arith.mulf %482, %449 : vector<2x32xf32>
    %486 = arith.mulf %481, %483 : vector<2x32xf32>
    %487 = arith.addf %485, %486 : vector<2x32xf32>
    %488 = math.tanh %487 : vector<2x32xf32>
    %489 = arith.mulf %484, %488 : vector<2x32xf32>
    %490 = arith.negf %474 : vector<2x128xf32>
    %491 = math.exp %490 : vector<2x128xf32>
    %cst_141 = arith.constant 1.000000e+00 : f32
    %492 = vector.broadcast %cst_141 : f32 to vector<2x128xf32>
    %493 = arith.addf %492, %491 : vector<2x128xf32>
    %494 = arith.divf %492, %493 : vector<2x128xf32>
    %495 = math.tanh %474 : vector<2x128xf32>
    %496 = vector.extract_strided_slice %494 {offsets = [0, 0], sizes = [2, 32], strides = [1, 1]} : vector<2x128xf32> to vector<2x32xf32>
    %497 = vector.extract_strided_slice %494 {offsets = [0, 32], sizes = [2, 32], strides = [1, 1]} : vector<2x128xf32> to vector<2x32xf32>
    %498 = vector.extract_strided_slice %495 {offsets = [0, 64], sizes = [2, 32], strides = [1, 1]} : vector<2x128xf32> to vector<2x32xf32>
    %499 = vector.extract_strided_slice %494 {offsets = [0, 96], sizes = [2, 32], strides = [1, 1]} : vector<2x128xf32> to vector<2x32xf32>
    %500 = arith.mulf %497, %464 : vector<2x32xf32>
    %501 = arith.mulf %496, %498 : vector<2x32xf32>
    %502 = arith.addf %500, %501 : vector<2x32xf32>
    %503 = math.tanh %502 : vector<2x32xf32>
    %504 = arith.mulf %499, %503 : vector<2x32xf32>
    %c6_142 = arith.constant 6 : index
    %c0_143 = arith.constant 0 : index
    %505 = vector.load %arg5[%c6_142, %c0_143] : memref<16x64xf32, #tpu.memory_space<vmem>>, vector<2x32xf32>
    tpu.vector_store %arg5[%c6_142, %c0_143], %489 {strides = array<i32>} : memref<16x64xf32, #tpu.memory_space<vmem>>, vector<2x32xf32>,
    %c8_144 = arith.constant 8 : index
    %c32_145 = arith.constant 32 : index
    %506 = vector.load %arg5[%c8_144, %c32_145] : memref<16x64xf32, #tpu.memory_space<vmem>>, vector<2x32xf32>
    tpu.vector_store %arg5[%c8_144, %c32_145], %504 {strides = array<i32>} : memref<16x64xf32, #tpu.memory_space<vmem>>, vector<2x32xf32>,
    %507 = vector.extract_strided_slice %340 {offsets = [8, 0], sizes = [2, 128], strides = [1, 1]} : vector<16x128xf32> to vector<2x128xf32>
    %cst_146 = arith.constant dense<0.000000e+00> : vector<2x128xf32>
    %508 = tpu.matmul %489, %348, %cst_146 {dimension_numbers = #tpu.dot_dimension_numbers<[1], [0], [0], [1], [0, 0, 1, 1], [], []>} : vector<2x32xf32>, vector<32x128xf32>, vector<2x128xf32> -> vector<2x128xf32>
    %509 = arith.addf %507, %508 : vector<2x128xf32>
    %510 = vector.extract_strided_slice %346 {offsets = [6, 0], sizes = [2, 128], strides = [1, 1]} : vector<16x128xf32> to vector<2x128xf32>
    %cst_147 = arith.constant dense<0.000000e+00> : vector<2x128xf32>
    %511 = tpu.matmul %504, %350, %cst_147 {dimension_numbers = #tpu.dot_dimension_numbers<[1], [0], [0], [1], [0, 0, 1, 1], [], []>} : vector<2x32xf32>, vector<32x128xf32>, vector<2x128xf32> -> vector<2x128xf32>
    %512 = arith.addf %510, %511 : vector<2x128xf32>
    %513 = arith.negf %509 : vector<2x128xf32>
    %514 = math.exp %513 : vector<2x128xf32>
    %cst_148 = arith.constant 1.000000e+00 : f32
    %515 = vector.broadcast %cst_148 : f32 to vector<2x128xf32>
    %516 = arith.addf %515, %514 : vector<2x128xf32>
    %517 = arith.divf %515, %516 : vector<2x128xf32>
    %518 = math.tanh %509 : vector<2x128xf32>
    %519 = vector.extract_strided_slice %517 {offsets = [0, 0], sizes = [2, 32], strides = [1, 1]} : vector<2x128xf32> to vector<2x32xf32>
    %520 = vector.extract_strided_slice %517 {offsets = [0, 32], sizes = [2, 32], strides = [1, 1]} : vector<2x128xf32> to vector<2x32xf32>
    %521 = vector.extract_strided_slice %518 {offsets = [0, 64], sizes = [2, 32], strides = [1, 1]} : vector<2x128xf32> to vector<2x32xf32>
    %522 = vector.extract_strided_slice %517 {offsets = [0, 96], sizes = [2, 32], strides = [1, 1]} : vector<2x128xf32> to vector<2x32xf32>
    %523 = arith.mulf %520, %487 : vector<2x32xf32>
    %524 = arith.mulf %519, %521 : vector<2x32xf32>
    %525 = arith.addf %523, %524 : vector<2x32xf32>
    %526 = math.tanh %525 : vector<2x32xf32>
    %527 = arith.mulf %522, %526 : vector<2x32xf32>
    %528 = arith.negf %512 : vector<2x128xf32>
    %529 = math.exp %528 : vector<2x128xf32>
    %cst_149 = arith.constant 1.000000e+00 : f32
    %530 = vector.broadcast %cst_149 : f32 to vector<2x128xf32>
    %531 = arith.addf %530, %529 : vector<2x128xf32>
    %532 = arith.divf %530, %531 : vector<2x128xf32>
    %533 = math.tanh %512 : vector<2x128xf32>
    %534 = vector.extract_strided_slice %532 {offsets = [0, 0], sizes = [2, 32], strides = [1, 1]} : vector<2x128xf32> to vector<2x32xf32>
    %535 = vector.extract_strided_slice %532 {offsets = [0, 32], sizes = [2, 32], strides = [1, 1]} : vector<2x128xf32> to vector<2x32xf32>
    %536 = vector.extract_strided_slice %533 {offsets = [0, 64], sizes = [2, 32], strides = [1, 1]} : vector<2x128xf32> to vector<2x32xf32>
    %537 = vector.extract_strided_slice %532 {offsets = [0, 96], sizes = [2, 32], strides = [1, 1]} : vector<2x128xf32> to vector<2x32xf32>
    %538 = arith.mulf %535, %502 : vector<2x32xf32>
    %539 = arith.mulf %534, %536 : vector<2x32xf32>
    %540 = arith.addf %538, %539 : vector<2x32xf32>
    %541 = math.tanh %540 : vector<2x32xf32>
    %542 = arith.mulf %537, %541 : vector<2x32xf32>
    %c8_150 = arith.constant 8 : index
    %c0_151 = arith.constant 0 : index
    %543 = vector.load %arg5[%c8_150, %c0_151] : memref<16x64xf32, #tpu.memory_space<vmem>>, vector<2x32xf32>
    tpu.vector_store %arg5[%c8_150, %c0_151], %527 {strides = array<i32>} : memref<16x64xf32, #tpu.memory_space<vmem>>, vector<2x32xf32>,
    %c6_152 = arith.constant 6 : index
    %c32_153 = arith.constant 32 : index
    %544 = vector.load %arg5[%c6_152, %c32_153] : memref<16x64xf32, #tpu.memory_space<vmem>>, vector<2x32xf32>
    tpu.vector_store %arg5[%c6_152, %c32_153], %542 {strides = array<i32>} : memref<16x64xf32, #tpu.memory_space<vmem>>, vector<2x32xf32>,
    %545 = vector.extract_strided_slice %340 {offsets = [10, 0], sizes = [2, 128], strides = [1, 1]} : vector<16x128xf32> to vector<2x128xf32>
    %cst_154 = arith.constant dense<0.000000e+00> : vector<2x128xf32>
    %546 = tpu.matmul %527, %348, %cst_154 {dimension_numbers = #tpu.dot_dimension_numbers<[1], [0], [0], [1], [0, 0, 1, 1], [], []>} : vector<2x32xf32>, vector<32x128xf32>, vector<2x128xf32> -> vector<2x128xf32>
    %547 = arith.addf %545, %546 : vector<2x128xf32>
    %548 = vector.extract_strided_slice %346 {offsets = [4, 0], sizes = [2, 128], strides = [1, 1]} : vector<16x128xf32> to vector<2x128xf32>
    %cst_155 = arith.constant dense<0.000000e+00> : vector<2x128xf32>
    %549 = tpu.matmul %542, %350, %cst_155 {dimension_numbers = #tpu.dot_dimension_numbers<[1], [0], [0], [1], [0, 0, 1, 1], [], []>} : vector<2x32xf32>, vector<32x128xf32>, vector<2x128xf32> -> vector<2x128xf32>
    %550 = arith.addf %548, %549 : vector<2x128xf32>
    %551 = arith.negf %547 : vector<2x128xf32>
    %552 = math.exp %551 : vector<2x128xf32>
    %cst_156 = arith.constant 1.000000e+00 : f32
    %553 = vector.broadcast %cst_156 : f32 to vector<2x128xf32>
    %554 = arith.addf %553, %552 : vector<2x128xf32>
    %555 = arith.divf %553, %554 : vector<2x128xf32>
    %556 = math.tanh %547 : vector<2x128xf32>
    %557 = vector.extract_strided_slice %555 {offsets = [0, 0], sizes = [2, 32], strides = [1, 1]} : vector<2x128xf32> to vector<2x32xf32>
    %558 = vector.extract_strided_slice %555 {offsets = [0, 32], sizes = [2, 32], strides = [1, 1]} : vector<2x128xf32> to vector<2x32xf32>
    %559 = vector.extract_strided_slice %556 {offsets = [0, 64], sizes = [2, 32], strides = [1, 1]} : vector<2x128xf32> to vector<2x32xf32>
    %560 = vector.extract_strided_slice %555 {offsets = [0, 96], sizes = [2, 32], strides = [1, 1]} : vector<2x128xf32> to vector<2x32xf32>
    %561 = arith.mulf %558, %525 : vector<2x32xf32>
    %562 = arith.mulf %557, %559 : vector<2x32xf32>
    %563 = arith.addf %561, %562 : vector<2x32xf32>
    %564 = math.tanh %563 : vector<2x32xf32>
    %565 = arith.mulf %560, %564 : vector<2x32xf32>
    %566 = arith.negf %550 : vector<2x128xf32>
    %567 = math.exp %566 : vector<2x128xf32>
    %cst_157 = arith.constant 1.000000e+00 : f32
    %568 = vector.broadcast %cst_157 : f32 to vector<2x128xf32>
    %569 = arith.addf %568, %567 : vector<2x128xf32>
    %570 = arith.divf %568, %569 : vector<2x128xf32>
    %571 = math.tanh %550 : vector<2x128xf32>
    %572 = vector.extract_strided_slice %570 {offsets = [0, 0], sizes = [2, 32], strides = [1, 1]} : vector<2x128xf32> to vector<2x32xf32>
    %573 = vector.extract_strided_slice %570 {offsets = [0, 32], sizes = [2, 32], strides = [1, 1]} : vector<2x128xf32> to vector<2x32xf32>
    %574 = vector.extract_strided_slice %571 {offsets = [0, 64], sizes = [2, 32], strides = [1, 1]} : vector<2x128xf32> to vector<2x32xf32>
    %575 = vector.extract_strided_slice %570 {offsets = [0, 96], sizes = [2, 32], strides = [1, 1]} : vector<2x128xf32> to vector<2x32xf32>
    %576 = arith.mulf %573, %540 : vector<2x32xf32>
    %577 = arith.mulf %572, %574 : vector<2x32xf32>
    %578 = arith.addf %576, %577 : vector<2x32xf32>
    %579 = math.tanh %578 : vector<2x32xf32>
    %580 = arith.mulf %575, %579 : vector<2x32xf32>
    %c10_158 = arith.constant 10 : index
    %c0_159 = arith.constant 0 : index
    %581 = vector.load %arg5[%c10_158, %c0_159] : memref<16x64xf32, #tpu.memory_space<vmem>>, vector<2x32xf32>
    tpu.vector_store %arg5[%c10_158, %c0_159], %565 {strides = array<i32>} : memref<16x64xf32, #tpu.memory_space<vmem>>, vector<2x32xf32>,
    %c4_160 = arith.constant 4 : index
    %c32_161 = arith.constant 32 : index
    %582 = vector.load %arg5[%c4_160, %c32_161] : memref<16x64xf32, #tpu.memory_space<vmem>>, vector<2x32xf32>
    tpu.vector_store %arg5[%c4_160, %c32_161], %580 {strides = array<i32>} : memref<16x64xf32, #tpu.memory_space<vmem>>, vector<2x32xf32>,
    %583 = vector.extract_strided_slice %340 {offsets = [12, 0], sizes = [2, 128], strides = [1, 1]} : vector<16x128xf32> to vector<2x128xf32>
    %cst_162 = arith.constant dense<0.000000e+00> : vector<2x128xf32>
    %584 = tpu.matmul %565, %348, %cst_162 {dimension_numbers = #tpu.dot_dimension_numbers<[1], [0], [0], [1], [0, 0, 1, 1], [], []>} : vector<2x32xf32>, vector<32x128xf32>, vector<2x128xf32> -> vector<2x128xf32>
    %585 = arith.addf %583, %584 : vector<2x128xf32>
    %586 = vector.extract_strided_slice %346 {offsets = [2, 0], sizes = [2, 128], strides = [1, 1]} : vector<16x128xf32> to vector<2x128xf32>
    %cst_163 = arith.constant dense<0.000000e+00> : vector<2x128xf32>
    %587 = tpu.matmul %580, %350, %cst_163 {dimension_numbers = #tpu.dot_dimension_numbers<[1], [0], [0], [1], [0, 0, 1, 1], [], []>} : vector<2x32xf32>, vector<32x128xf32>, vector<2x128xf32> -> vector<2x128xf32>
    %588 = arith.addf %586, %587 : vector<2x128xf32>
    %589 = arith.negf %585 : vector<2x128xf32>
    %590 = math.exp %589 : vector<2x128xf32>
    %cst_164 = arith.constant 1.000000e+00 : f32
    %591 = vector.broadcast %cst_164 : f32 to vector<2x128xf32>
    %592 = arith.addf %591, %590 : vector<2x128xf32>
    %593 = arith.divf %591, %592 : vector<2x128xf32>
    %594 = math.tanh %585 : vector<2x128xf32>
    %595 = vector.extract_strided_slice %593 {offsets = [0, 0], sizes = [2, 32], strides = [1, 1]} : vector<2x128xf32> to vector<2x32xf32>
    %596 = vector.extract_strided_slice %593 {offsets = [0, 32], sizes = [2, 32], strides = [1, 1]} : vector<2x128xf32> to vector<2x32xf32>
    %597 = vector.extract_strided_slice %594 {offsets = [0, 64], sizes = [2, 32], strides = [1, 1]} : vector<2x128xf32> to vector<2x32xf32>
    %598 = vector.extract_strided_slice %593 {offsets = [0, 96], sizes = [2, 32], strides = [1, 1]} : vector<2x128xf32> to vector<2x32xf32>
    %599 = arith.mulf %596, %563 : vector<2x32xf32>
    %600 = arith.mulf %595, %597 : vector<2x32xf32>
    %601 = arith.addf %599, %600 : vector<2x32xf32>
    %602 = math.tanh %601 : vector<2x32xf32>
    %603 = arith.mulf %598, %602 : vector<2x32xf32>
    %604 = arith.negf %588 : vector<2x128xf32>
    %605 = math.exp %604 : vector<2x128xf32>
    %cst_165 = arith.constant 1.000000e+00 : f32
    %606 = vector.broadcast %cst_165 : f32 to vector<2x128xf32>
    %607 = arith.addf %606, %605 : vector<2x128xf32>
    %608 = arith.divf %606, %607 : vector<2x128xf32>
    %609 = math.tanh %588 : vector<2x128xf32>
    %610 = vector.extract_strided_slice %608 {offsets = [0, 0], sizes = [2, 32], strides = [1, 1]} : vector<2x128xf32> to vector<2x32xf32>
    %611 = vector.extract_strided_slice %608 {offsets = [0, 32], sizes = [2, 32], strides = [1, 1]} : vector<2x128xf32> to vector<2x32xf32>
    %612 = vector.extract_strided_slice %609 {offsets = [0, 64], sizes = [2, 32], strides = [1, 1]} : vector<2x128xf32> to vector<2x32xf32>
    %613 = vector.extract_strided_slice %608 {offsets = [0, 96], sizes = [2, 32], strides = [1, 1]} : vector<2x128xf32> to vector<2x32xf32>
    %614 = arith.mulf %611, %578 : vector<2x32xf32>
    %615 = arith.mulf %610, %612 : vector<2x32xf32>
    %616 = arith.addf %614, %615 : vector<2x32xf32>
    %617 = math.tanh %616 : vector<2x32xf32>
    %618 = arith.mulf %613, %617 : vector<2x32xf32>
    %c12_166 = arith.constant 12 : index
    %c0_167 = arith.constant 0 : index
    %619 = vector.load %arg5[%c12_166, %c0_167] : memref<16x64xf32, #tpu.memory_space<vmem>>, vector<2x32xf32>
    tpu.vector_store %arg5[%c12_166, %c0_167], %603 {strides = array<i32>} : memref<16x64xf32, #tpu.memory_space<vmem>>, vector<2x32xf32>,
    %c2_168 = arith.constant 2 : index
    %c32_169 = arith.constant 32 : index
    %620 = vector.load %arg5[%c2_168, %c32_169] : memref<16x64xf32, #tpu.memory_space<vmem>>, vector<2x32xf32>
    tpu.vector_store %arg5[%c2_168, %c32_169], %618 {strides = array<i32>} : memref<16x64xf32, #tpu.memory_space<vmem>>, vector<2x32xf32>,
    %621 = vector.extract_strided_slice %340 {offsets = [14, 0], sizes = [2, 128], strides = [1, 1]} : vector<16x128xf32> to vector<2x128xf32>
    %cst_170 = arith.constant dense<0.000000e+00> : vector<2x128xf32>
    %622 = tpu.matmul %603, %348, %cst_170 {dimension_numbers = #tpu.dot_dimension_numbers<[1], [0], [0], [1], [0, 0, 1, 1], [], []>} : vector<2x32xf32>, vector<32x128xf32>, vector<2x128xf32> -> vector<2x128xf32>
    %623 = arith.addf %621, %622 : vector<2x128xf32>
    %624 = vector.extract_strided_slice %346 {offsets = [0, 0], sizes = [2, 128], strides = [1, 1]} : vector<16x128xf32> to vector<2x128xf32>
    %cst_171 = arith.constant dense<0.000000e+00> : vector<2x128xf32>
    %625 = tpu.matmul %618, %350, %cst_171 {dimension_numbers = #tpu.dot_dimension_numbers<[1], [0], [0], [1], [0, 0, 1, 1], [], []>} : vector<2x32xf32>, vector<32x128xf32>, vector<2x128xf32> -> vector<2x128xf32>
    %626 = arith.addf %624, %625 : vector<2x128xf32>
    %627 = arith.negf %623 : vector<2x128xf32>
    %628 = math.exp %627 : vector<2x128xf32>
    %cst_172 = arith.constant 1.000000e+00 : f32
    %629 = vector.broadcast %cst_172 : f32 to vector<2x128xf32>
    %630 = arith.addf %629, %628 : vector<2x128xf32>
    %631 = arith.divf %629, %630 : vector<2x128xf32>
    %632 = math.tanh %623 : vector<2x128xf32>
    %633 = vector.extract_strided_slice %631 {offsets = [0, 0], sizes = [2, 32], strides = [1, 1]} : vector<2x128xf32> to vector<2x32xf32>
    %634 = vector.extract_strided_slice %631 {offsets = [0, 32], sizes = [2, 32], strides = [1, 1]} : vector<2x128xf32> to vector<2x32xf32>
    %635 = vector.extract_strided_slice %632 {offsets = [0, 64], sizes = [2, 32], strides = [1, 1]} : vector<2x128xf32> to vector<2x32xf32>
    %636 = vector.extract_strided_slice %631 {offsets = [0, 96], sizes = [2, 32], strides = [1, 1]} : vector<2x128xf32> to vector<2x32xf32>
    %637 = arith.mulf %634, %601 : vector<2x32xf32>
    %638 = arith.mulf %633, %635 : vector<2x32xf32>
    %639 = arith.addf %637, %638 : vector<2x32xf32>
    %640 = math.tanh %639 : vector<2x32xf32>
    %641 = arith.mulf %636, %640 : vector<2x32xf32>
    %642 = arith.negf %626 : vector<2x128xf32>
    %643 = math.exp %642 : vector<2x128xf32>
    %cst_173 = arith.constant 1.000000e+00 : f32
    %644 = vector.broadcast %cst_173 : f32 to vector<2x128xf32>
    %645 = arith.addf %644, %643 : vector<2x128xf32>
    %646 = arith.divf %644, %645 : vector<2x128xf32>
    %647 = math.tanh %626 : vector<2x128xf32>
    %648 = vector.extract_strided_slice %646 {offsets = [0, 0], sizes = [2, 32], strides = [1, 1]} : vector<2x128xf32> to vector<2x32xf32>
    %649 = vector.extract_strided_slice %646 {offsets = [0, 32], sizes = [2, 32], strides = [1, 1]} : vector<2x128xf32> to vector<2x32xf32>
    %650 = vector.extract_strided_slice %647 {offsets = [0, 64], sizes = [2, 32], strides = [1, 1]} : vector<2x128xf32> to vector<2x32xf32>
    %651 = vector.extract_strided_slice %646 {offsets = [0, 96], sizes = [2, 32], strides = [1, 1]} : vector<2x128xf32> to vector<2x32xf32>
    %652 = arith.mulf %649, %616 : vector<2x32xf32>
    %653 = arith.mulf %648, %650 : vector<2x32xf32>
    %654 = arith.addf %652, %653 : vector<2x32xf32>
    %655 = math.tanh %654 : vector<2x32xf32>
    %656 = arith.mulf %651, %655 : vector<2x32xf32>
    %c14_174 = arith.constant 14 : index
    %c0_175 = arith.constant 0 : index
    %657 = vector.load %arg5[%c14_174, %c0_175] : memref<16x64xf32, #tpu.memory_space<vmem>>, vector<2x32xf32>
    tpu.vector_store %arg5[%c14_174, %c0_175], %641 {strides = array<i32>} : memref<16x64xf32, #tpu.memory_space<vmem>>, vector<2x32xf32>,
    %c0_176 = arith.constant 0 : index
    %c32_177 = arith.constant 32 : index
    %658 = vector.load %arg5[%c0_176, %c32_177] : memref<16x64xf32, #tpu.memory_space<vmem>>, vector<2x32xf32>
    tpu.vector_store %arg5[%c0_176, %c32_177], %656 {strides = array<i32>} : memref<16x64xf32, #tpu.memory_space<vmem>>, vector<2x32xf32>,
    %c4_178 = arith.constant 4 : index
    %c0_179 = arith.constant 0 : index
    %659 = vector.load %arg6[%c4_178, %c0_179] : memref<8x32xf32, #tpu.memory_space<vmem>>, vector<2x32xf32>
    tpu.vector_store %arg6[%c4_178, %c0_179], %641 {strides = array<i32>} : memref<8x32xf32, #tpu.memory_space<vmem>>, vector<2x32xf32>,
    %c4_180 = arith.constant 4 : index
    %c0_181 = arith.constant 0 : index
    %660 = vector.load %arg7[%c4_180, %c0_181] : memref<8x32xf32, #tpu.memory_space<vmem>>, vector<2x32xf32>
    tpu.vector_store %arg7[%c4_180, %c0_181], %639 {strides = array<i32>} : memref<8x32xf32, #tpu.memory_space<vmem>>, vector<2x32xf32>,
    %c6_182 = arith.constant 6 : index
    %c0_183 = arith.constant 0 : index
    %661 = vector.load %arg6[%c6_182, %c0_183] : memref<8x32xf32, #tpu.memory_space<vmem>>, vector<2x32xf32>
    tpu.vector_store %arg6[%c6_182, %c0_183], %656 {strides = array<i32>} : memref<8x32xf32, #tpu.memory_space<vmem>>, vector<2x32xf32>,
    %c6_184 = arith.constant 6 : index
    %c0_185 = arith.constant 0 : index
    %662 = vector.load %arg7[%c6_184, %c0_185] : memref<8x32xf32, #tpu.memory_space<vmem>>, vector<2x32xf32>
    tpu.vector_store %arg7[%c6_184, %c0_185], %654 {strides = array<i32>} : memref<8x32xf32, #tpu.memory_space<vmem>>, vector<2x32xf32>,
    return
  }
}

</mosaic_0001>

<llo_original>
// kernel: tpu_custom_call.1
$region0: #{tpu_custom_call.1}
  #allocation0 [shape = 'u32[]', space=smem, size = 0x4, offset = 0x4, fixed_abs, tag = 'smem constant byte address 0x4 - core index']
  #allocation1 [shape = 'u32[144,128]{1,0:T(1,128)}', space=vmem, size = 0x12000, scoped, tag = 'internal scratch']
  #allocation2 [shape = 'f32[16,64]{1,0:T(8,128)}', space=vmem, size = 0x2000, scoped, tag = 'scratch operand']
  %s0 = inlined_call_operand.vmem [shape: s32[16,1], index: 0, kind: input, shape index: {}]
  %s1 = inlined_call_operand.vmem [shape: f32[2,20,128], index: 1, kind: input, shape index: {}]
  %s2 = inlined_call_operand.hbm [shape: f32[1,2,64,128], index: 2, kind: input, shape index: {}]
  %s3 = inlined_call_operand.hbm [shape: f32[2,2,32,128], index: 3, kind: input, shape index: {}]
  %s4 = inlined_call_operand.vmem [shape: f32[4,128], index: 4, kind: input, shape index: {}]
  %s5 = inlined_call_operand.hbm [shape: f32[16,64], index: 5, kind: output, shape index: {0}]
  %s6 = inlined_call_operand.hbm [shape: f32[8,32], index: 6, kind: output, shape index: {1}]
  %s7 = inlined_call_operand.hbm [shape: f32[8,32], index: 7, kind: output, shape index: {2}]
  %8 = xla_tuple %s5, %s6, %s7
  %s9 = sld [smem:[#allocation0]]
  $region54: #{tpu_custom_call.1} parent=0
    _
  %s11 = ssub.s32 1, %s9
  %s12 = scalar_select 0, %s11, %s9
  $region1: #{tpu_custom_call.1} parent=0
    #allocation3 [shape = 'u8[65536]{0}', space=vmem, size = 0x10000, scoped, tag = 'input window, operand 2, single buffered']
    #allocation4 [shape = 's32[1]{0}', space=sflag, size = 0x4, scoped, tag = 'scoped memory for tpu_custom_call.1']
    #allocation5 [shape = 's32[1]{0}', space=sflag, size = 0x4, scoped, tag = 'scoped memory for tpu_custom_call.1']
    #allocation6 [shape = 'u8[65536]{0}', space=vmem, size = 0x10000, scoped, tag = 'input window, operand 3, single buffered']
    #allocation7 [shape = 's32[1]{0}', space=sflag, size = 0x4, scoped, tag = 'scoped memory for tpu_custom_call.1']
    #allocation8 [shape = 'u8[8192]{0}', space=vmem, size = 0x2000, scoped, tag = 'output window, operand 0, single buffered']
    #allocation9 [shape = 'u8[4096]{0}', space=vmem, size = 0x1000, scoped, tag = 'output window, operand 1, single buffered']
    #allocation10 [shape = 's32[1]{0}', space=sflag, size = 0x4, scoped, tag = 'scoped memory for tpu_custom_call.1']
    #allocation11 [shape = 'u8[4096]{0}', space=vmem, size = 0x1000, scoped, tag = 'output window, operand 2, single buffered']
    %13 = vsyncpa [#allocation4], 0
    %14 = vsyncpa [#allocation7], 0
    %15 = vsyncpa [#allocation5], 0
    %16 = vsyncpa [#allocation10], 0
    // Predicated region
    $region2: #{tpu_custom_call.1} parent=1 // pred_check
      _
    $region3: #{tpu_custom_call.1} parent=1 // pred_check_branch
      %18 = sbr.rel (0) target = $region5
    $region4: #{tpu_custom_call.1} parent=1 // pred_region
      _
    $region5: #{tpu_custom_call.1} parent=1 // pred_fallthru
      _
    // Predicated region
    $region6: #{tpu_custom_call.1} parent=1 // pred_check
      _
    $region7: #{tpu_custom_call.1} parent=1 // pred_check_branch
      %20 = sbr.rel (0) target = $region9
    $region8: #{tpu_custom_call.1} parent=1 // pred_region
      _
    $region9: #{tpu_custom_call.1} parent=1 // pred_fallthru
      _
    // Predicated region
    $region10: #{tpu_custom_call.1} parent=1 // pred_check
      _
    $region11: #{tpu_custom_call.1} parent=1 // pred_check_branch
      %22 = sbr.rel (0) target = $region13
    $region12: #{tpu_custom_call.1} parent=1 // pred_region
      %s24 = ssub.s32 2048, 2048
      %25 = vsyncadd [#allocation4], %s24
      %s26 = sshll.u32 [#allocation3], 4
      %s27 = int_to_ptr.vmem [resolvable:$true] %s26
      %32 = dma.hbm_to_vmem [thread:$0]  %s2, 2048, %s27, [#allocation4], 128, 128, 8
    $region13: #{tpu_custom_call.1} parent=1 // pred_fallthru
      _
    // Predicated region
    $region14: #{tpu_custom_call.1} parent=1 // pred_check
      _
    $region15: #{tpu_custom_call.1} parent=1 // pred_check_branch
      %34 = sbr.rel (0) target = $region17
    $region16: #{tpu_custom_call.1} parent=1 // pred_region
      %s36 = ssub.s32 2048, 2048
      %37 = vsyncadd [#allocation7], %s36
      %s38 = sshll.u32 [#allocation6], 4
      %s39 = int_to_ptr.vmem [resolvable:$true] %s38
      %44 = dma.hbm_to_vmem [thread:$0]  %s3, 2048, %s39, [#allocation7], 128, 128, 8
    $region17: #{tpu_custom_call.1} parent=1 // pred_fallthru
      _
    // Predicated region
    $region18: #{tpu_custom_call.1} parent=1 // pred_check
      _
    $region19: #{tpu_custom_call.1} parent=1 // pred_check_branch
      %46 = sbr.rel (0) target = $region21
    $region20: #{tpu_custom_call.1} parent=1 // pred_region
      _
    $region21: #{tpu_custom_call.1} parent=1 // pred_fallthru
      _
    // Predicated region
    $region22: #{tpu_custom_call.1} parent=1 // pred_check
      _
    $region23: #{tpu_custom_call.1} parent=1 // pred_check_branch
      %48 = sbr.rel (0) target = $region25
    $region24: #{tpu_custom_call.1} parent=1 // pred_region
      %49 = dma.done [#allocation4], 2048
    $region25: #{tpu_custom_call.1} parent=1 // pred_fallthru
      _
    // Predicated region
    $region26: #{tpu_custom_call.1} parent=1 // pred_check
      _
    $region27: #{tpu_custom_call.1} parent=1 // pred_check_branch
      %51 = sbr.rel (0) target = $region29
    $region28: #{tpu_custom_call.1} parent=1 // pred_region
      %52 = dma.done [#allocation7], 2048
    $region29: #{tpu_custom_call.1} parent=1 // pred_fallthru
      _
    %v53 = vld [vmem:[%s0] sm:$0xff]
    %v54 = vld [vmem:[%s0 + $0x8] sm:$0xff]
    %v55 = vlaneseq
    %v56 = vand.u32 %v55, 127
    %57 = vset.pattern.permute.xlu0 0
    %58 = vperm.xlu0 %57, %v53
    %v59 = vpop.permute.xlu0 %58
    %60 = vset.pattern.permute.xlu0 0
    %61 = vperm.xlu0 %60, %v54
    %v62 = vpop.permute.xlu0 %61
    %vm63 = vcmp.eq.s32.totalorder %v56, %v59
    %vm64 = vcmp.eq.s32.totalorder %v56, %v62
    %v65 = vsel %vm63, 1, 0
    %v66 = vsel %vm64, 1, 0
    %v67 = vcvt.s32.f32 %v65
    %v68 = vcvt.s32.f32 %v66
    %v69 = vld [vmem:[%s1] sm:$0xff]
    %v70 = vld [vmem:[%s1 + $0x8] sm:$0xff]
    %v71 = vld [vmem:[%s1 + $0x10] sm:$0xf]
    %v72 = vld [vmem:[%s4] sm:$0x1]
    %v73 = vlaneseq
    %v74 = vshrl.u32 %v73, 7
    %v75 = vsub.s32 0, %v74
    %v76 = vrot.slane %v72, %v75
    %vm77 = vcmask 162816
    %v79 = vsel %vm77, %v67, 0
    %v82 = vsel %vm77, %v68, 0
    %vm84 = vcmask 1043456
    %v86 = vsel %vm84, %v71, 0
    %88 = vmatprep.subr.mxu0 0.0
    %89 = vmatpush1.msra.mxu0 %v69
    %90 = vmatprep.subr.mxu0 0.0
    %91 = vmatpush1.msra.mxu0 %v70
    %92 = vmatprep.subr.mxu0 0.0
    %93 = vmatpush1.msra.mxu0 %v86
    %94 = vmatprep.subr.mxu0 0.0
    %95 = vmatpush1.msra.mxu0 0.0
    %96 = vmatprep.subr.mxu0 0.0
    %97 = vmatpush1.msra.mxu0 0.0
    %98 = vmatprep.subr.mxu0 0.0
    %99 = vmatpush1.msra.mxu0 0.0
    %100 = vmatprep.subr.mxu0 0.0
    %101 = vmatpush1.msra.mxu0 0.0
    %102 = vmatprep.subr.mxu0 0.0
    %103 = vmatpush1.msra.mxu0 0.0
    %104 = vmatprep.subr.mxu0 0.0
    %105 = vmatpush1.msra.mxu0 0.0
    %106 = vmatprep.subr.mxu0 0.0
    %107 = vmatpush1.msra.mxu0 0.0
    %108 = vmatprep.subr.mxu0 0.0
    %109 = vmatpush1.msra.mxu0 0.0
    %110 = vmatprep.subr.mxu0 0.0
    %111 = vmatpush1.msra.mxu0 0.0
    %112 = vmatprep.subr.mxu0 0.0
    %113 = vmatpush1.msra.mxu0 0.0
    %114 = vmatprep.subr.mxu0 0.0
    %115 = vmatpush1.msra.mxu0 0.0
    %116 = vmatprep.subr.mxu0 0.0
    %117 = vmatpush1.msra.mxu0 0.0
    %118 = vmatprep.subr.mxu0 0.0
    %119 = vmatpush1.msra.mxu0 0.0
    %120 = vmatprep.subr.mxu0 0.0
    %121 = vmatpush1.msra.mxu0 0.0
    %122 = vmatprep.subr.mxu0 0.0
    %123 = vmatpush1.msra.mxu0 0.0
    %124 = vmatprep.subr.mxu0 0.0
    %125 = vmatpush1.msra.mxu0 0.0
    %126 = vmatprep.subr.mxu0 0.0
    %127 = vmatpush1.msra.mxu0 0.0
    %128 = vmatprep.subr.mxu0 0.0
    %129 = vmatpush1.msra.mxu0 0.0
    %130 = vmatprep.subr.mxu0 0.0
    %131 = vmatpush1.msra.mxu0 0.0
    %132 = vmatprep.subr.mxu0 0.0
    %133 = vmatpush1.msra.mxu0 0.0
    %134 = vmatprep.subr.mxu0 0.0
    %135 = vmatpush1.msra.mxu0 0.0
    %136 = vmatprep.subr.mxu0 0.0
    %137 = vmatpush1.msra.mxu0 0.0
    %138 = vmatprep.subr.mxu0 0.0
    %139 = vmatpush1.msra.mxu0 0.0
    %140 = vmatprep.subr.mxu0 0.0
    %141 = vmatpush1.msra.mxu0 0.0
    %142 = vmatprep.subr.mxu0 0.0
    %143 = vmatpush1.msra.mxu0 0.0
    %144 = vmatprep.subr.mxu0 0.0
    %145 = vmatpush1.msra.mxu0 0.0
    %146 = vmatprep.subr.mxu0 0.0
    %147 = vmatpush1.msra.mxu0 0.0
    %148 = vmatprep.subr.mxu0 0.0
    %149 = vmatpush1.msra.mxu0 0.0
    %150 = vmatprep.subr.mxu0 0.0
    %151 = vmatpush1.msra.mxu0 0.0
    %152 = vmatprep.mubr.f32.mxu0 0.0
    %153 = vmatmul.mubr.f32.gmra.mrb[0].mxu0 %v79
    %v154 = vpop.f32.mrb[0].mxu0
    %v155 = vadd.f32 %v76, %v154
    %v156 = vpop.f32.mrb[0].mxu0
    %157 = vmatprep.mubr.f32.mxu0 0.0
    %158 = vmatmul.mubr.f32.gmra.mrb[0].mxu0 %v82
    %v159 = vpop.f32.mrb[0].mxu0
    %v160 = vadd.f32 %v76, %v159
    %v161 = vpop.f32.mrb[0].mxu0
    %162 = vdwg.mxu0
    %s163 = scalar_lea.vmem %s1, 24
    %v164 = vld [vmem:[%s163] sm:$0xff]
    %v165 = vld [vmem:[%s163 + $0x8] sm:$0xff]
    %v166 = vld [vmem:[%s163 + $0x10] sm:$0xf]
    %v167 = vld [vmem:[%s4 + $0x1] sm:$0x1]
    %v168 = vlaneseq
    %v169 = vshrl.u32 %v168, 7
    %v170 = vsub.s32 0, %v169
    %v171 = vrot.slane %v167, %v170
    %v173 = vsel %vm84, %v166, 0
    %175 = vmatprep.subr.mxu0 0.0
    %176 = vmatpush1.msra.mxu0 %v164
    %177 = vmatprep.subr.mxu0 0.0
    %178 = vmatpush1.msra.mxu0 %v165
    %179 = vmatprep.subr.mxu0 0.0
    %180 = vmatpush1.msra.mxu0 %v173
    %181 = vmatprep.subr.mxu0 0.0
    %182 = vmatpush1.msra.mxu0 0.0
    %183 = vmatprep.subr.mxu0 0.0
    %184 = vmatpush1.msra.mxu0 0.0
    %185 = vmatprep.subr.mxu0 0.0
    %186 = vmatpush1.msra.mxu0 0.0
    %187 = vmatprep.subr.mxu0 0.0
    %188 = vmatpush1.msra.mxu0 0.0
    %189 = vmatprep.subr.mxu0 0.0
    %190 = vmatpush1.msra.mxu0 0.0
    %191 = vmatprep.subr.mxu0 0.0
    %192 = vmatpush1.msra.mxu0 0.0
    %193 = vmatprep.subr.mxu0 0.0
    %194 = vmatpush1.msra.mxu0 0.0
    %195 = vmatprep.subr.mxu0 0.0
    %196 = vmatpush1.msra.mxu0 0.0
    %197 = vmatprep.subr.mxu0 0.0
    %198 = vmatpush1.msra.mxu0 0.0
    %199 = vmatprep.subr.mxu0 0.0
    %200 = vmatpush1.msra.mxu0 0.0
    %201 = vmatprep.subr.mxu0 0.0
    %202 = vmatpush1.msra.mxu0 0.0
    %203 = vmatprep.subr.mxu0 0.0
    %204 = vmatpush1.msra.mxu0 0.0
    %205 = vmatprep.subr.mxu0 0.0
    %206 = vmatpush1.msra.mxu0 0.0
    %207 = vmatprep.subr.mxu0 0.0
    %208 = vmatpush1.msra.mxu0 0.0
    %209 = vmatprep.subr.mxu0 0.0
    %210 = vmatpush1.msra.mxu0 0.0
    %211 = vmatprep.subr.mxu0 0.0
    %212 = vmatpush1.msra.mxu0 0.0
    %213 = vmatprep.subr.mxu0 0.0
    %214 = vmatpush1.msra.mxu0 0.0
    %215 = vmatprep.subr.mxu0 0.0
    %216 = vmatpush1.msra.mxu0 0.0
    %217 = vmatprep.subr.mxu0 0.0
    %218 = vmatpush1.msra.mxu0 0.0
    %219 = vmatprep.subr.mxu0 0.0
    %220 = vmatpush1.msra.mxu0 0.0
    %221 = vmatprep.subr.mxu0 0.0
    %222 = vmatpush1.msra.mxu0 0.0
    %223 = vmatprep.subr.mxu0 0.0
    %224 = vmatpush1.msra.mxu0 0.0
    %225 = vmatprep.subr.mxu0 0.0
    %226 = vmatpush1.msra.mxu0 0.0
    %227 = vmatprep.subr.mxu0 0.0
    %228 = vmatpush1.msra.mxu0 0.0
    %229 = vmatprep.subr.mxu0 0.0
    %230 = vmatpush1.msra.mxu0 0.0
    %231 = vmatprep.subr.mxu0 0.0
    %232 = vmatpush1.msra.mxu0 0.0
    %233 = vmatprep.subr.mxu0 0.0
    %234 = vmatpush1.msra.mxu0 0.0
    %235 = vmatprep.subr.mxu0 0.0
    %236 = vmatpush1.msra.mxu0 0.0
    %237 = vmatprep.subr.mxu0 0.0
    %238 = vmatpush1.msra.mxu0 0.0
    %239 = vmatprep.mubr.f32.mxu0 0.0
    %240 = vmatmul.mubr.f32.gmra.mrb[0].mxu0 %v79
    %v241 = vpop.f32.mrb[0].mxu0
    %v242 = vadd.f32 %v171, %v241
    %v243 = vpop.f32.mrb[0].mxu0
    %244 = vmatprep.mubr.f32.mxu0 0.0
    %245 = vmatmul.mubr.f32.gmra.mrb[0].mxu0 %v82
    %v246 = vpop.f32.mrb[0].mxu0
    %v247 = vadd.f32 %v171, %v246
    %v248 = vpop.f32.mrb[0].mxu0
    %249 = vdwg.mxu0
    %v250 = vld [vmem:[#allocation6] sm:$0xff]
    %v251 = vld [vmem:[#allocation6 + $0x8] sm:$0xff]
    %v252 = vld [vmem:[#allocation6 + $0x10] sm:$0xff]
    %v253 = vld [vmem:[#allocation6 + $0x18] sm:$0xff]
    %s254 = scalar_lea.vmem [#allocation6], 32
    %v255 = vld [vmem:[%s254] sm:$0xff]
    %v256 = vld [vmem:[%s254 + $0x8] sm:$0xff]
    %v257 = vld [vmem:[%s254 + $0x10] sm:$0xff]
    %v258 = vld [vmem:[%s254 + $0x18] sm:$0xff]
    %vm259 = vcmask 261120
    %v261 = vsel %vm259, 0.0, 0
    %263 = vmatprep.subr.mxu0 0.0
    %264 = vmatpush1.msra.mxu0 %v250
    %265 = vmatprep.subr.mxu0 0.0
    %266 = vmatpush1.msra.mxu0 %v251
    %267 = vmatprep.subr.mxu0 0.0
    %268 = vmatpush1.msra.mxu0 %v252
    %269 = vmatprep.subr.mxu0 0.0
    %270 = vmatpush1.msra.mxu0 %v253
    %271 = vmatprep.subr.mxu0 0.0
    %272 = vmatpush1.msra.mxu0 0.0
    %273 = vmatprep.subr.mxu0 0.0
    %274 = vmatpush1.msra.mxu0 0.0
    %275 = vmatprep.subr.mxu0 0.0
    %276 = vmatpush1.msra.mxu0 0.0
    %277 = vmatprep.subr.mxu0 0.0
    %278 = vmatpush1.msra.mxu0 0.0
    %279 = vmatprep.subr.mxu0 0.0
    %280 = vmatpush1.msra.mxu0 0.0
    %281 = vmatprep.subr.mxu0 0.0
    %282 = vmatpush1.msra.mxu0 0.0
    %283 = vmatprep.subr.mxu0 0.0
    %284 = vmatpush1.msra.mxu0 0.0
    %285 = vmatprep.subr.mxu0 0.0
    %286 = vmatpush1.msra.mxu0 0.0
    %287 = vmatprep.subr.mxu0 0.0
    %288 = vmatpush1.msra.mxu0 0.0
    %289 = vmatprep.subr.mxu0 0.0
    %290 = vmatpush1.msra.mxu0 0.0
    %291 = vmatprep.subr.mxu0 0.0
    %292 = vmatpush1.msra.mxu0 0.0
    %293 = vmatprep.subr.mxu0 0.0
    %294 = vmatpush1.msra.mxu0 0.0
    %295 = vmatprep.subr.mxu0 0.0
    %296 = vmatpush1.msra.mxu0 0.0
    %297 = vmatprep.subr.mxu0 0.0
    %298 = vmatpush1.msra.mxu0 0.0
    %299 = vmatprep.subr.mxu0 0.0
    %300 = vmatpush1.msra.mxu0 0.0
    %301 = vmatprep.subr.mxu0 0.0
    %302 = vmatpush1.msra.mxu0 0.0
    %303 = vmatprep.subr.mxu0 0.0
    %304 = vmatpush1.msra.mxu0 0.0
    %305 = vmatprep.subr.mxu0 0.0
    %306 = vmatpush1.msra.mxu0 0.0
    %307 = vmatprep.subr.mxu0 0.0
    %308 = vmatpush1.msra.mxu0 0.0
    %309 = vmatprep.subr.mxu0 0.0
    %310 = vmatpush1.msra.mxu0 0.0
    %311 = vmatprep.subr.mxu0 0.0
    %312 = vmatpush1.msra.mxu0 0.0
    %313 = vmatprep.subr.mxu0 0.0
    %314 = vmatpush1.msra.mxu0 0.0
    %315 = vmatprep.subr.mxu0 0.0
    %316 = vmatpush1.msra.mxu0 0.0
    %317 = vmatprep.subr.mxu0 0.0
    %318 = vmatpush1.msra.mxu0 0.0
    %319 = vmatprep.subr.mxu0 0.0
    %320 = vmatpush1.msra.mxu0 0.0
    %321 = vmatprep.subr.mxu0 0.0
    %322 = vmatpush1.msra.mxu0 0.0
    %323 = vmatprep.subr.mxu0 0.0
    %324 = vmatpush1.msra.mxu0 0.0
    %325 = vmatprep.subr.mxu0 0.0
    %326 = vmatpush1.msra.mxu0 0.0
    %327 = vmatprep.mubr.f32.mxu0 0.0
    %328 = vmatmul.mubr.f32.gmra.mrb[0].mxu0 %v261
    %v329 = vpop.f32.mrb[0].mxu0
    %v330 = vadd.f32 0.0, %v329
    %v331 = vpop.f32.mrb[0].mxu0
    %332 = vdwg.mxu0
    %v333 = vadd.f32 %v155, %v330
    %334 = vmatprep.subr.mxu0 0.0
    %335 = vmatpush1.msra.mxu0 %v255
    %336 = vmatprep.subr.mxu0 0.0
    %337 = vmatpush1.msra.mxu0 %v256
    %338 = vmatprep.subr.mxu0 0.0
    %339 = vmatpush1.msra.mxu0 %v257
    %340 = vmatprep.subr.mxu0 0.0
    %341 = vmatpush1.msra.mxu0 %v258
    %342 = vmatprep.subr.mxu0 0.0
    %343 = vmatpush1.msra.mxu0 0.0
    %344 = vmatprep.subr.mxu0 0.0
    %345 = vmatpush1.msra.mxu0 0.0
    %346 = vmatprep.subr.mxu0 0.0
    %347 = vmatpush1.msra.mxu0 0.0
    %348 = vmatprep.subr.mxu0 0.0
    %349 = vmatpush1.msra.mxu0 0.0
    %350 = vmatprep.subr.mxu0 0.0
    %351 = vmatpush1.msra.mxu0 0.0
    %352 = vmatprep.subr.mxu0 0.0
    %353 = vmatpush1.msra.mxu0 0.0
    %354 = vmatprep.subr.mxu0 0.0
    %355 = vmatpush1.msra.mxu0 0.0
    %356 = vmatprep.subr.mxu0 0.0
    %357 = vmatpush1.msra.mxu0 0.0
    %358 = vmatprep.subr.mxu0 0.0
    %359 = vmatpush1.msra.mxu0 0.0
    %360 = vmatprep.subr.mxu0 0.0
    %361 = vmatpush1.msra.mxu0 0.0
    %362 = vmatprep.subr.mxu0 0.0
    %363 = vmatpush1.msra.mxu0 0.0
    %364 = vmatprep.subr.mxu0 0.0
    %365 = vmatpush1.msra.mxu0 0.0
    %366 = vmatprep.subr.mxu0 0.0
    %367 = vmatpush1.msra.mxu0 0.0
    %368 = vmatprep.subr.mxu0 0.0
    %369 = vmatpush1.msra.mxu0 0.0
    %370 = vmatprep.subr.mxu0 0.0
    %371 = vmatpush1.msra.mxu0 0.0
    %372 = vmatprep.subr.mxu0 0.0
    %373 = vmatpush1.msra.mxu0 0.0
    %374 = vmatprep.subr.mxu0 0.0
    %375 = vmatpush1.msra.mxu0 0.0
    %376 = vmatprep.subr.mxu0 0.0
    %377 = vmatpush1.msra.mxu0 0.0
    %378 = vmatprep.subr.mxu0 0.0
    %379 = vmatpush1.msra.mxu0 0.0
    %380 = vmatprep.subr.mxu0 0.0
    %381 = vmatpush1.msra.mxu0 0.0
    %382 = vmatprep.subr.mxu0 0.0
    %383 = vmatpush1.msra.mxu0 0.0
    %384 = vmatprep.subr.mxu0 0.0
    %385 = vmatpush1.msra.mxu0 0.0
    %386 = vmatprep.subr.mxu0 0.0
    %387 = vmatpush1.msra.mxu0 0.0
    %388 = vmatprep.subr.mxu0 0.0
    %389 = vmatpush1.msra.mxu0 0.0
    %390 = vmatprep.subr.mxu0 0.0
    %391 = vmatpush1.msra.mxu0 0.0
    %392 = vmatprep.subr.mxu0 0.0
    %393 = vmatpush1.msra.mxu0 0.0
    %394 = vmatprep.subr.mxu0 0.0
    %395 = vmatpush1.msra.mxu0 0.0
    %396 = vmatprep.subr.mxu0 0.0
    %397 = vmatpush1.msra.mxu0 0.0
    %398 = vmatprep.mubr.f32.mxu0 0.0
    %399 = vmatmul.mubr.f32.gmra.mrb[0].mxu0 %v261
    %v400 = vpop.f32.mrb[0].mxu0
    %v401 = vadd.f32 0.0, %v400
    %v402 = vpop.f32.mrb[0].mxu0
    %403 = vdwg.mxu0
    %v405 = vrot.slane %v401, 2
    %v407 = vadd.f32 %v247, %v405
    %v408 = vxor.u32 %v333, 2147483648
    %v409 = vmul.f32 %v408, 1.442695
    %v410 = vpow.pop %v409
    %v411 = vadd.f32 %v410, 1.0
    %v412 = vrcp.pop %v411
    %v413 = vmul.f32 1.0, %v412
    %v414 = vtanh.pop %v333
    %v415 = vmul.f32 %v413, 0.0
    %417 = vrot.lane.b32.xlu0 %v414, 64
    %v418 = vpop.permute.xlu0 %417
    %v420 = vmul.f32 %v413, %v418
    %422 = vrot.lane.b32.xlu0 %v420, 32
    %v423 = vpop.permute.xlu0 %422
    %v425 = vadd.f32 %v415, %v423
    %v426 = vtanh.pop %v425
    %428 = vrot.lane.b32.xlu0 %v426, 64
    %v429 = vpop.permute.xlu0 %428
    %v431 = vmul.f32 %v413, %v429
    %v432 = vxor.u32 %v407, 2147483648
    %v433 = vmul.f32 %v432, 1.442695
    %v434 = vpow.pop %v433
    %v435 = vadd.f32 %v434, 1.0
    %v436 = vrcp.pop %v435
    %v437 = vmul.f32 1.0, %v436
    %v438 = vtanh.pop %v407
    %v439 = vmul.f32 %v437, 0.0
    %441 = vrot.lane.b32.xlu0 %v438, 64
    %v442 = vpop.permute.xlu0 %441
    %v444 = vmul.f32 %v437, %v442
    %446 = vrot.lane.b32.xlu0 %v444, 32
    %v447 = vpop.permute.xlu0 %446
    %v449 = vadd.f32 %v439, %v447
    %v450 = vtanh.pop %v449
    %452 = vrot.lane.b32.xlu0 %v450, 64
    %v453 = vpop.permute.xlu0 %452
    %v455 = vmul.f32 %v437, %v453
    %457 = vrot.lane.b32.xlu0 %v431, 32
    %v458 = vpop.permute.xlu0 %457
    %vm460 = vcmask 254976
    %461 = vst.msk [vmem:[#allocation2] sm:$0x3] %vm460, %v458
    %463 = vrot.lane.b32.xlu0 %v455, 64
    %v464 = vpop.permute.xlu0 %463
    %vm466 = vcmask 523526
    %467 = vst.msk [vmem:[#allocation2 + $0x8] sm:$0xc0] %vm466, %v464
    %v468 = vsel %vm259, %v458, 0
    %470 = vmatprep.subr.mxu0 0.0
    %471 = vmatpush1.msra.mxu0 %v250
    %472 = vmatprep.subr.mxu0 0.0
    %473 = vmatpush1.msra.mxu0 %v251
    %474 = vmatprep.subr.mxu0 0.0
    %475 = vmatpush1.msra.mxu0 %v252
    %476 = vmatprep.subr.mxu0 0.0
    %477 = vmatpush1.msra.mxu0 %v253
    %478 = vmatprep.subr.mxu0 0.0
    %479 = vmatpush1.msra.mxu0 0.0
    %480 = vmatprep.subr.mxu0 0.0
    %481 = vmatpush1.msra.mxu0 0.0
    %482 = vmatprep.subr.mxu0 0.0
    %483 = vmatpush1.msra.mxu0 0.0
    %484 = vmatprep.subr.mxu0 0.0
    %485 = vmatpush1.msra.mxu0 0.0
    %486 = vmatprep.subr.mxu0 0.0
    %487 = vmatpush1.msra.mxu0 0.0
    %488 = vmatprep.subr.mxu0 0.0
    %489 = vmatpush1.msra.mxu0 0.0
    %490 = vmatprep.subr.mxu0 0.0
    %491 = vmatpush1.msra.mxu0 0.0
    %492 = vmatprep.subr.mxu0 0.0
    %493 = vmatpush1.msra.mxu0 0.0
    %494 = vmatprep.subr.mxu0 0.0
    %495 = vmatpush1.msra.mxu0 0.0
    %496 = vmatprep.subr.mxu0 0.0
    %497 = vmatpush1.msra.mxu0 0.0
    %498 = vmatprep.subr.mxu0 0.0
    %499 = vmatpush1.msra.mxu0 0.0
    %500 = vmatprep.subr.mxu0 0.0
    %501 = vmatpush1.msra.mxu0 0.0
    %502 = vmatprep.subr.mxu0 0.0
    %503 = vmatpush1.msra.mxu0 0.0
    %504 = vmatprep.subr.mxu0 0.0
    %505 = vmatpush1.msra.mxu0 0.0
    %506 = vmatprep.subr.mxu0 0.0
    %507 = vmatpush1.msra.mxu0 0.0
    %508 = vmatprep.subr.mxu0 0.0
    %509 = vmatpush1.msra.mxu0 0.0
    %510 = vmatprep.subr.mxu0 0.0
    %511 = vmatpush1.msra.mxu0 0.0
    %512 = vmatprep.subr.mxu0 0.0
    %513 = vmatpush1.msra.mxu0 0.0
    %514 = vmatprep.subr.mxu0 0.0
    %515 = vmatpush1.msra.mxu0 0.0
    %516 = vmatprep.subr.mxu0 0.0
    %517 = vmatpush1.msra.mxu0 0.0
    %518 = vmatprep.subr.mxu0 0.0
    %519 = vmatpush1.msra.mxu0 0.0
    %520 = vmatprep.subr.mxu0 0.0
    %521 = vmatpush1.msra.mxu0 0.0
    %522 = vmatprep.subr.mxu0 0.0
    %523 = vmatpush1.msra.mxu0 0.0
    %524 = vmatprep.subr.mxu0 0.0
    %525 = vmatpush1.msra.mxu0 0.0
    %526 = vmatprep.subr.mxu0 0.0
    %527 = vmatpush1.msra.mxu0 0.0
    %528 = vmatprep.subr.mxu0 0.0
    %529 = vmatpush1.msra.mxu0 0.0
    %530 = vmatprep.subr.mxu0 0.0
    %531 = vmatpush1.msra.mxu0 0.0
    %532 = vmatprep.subr.mxu0 0.0
    %533 = vmatpush1.msra.mxu0 0.0
    %534 = vmatprep.mubr.f32.mxu0 0.0
    %535 = vmatmul.mubr.f32.gmra.mrb[0].mxu0 %v468
    %v536 = vpop.f32.mrb[0].mxu0
    %v537 = vadd.f32 0.0, %v536
    %v538 = vpop.f32.mrb[0].mxu0
    %539 = vdwg.mxu0
    %v541 = vrot.slane %v537, 6
    %v543 = vadd.f32 %v155, %v541
    %v544 = vrot.slane %v455, 6
    %545 = vrot.lane.b32.xlu0 %v544, 32
    %v546 = vpop.permute.xlu0 %545
    %v547 = vsel %vm259, %v546, 0
    %549 = vmatprep.subr.mxu0 0.0
    %550 = vmatpush1.msra.mxu0 %v255
    %551 = vmatprep.subr.mxu0 0.0
    %552 = vmatpush1.msra.mxu0 %v256
    %553 = vmatprep.subr.mxu0 0.0
    %554 = vmatpush1.msra.mxu0 %v257
    %555 = vmatprep.subr.mxu0 0.0
    %556 = vmatpush1.msra.mxu0 %v258
    %557 = vmatprep.subr.mxu0 0.0
    %558 = vmatpush1.msra.mxu0 0.0
    %559 = vmatprep.subr.mxu0 0.0
    %560 = vmatpush1.msra.mxu0 0.0
    %561 = vmatprep.subr.mxu0 0.0
    %562 = vmatpush1.msra.mxu0 0.0
    %563 = vmatprep.subr.mxu0 0.0
    %564 = vmatpush1.msra.mxu0 0.0
    %565 = vmatprep.subr.mxu0 0.0
    %566 = vmatpush1.msra.mxu0 0.0
    %567 = vmatprep.subr.mxu0 0.0
    %568 = vmatpush1.msra.mxu0 0.0
    %569 = vmatprep.subr.mxu0 0.0
    %570 = vmatpush1.msra.mxu0 0.0
    %571 = vmatprep.subr.mxu0 0.0
    %572 = vmatpush1.msra.mxu0 0.0
    %573 = vmatprep.subr.mxu0 0.0
    %574 = vmatpush1.msra.mxu0 0.0
    %575 = vmatprep.subr.mxu0 0.0
    %576 = vmatpush1.msra.mxu0 0.0
    %577 = vmatprep.subr.mxu0 0.0
    %578 = vmatpush1.msra.mxu0 0.0
    %579 = vmatprep.subr.mxu0 0.0
    %580 = vmatpush1.msra.mxu0 0.0
    %581 = vmatprep.subr.mxu0 0.0
    %582 = vmatpush1.msra.mxu0 0.0
    %583 = vmatprep.subr.mxu0 0.0
    %584 = vmatpush1.msra.mxu0 0.0
    %585 = vmatprep.subr.mxu0 0.0
    %586 = vmatpush1.msra.mxu0 0.0
    %587 = vmatprep.subr.mxu0 0.0
    %588 = vmatpush1.msra.mxu0 0.0
    %589 = vmatprep.subr.mxu0 0.0
    %590 = vmatpush1.msra.mxu0 0.0
    %591 = vmatprep.subr.mxu0 0.0
    %592 = vmatpush1.msra.mxu0 0.0
    %593 = vmatprep.subr.mxu0 0.0
    %594 = vmatpush1.msra.mxu0 0.0
    %595 = vmatprep.subr.mxu0 0.0
    %596 = vmatpush1.msra.mxu0 0.0
    %597 = vmatprep.subr.mxu0 0.0
    %598 = vmatpush1.msra.mxu0 0.0
    %599 = vmatprep.subr.mxu0 0.0
    %600 = vmatpush1.msra.mxu0 0.0
    %601 = vmatprep.subr.mxu0 0.0
    %602 = vmatpush1.msra.mxu0 0.0
    %603 = vmatprep.subr.mxu0 0.0
    %604 = vmatpush1.msra.mxu0 0.0
    %605 = vmatprep.subr.mxu0 0.0
    %606 = vmatpush1.msra.mxu0 0.0
    %607 = vmatprep.subr.mxu0 0.0
    %608 = vmatpush1.msra.mxu0 0.0
    %609 = vmatprep.subr.mxu0 0.0
    %610 = vmatpush1.msra.mxu0 0.0
    %611 = vmatprep.subr.mxu0 0.0
    %612 = vmatpush1.msra.mxu0 0.0
    %613 = vmatprep.mubr.f32.mxu0 0.0
    %614 = vmatmul.mubr.f32.gmra.mrb[0].mxu0 %v547
    %v615 = vpop.f32.mrb[0].mxu0
    %v616 = vadd.f32 0.0, %v615
    %v617 = vpop.f32.mrb[0].mxu0
    %618 = vdwg.mxu0
    %v620 = vrot.slane %v616, 4
    %v622 = vadd.f32 %v247, %v620
    %v623 = vxor.u32 %v543, 2147483648
    %v624 = vmul.f32 %v623, 1.442695
    %v625 = vpow.pop %v624
    %v626 = vadd.f32 %v625, 1.0
    %v627 = vrcp.pop %v626
    %v628 = vmul.f32 1.0, %v627
    %v629 = vtanh.pop %v543
    %v631 = vrot.slane %v425, 6
    %v633 = vmul.f32 %v628, %v631
    %635 = vrot.lane.b32.xlu0 %v629, 64
    %v636 = vpop.permute.xlu0 %635
    %v638 = vmul.f32 %v628, %v636
    %640 = vrot.lane.b32.xlu0 %v638, 32
    %v641 = vpop.permute.xlu0 %640
    %v643 = vadd.f32 %v633, %v641
    %v644 = vtanh.pop %v643
    %646 = vrot.lane.b32.xlu0 %v644, 64
    %v647 = vpop.permute.xlu0 %646
    %v649 = vmul.f32 %v628, %v647
    %v650 = vxor.u32 %v622, 2147483648
    %v651 = vmul.f32 %v650, 1.442695
    %v652 = vpow.pop %v651
    %v653 = vadd.f32 %v652, 1.0
    %v654 = vrcp.pop %v653
    %v655 = vmul.f32 1.0, %v654
    %v656 = vtanh.pop %v622
    %v658 = vrot.slane %v449, 2
    %v660 = vmul.f32 %v655, %v658
    %662 = vrot.lane.b32.xlu0 %v656, 64
    %v663 = vpop.permute.xlu0 %662
    %v665 = vmul.f32 %v655, %v663
    %667 = vrot.lane.b32.xlu0 %v665, 32
    %v668 = vpop.permute.xlu0 %667
    %v670 = vadd.f32 %v660, %v668
    %v671 = vtanh.pop %v670
    %673 = vrot.lane.b32.xlu0 %v671, 64
    %v674 = vpop.permute.xlu0 %673
    %v676 = vmul.f32 %v655, %v674
    %678 = vrot.lane.b32.xlu0 %v649, 32
    %v679 = vpop.permute.xlu0 %678
    %vm681 = vcmask 257026
    %682 = vst.msk [vmem:[#allocation2] sm:$0xc] %vm681, %v679
    %684 = vrot.lane.b32.xlu0 %v676, 64
    %v685 = vpop.permute.xlu0 %684
    %vm687 = vcmask 521476
    %688 = vst.msk [vmem:[#allocation2 + $0x8] sm:$0x30] %vm687, %v685
    %v689 = vrot.slane %v649, 2
    %690 = vrot.lane.b32.xlu0 %v689, 32
    %v691 = vpop.permute.xlu0 %690
    %v692 = vsel %vm259, %v691, 0
    %694 = vmatprep.subr.mxu0 0.0
    %695 = vmatpush1.msra.mxu0 %v250
    %696 = vmatprep.subr.mxu0 0.0
    %697 = vmatpush1.msra.mxu0 %v251
    %698 = vmatprep.subr.mxu0 0.0
    %699 = vmatpush1.msra.mxu0 %v252
    %700 = vmatprep.subr.mxu0 0.0
    %701 = vmatpush1.msra.mxu0 %v253
    %702 = vmatprep.subr.mxu0 0.0
    %703 = vmatpush1.msra.mxu0 0.0
    %704 = vmatprep.subr.mxu0 0.0
    %705 = vmatpush1.msra.mxu0 0.0
    %706 = vmatprep.subr.mxu0 0.0
    %707 = vmatpush1.msra.mxu0 0.0
    %708 = vmatprep.subr.mxu0 0.0
    %709 = vmatpush1.msra.mxu0 0.0
    %710 = vmatprep.subr.mxu0 0.0
    %711 = vmatpush1.msra.mxu0 0.0
    %712 = vmatprep.subr.mxu0 0.0
    %713 = vmatpush1.msra.mxu0 0.0
    %714 = vmatprep.subr.mxu0 0.0
    %715 = vmatpush1.msra.mxu0 0.0
    %716 = vmatprep.subr.mxu0 0.0
    %717 = vmatpush1.msra.mxu0 0.0
    %718 = vmatprep.subr.mxu0 0.0
    %719 = vmatpush1.msra.mxu0 0.0
    %720 = vmatprep.subr.mxu0 0.0
    %721 = vmatpush1.msra.mxu0 0.0
    %722 = vmatprep.subr.mxu0 0.0
    %723 = vmatpush1.msra.mxu0 0.0
    %724 = vmatprep.subr.mxu0 0.0
    %725 = vmatpush1.msra.mxu0 0.0
    %726 = vmatprep.subr.mxu0 0.0
    %727 = vmatpush1.msra.mxu0 0.0
    %728 = vmatprep.subr.mxu0 0.0
    %729 = vmatpush1.msra.mxu0 0.0
    %730 = vmatprep.subr.mxu0 0.0
    %731 = vmatpush1.msra.mxu0 0.0
    %732 = vmatprep.subr.mxu0 0.0
    %733 = vmatpush1.msra.mxu0 0.0
    %734 = vmatprep.subr.mxu0 0.0
    %735 = vmatpush1.msra.mxu0 0.0
    %736 = vmatprep.subr.mxu0 0.0
    %737 = vmatpush1.msra.mxu0 0.0
    %738 = vmatprep.subr.mxu0 0.0
    %739 = vmatpush1.msra.mxu0 0.0
    %740 = vmatprep.subr.mxu0 0.0
    %741 = vmatpush1.msra.mxu0 0.0
    %742 = vmatprep.subr.mxu0 0.0
    %743 = vmatpush1.msra.mxu0 0.0
    %744 = vmatprep.subr.mxu0 0.0
    %745 = vmatpush1.msra.mxu0 0.0
    %746 = vmatprep.subr.mxu0 0.0
    %747 = vmatpush1.msra.mxu0 0.0
    %748 = vmatprep.subr.mxu0 0.0
    %749 = vmatpush1.msra.mxu0 0.0
    %750 = vmatprep.subr.mxu0 0.0
    %751 = vmatpush1.msra.mxu0 0.0
    %752 = vmatprep.subr.mxu0 0.0
    %753 = vmatpush1.msra.mxu0 0.0
    %754 = vmatprep.subr.mxu0 0.0
    %755 = vmatpush1.msra.mxu0 0.0
    %756 = vmatprep.subr.mxu0 0.0
    %757 = vmatpush1.msra.mxu0 0.0
    %758 = vmatprep.mubr.f32.mxu0 0.0
    %759 = vmatmul.mubr.f32.gmra.mrb[0].mxu0 %v692
    %v760 = vpop.f32.mrb[0].mxu0
    %v761 = vadd.f32 0.0, %v760
    %v762 = vpop.f32.mrb[0].mxu0
    %763 = vdwg.mxu0
    %v765 = vrot.slane %v761, 4
    %v767 = vadd.f32 %v155, %v765
    %v768 = vrot.slane %v676, 4
    %769 = vrot.lane.b32.xlu0 %v768, 32
    %v770 = vpop.permute.xlu0 %769
    %v771 = vsel %vm259, %v770, 0
    %773 = vmatprep.subr.mxu0 0.0
    %774 = vmatpush1.msra.mxu0 %v255
    %775 = vmatprep.subr.mxu0 0.0
    %776 = vmatpush1.msra.mxu0 %v256
    %777 = vmatprep.subr.mxu0 0.0
    %778 = vmatpush1.msra.mxu0 %v257
    %779 = vmatprep.subr.mxu0 0.0
    %780 = vmatpush1.msra.mxu0 %v258
    %781 = vmatprep.subr.mxu0 0.0
    %782 = vmatpush1.msra.mxu0 0.0
    %783 = vmatprep.subr.mxu0 0.0
    %784 = vmatpush1.msra.mxu0 0.0
    %785 = vmatprep.subr.mxu0 0.0
    %786 = vmatpush1.msra.mxu0 0.0
    %787 = vmatprep.subr.mxu0 0.0
    %788 = vmatpush1.msra.mxu0 0.0
    %789 = vmatprep.subr.mxu0 0.0
    %790 = vmatpush1.msra.mxu0 0.0
    %791 = vmatprep.subr.mxu0 0.0
    %792 = vmatpush1.msra.mxu0 0.0
    %793 = vmatprep.subr.mxu0 0.0
    %794 = vmatpush1.msra.mxu0 0.0
    %795 = vmatprep.subr.mxu0 0.0
    %796 = vmatpush1.msra.mxu0 0.0
    %797 = vmatprep.subr.mxu0 0.0
    %798 = vmatpush1.msra.mxu0 0.0
    %799 = vmatprep.subr.mxu0 0.0
    %800 = vmatpush1.msra.mxu0 0.0
    %801 = vmatprep.subr.mxu0 0.0
    %802 = vmatpush1.msra.mxu0 0.0
    %803 = vmatprep.subr.mxu0 0.0
    %804 = vmatpush1.msra.mxu0 0.0
    %805 = vmatprep.subr.mxu0 0.0
    %806 = vmatpush1.msra.mxu0 0.0
    %807 = vmatprep.subr.mxu0 0.0
    %808 = vmatpush1.msra.mxu0 0.0
    %809 = vmatprep.subr.mxu0 0.0
    %810 = vmatpush1.msra.mxu0 0.0
    %811 = vmatprep.subr.mxu0 0.0
    %812 = vmatpush1.msra.mxu0 0.0
    %813 = vmatprep.subr.mxu0 0.0
    %814 = vmatpush1.msra.mxu0 0.0
    %815 = vmatprep.subr.mxu0 0.0
    %816 = vmatpush1.msra.mxu0 0.0
    %817 = vmatprep.subr.mxu0 0.0
    %818 = vmatpush1.msra.mxu0 0.0
    %819 = vmatprep.subr.mxu0 0.0
    %820 = vmatpush1.msra.mxu0 0.0
    %821 = vmatprep.subr.mxu0 0.0
    %822 = vmatpush1.msra.mxu0 0.0
    %823 = vmatprep.subr.mxu0 0.0
    %824 = vmatpush1.msra.mxu0 0.0
    %825 = vmatprep.subr.mxu0 0.0
    %826 = vmatpush1.msra.mxu0 0.0
    %827 = vmatprep.subr.mxu0 0.0
    %828 = vmatpush1.msra.mxu0 0.0
    %829 = vmatprep.subr.mxu0 0.0
    %830 = vmatpush1.msra.mxu0 0.0
    %831 = vmatprep.subr.mxu0 0.0
    %832 = vmatpush1.msra.mxu0 0.0
    %833 = vmatprep.subr.mxu0 0.0
    %834 = vmatpush1.msra.mxu0 0.0
    %835 = vmatprep.subr.mxu0 0.0
    %836 = vmatpush1.msra.mxu0 0.0
    %837 = vmatprep.mubr.f32.mxu0 0.0
    %838 = vmatmul.mubr.f32.gmra.mrb[0].mxu0 %v771
    %v839 = vpop.f32.mrb[0].mxu0
    %v840 = vadd.f32 0.0, %v839
    %v841 = vpop.f32.mrb[0].mxu0
    %842 = vdwg.mxu0
    %v844 = vrot.slane %v840, 6
    %v846 = vadd.f32 %v247, %v844
    %v847 = vxor.u32 %v767, 2147483648
    %v848 = vmul.f32 %v847, 1.442695
    %v849 = vpow.pop %v848
    %v850 = vadd.f32 %v849, 1.0
    %v851 = vrcp.pop %v850
    %v852 = vmul.f32 1.0, %v851
    %v853 = vtanh.pop %v767
    %v855 = vrot.slane %v643, 6
    %v857 = vmul.f32 %v852, %v855
    %859 = vrot.lane.b32.xlu0 %v853, 64
    %v860 = vpop.permute.xlu0 %859
    %v862 = vmul.f32 %v852, %v860
    %864 = vrot.lane.b32.xlu0 %v862, 32
    %v865 = vpop.permute.xlu0 %864
    %v867 = vadd.f32 %v857, %v865
    %v868 = vtanh.pop %v867
    %870 = vrot.lane.b32.xlu0 %v868, 64
    %v871 = vpop.permute.xlu0 %870
    %v873 = vmul.f32 %v852, %v871
    %v874 = vxor.u32 %v846, 2147483648
    %v875 = vmul.f32 %v874, 1.442695
    %v876 = vpow.pop %v875
    %v877 = vadd.f32 %v876, 1.0
    %v878 = vrcp.pop %v877
    %v879 = vmul.f32 1.0, %v878
    %v880 = vtanh.pop %v846
    %v882 = vrot.slane %v670, 2
    %v884 = vmul.f32 %v879, %v882
    %886 = vrot.lane.b32.xlu0 %v880, 64
    %v887 = vpop.permute.xlu0 %886
    %v889 = vmul.f32 %v879, %v887
    %891 = vrot.lane.b32.xlu0 %v889, 32
    %v892 = vpop.permute.xlu0 %891
    %v894 = vadd.f32 %v884, %v892
    %v895 = vtanh.pop %v894
    %897 = vrot.lane.b32.xlu0 %v895, 64
    %v898 = vpop.permute.xlu0 %897
    %v900 = vmul.f32 %v879, %v898
    %902 = vrot.lane.b32.xlu0 %v873, 32
    %v903 = vpop.permute.xlu0 %902
    %vm905 = vcmask 259076
    %906 = vst.msk [vmem:[#allocation2] sm:$0x30] %vm905, %v903
    %908 = vrot.lane.b32.xlu0 %v900, 64
    %v909 = vpop.permute.xlu0 %908
    %vm911 = vcmask 519426
    %912 = vst.msk [vmem:[#allocation2 + $0x8] sm:$0xc] %vm911, %v909
    %v913 = vrot.slane %v873, 4
    %914 = vrot.lane.b32.xlu0 %v913, 32
    %v915 = vpop.permute.xlu0 %914
    %v916 = vsel %vm259, %v915, 0
    %918 = vmatprep.subr.mxu0 0.0
    %919 = vmatpush1.msra.mxu0 %v250
    %920 = vmatprep.subr.mxu0 0.0
    %921 = vmatpush1.msra.mxu0 %v251
    %922 = vmatprep.subr.mxu0 0.0
    %923 = vmatpush1.msra.mxu0 %v252
    %924 = vmatprep.subr.mxu0 0.0
    %925 = vmatpush1.msra.mxu0 %v253
    %926 = vmatprep.subr.mxu0 0.0
    %927 = vmatpush1.msra.mxu0 0.0
    %928 = vmatprep.subr.mxu0 0.0
    %929 = vmatpush1.msra.mxu0 0.0
    %930 = vmatprep.subr.mxu0 0.0
    %931 = vmatpush1.msra.mxu0 0.0
    %932 = vmatprep.subr.mxu0 0.0
    %933 = vmatpush1.msra.mxu0 0.0
    %934 = vmatprep.subr.mxu0 0.0
    %935 = vmatpush1.msra.mxu0 0.0
    %936 = vmatprep.subr.mxu0 0.0
    %937 = vmatpush1.msra.mxu0 0.0
    %938 = vmatprep.subr.mxu0 0.0
    %939 = vmatpush1.msra.mxu0 0.0
    %940 = vmatprep.subr.mxu0 0.0
    %941 = vmatpush1.msra.mxu0 0.0
    %942 = vmatprep.subr.mxu0 0.0
    %943 = vmatpush1.msra.mxu0 0.0
    %944 = vmatprep.subr.mxu0 0.0
    %945 = vmatpush1.msra.mxu0 0.0
    %946 = vmatprep.subr.mxu0 0.0
    %947 = vmatpush1.msra.mxu0 0.0
    %948 = vmatprep.subr.mxu0 0.0
    %949 = vmatpush1.msra.mxu0 0.0
    %950 = vmatprep.subr.mxu0 0.0
    %951 = vmatpush1.msra.mxu0 0.0
    %952 = vmatprep.subr.mxu0 0.0
    %953 = vmatpush1.msra.mxu0 0.0
    %954 = vmatprep.subr.mxu0 0.0
    %955 = vmatpush1.msra.mxu0 0.0
    %956 = vmatprep.subr.mxu0 0.0
    %957 = vmatpush1.msra.mxu0 0.0
    %958 = vmatprep.subr.mxu0 0.0
    %959 = vmatpush1.msra.mxu0 0.0
    %960 = vmatprep.subr.mxu0 0.0
    %961 = vmatpush1.msra.mxu0 0.0
    %962 = vmatprep.subr.mxu0 0.0
    %963 = vmatpush1.msra.mxu0 0.0
    %964 = vmatprep.subr.mxu0 0.0
    %965 = vmatpush1.msra.mxu0 0.0
    %966 = vmatprep.subr.mxu0 0.0
    %967 = vmatpush1.msra.mxu0 0.0
    %968 = vmatprep.subr.mxu0 0.0
    %969 = vmatpush1.msra.mxu0 0.0
    %970 = vmatprep.subr.mxu0 0.0
    %971 = vmatpush1.msra.mxu0 0.0
    %972 = vmatprep.subr.mxu0 0.0
    %973 = vmatpush1.msra.mxu0 0.0
    %974 = vmatprep.subr.mxu0 0.0
    %975 = vmatpush1.msra.mxu0 0.0
    %976 = vmatprep.subr.mxu0 0.0
    %977 = vmatpush1.msra.mxu0 0.0
    %978 = vmatprep.subr.mxu0 0.0
    %979 = vmatpush1.msra.mxu0 0.0
    %980 = vmatprep.subr.mxu0 0.0
    %981 = vmatpush1.msra.mxu0 0.0
    %982 = vmatprep.mubr.f32.mxu0 0.0
    %983 = vmatmul.mubr.f32.gmra.mrb[0].mxu0 %v916
    %v984 = vpop.f32.mrb[0].mxu0
    %v985 = vadd.f32 0.0, %v984
    %v986 = vpop.f32.mrb[0].mxu0
    %987 = vdwg.mxu0
    %v989 = vrot.slane %v985, 2
    %v991 = vadd.f32 %v155, %v989
    %v992 = vrot.slane %v900, 2
    %993 = vrot.lane.b32.xlu0 %v992, 32
    %v994 = vpop.permute.xlu0 %993
    %v995 = vsel %vm259, %v994, 0
    %997 = vmatprep.subr.mxu0 0.0
    %998 = vmatpush1.msra.mxu0 %v255
    %999 = vmatprep.subr.mxu0 0.0
    %1000 = vmatpush1.msra.mxu0 %v256
    %1001 = vmatprep.subr.mxu0 0.0
    %1002 = vmatpush1.msra.mxu0 %v257
    %1003 = vmatprep.subr.mxu0 0.0
    %1004 = vmatpush1.msra.mxu0 %v258
    %1005 = vmatprep.subr.mxu0 0.0
    %1006 = vmatpush1.msra.mxu0 0.0
    %1007 = vmatprep.subr.mxu0 0.0
    %1008 = vmatpush1.msra.mxu0 0.0
    %1009 = vmatprep.subr.mxu0 0.0
    %1010 = vmatpush1.msra.mxu0 0.0
    %1011 = vmatprep.subr.mxu0 0.0
    %1012 = vmatpush1.msra.mxu0 0.0
    %1013 = vmatprep.subr.mxu0 0.0
    %1014 = vmatpush1.msra.mxu0 0.0
    %1015 = vmatprep.subr.mxu0 0.0
    %1016 = vmatpush1.msra.mxu0 0.0
    %1017 = vmatprep.subr.mxu0 0.0
    %1018 = vmatpush1.msra.mxu0 0.0
    %1019 = vmatprep.subr.mxu0 0.0
    %1020 = vmatpush1.msra.mxu0 0.0
    %1021 = vmatprep.subr.mxu0 0.0
    %1022 = vmatpush1.msra.mxu0 0.0
    %1023 = vmatprep.subr.mxu0 0.0
    %1024 = vmatpush1.msra.mxu0 0.0
    %1025 = vmatprep.subr.mxu0 0.0
    %1026 = vmatpush1.msra.mxu0 0.0
    %1027 = vmatprep.subr.mxu0 0.0
    %1028 = vmatpush1.msra.mxu0 0.0
    %1029 = vmatprep.subr.mxu0 0.0
    %1030 = vmatpush1.msra.mxu0 0.0
    %1031 = vmatprep.subr.mxu0 0.0
    %1032 = vmatpush1.msra.mxu0 0.0
    %1033 = vmatprep.subr.mxu0 0.0
    %1034 = vmatpush1.msra.mxu0 0.0
    %1035 = vmatprep.subr.mxu0 0.0
    %1036 = vmatpush1.msra.mxu0 0.0
    %1037 = vmatprep.subr.mxu0 0.0
    %1038 = vmatpush1.msra.mxu0 0.0
    %1039 = vmatprep.subr.mxu0 0.0
    %1040 = vmatpush1.msra.mxu0 0.0
    %1041 = vmatprep.subr.mxu0 0.0
    %1042 = vmatpush1.msra.mxu0 0.0
    %1043 = vmatprep.subr.mxu0 0.0
    %1044 = vmatpush1.msra.mxu0 0.0
    %1045 = vmatprep.subr.mxu0 0.0
    %1046 = vmatpush1.msra.mxu0 0.0
    %1047 = vmatprep.subr.mxu0 0.0
    %1048 = vmatpush1.msra.mxu0 0.0
    %1049 = vmatprep.subr.mxu0 0.0
    %1050 = vmatpush1.msra.mxu0 0.0
    %1051 = vmatprep.subr.mxu0 0.0
    %1052 = vmatpush1.msra.mxu0 0.0
    %1053 = vmatprep.subr.mxu0 0.0
    %1054 = vmatpush1.msra.mxu0 0.0
    %1055 = vmatprep.subr.mxu0 0.0
    %1056 = vmatpush1.msra.mxu0 0.0
    %1057 = vmatprep.subr.mxu0 0.0
    %1058 = vmatpush1.msra.mxu0 0.0
    %1059 = vmatprep.subr.mxu0 0.0
    %1060 = vmatpush1.msra.mxu0 0.0
    %1061 = vmatprep.mubr.f32.mxu0 0.0
    %1062 = vmatmul.mubr.f32.gmra.mrb[0].mxu0 %v995
    %v1063 = vpop.f32.mrb[0].mxu0
    %v1064 = vadd.f32 0.0, %v1063
    %v1065 = vpop.f32.mrb[0].mxu0
    %1066 = vdwg.mxu0
    %v1067 = vadd.f32 %v247, %v1064
    %v1068 = vxor.u32 %v991, 2147483648
    %v1069 = vmul.f32 %v1068, 1.442695
    %v1070 = vpow.pop %v1069
    %v1071 = vadd.f32 %v1070, 1.0
    %v1072 = vrcp.pop %v1071
    %v1073 = vmul.f32 1.0, %v1072
    %v1074 = vtanh.pop %v991
    %v1076 = vrot.slane %v867, 6
    %v1078 = vmul.f32 %v1073, %v1076
    %1080 = vrot.lane.b32.xlu0 %v1074, 64
    %v1081 = vpop.permute.xlu0 %1080
    %v1083 = vmul.f32 %v1073, %v1081
    %1085 = vrot.lane.b32.xlu0 %v1083, 32
    %v1086 = vpop.permute.xlu0 %1085
    %v1088 = vadd.f32 %v1078, %v1086
    %v1089 = vtanh.pop %v1088
    %1091 = vrot.lane.b32.xlu0 %v1089, 64
    %v1092 = vpop.permute.xlu0 %1091
    %v1094 = vmul.f32 %v1073, %v1092
    %v1095 = vxor.u32 %v1067, 2147483648
    %v1096 = vmul.f32 %v1095, 1.442695
    %v1097 = vpow.pop %v1096
    %v1098 = vadd.f32 %v1097, 1.0
    %v1099 = vrcp.pop %v1098
    %v1100 = vmul.f32 1.0, %v1099
    %v1101 = vtanh.pop %v1067
    %v1103 = vrot.slane %v894, 2
    %v1105 = vmul.f32 %v1100, %v1103
    %1107 = vrot.lane.b32.xlu0 %v1101, 64
    %v1108 = vpop.permute.xlu0 %1107
    %v1110 = vmul.f32 %v1100, %v1108
    %1112 = vrot.lane.b32.xlu0 %v1110, 32
    %v1113 = vpop.permute.xlu0 %1112
    %v1115 = vadd.f32 %v1105, %v1113
    %v1116 = vtanh.pop %v1115
    %1118 = vrot.lane.b32.xlu0 %v1116, 64
    %v1119 = vpop.permute.xlu0 %1118
    %v1121 = vmul.f32 %v1100, %v1119
    %1123 = vrot.lane.b32.xlu0 %v1094, 32
    %v1124 = vpop.permute.xlu0 %1123
    %vm1126 = vcmask 261126
    %1127 = vst.msk [vmem:[#allocation2] sm:$0xc0] %vm1126, %v1124
    %1129 = vrot.lane.b32.xlu0 %v1121, 64
    %v1130 = vpop.permute.xlu0 %1129
    %vm1132 = vcmask 517376
    %1133 = vst.msk [vmem:[#allocation2 + $0x8] sm:$0x3] %vm1132, %v1130
    %v1134 = vrot.slane %v1094, 6
    %1135 = vrot.lane.b32.xlu0 %v1134, 32
    %v1136 = vpop.permute.xlu0 %1135
    %v1137 = vsel %vm259, %v1136, 0
    %1139 = vmatprep.subr.mxu0 0.0
    %1140 = vmatpush1.msra.mxu0 %v250
    %1141 = vmatprep.subr.mxu0 0.0
    %1142 = vmatpush1.msra.mxu0 %v251
    %1143 = vmatprep.subr.mxu0 0.0
    %1144 = vmatpush1.msra.mxu0 %v252
    %1145 = vmatprep.subr.mxu0 0.0
    %1146 = vmatpush1.msra.mxu0 %v253
    %1147 = vmatprep.subr.mxu0 0.0
    %1148 = vmatpush1.msra.mxu0 0.0
    %1149 = vmatprep.subr.mxu0 0.0
    %1150 = vmatpush1.msra.mxu0 0.0
    %1151 = vmatprep.subr.mxu0 0.0
    %1152 = vmatpush1.msra.mxu0 0.0
    %1153 = vmatprep.subr.mxu0 0.0
    %1154 = vmatpush1.msra.mxu0 0.0
    %1155 = vmatprep.subr.mxu0 0.0
    %1156 = vmatpush1.msra.mxu0 0.0
    %1157 = vmatprep.subr.mxu0 0.0
    %1158 = vmatpush1.msra.mxu0 0.0
    %1159 = vmatprep.subr.mxu0 0.0
    %1160 = vmatpush1.msra.mxu0 0.0
    %1161 = vmatprep.subr.mxu0 0.0
    %1162 = vmatpush1.msra.mxu0 0.0
    %1163 = vmatprep.subr.mxu0 0.0
    %1164 = vmatpush1.msra.mxu0 0.0
    %1165 = vmatprep.subr.mxu0 0.0
    %1166 = vmatpush1.msra.mxu0 0.0
    %1167 = vmatprep.subr.mxu0 0.0
    %1168 = vmatpush1.msra.mxu0 0.0
    %1169 = vmatprep.subr.mxu0 0.0
    %1170 = vmatpush1.msra.mxu0 0.0
    %1171 = vmatprep.subr.mxu0 0.0
    %1172 = vmatpush1.msra.mxu0 0.0
    %1173 = vmatprep.subr.mxu0 0.0
    %1174 = vmatpush1.msra.mxu0 0.0
    %1175 = vmatprep.subr.mxu0 0.0
    %1176 = vmatpush1.msra.mxu0 0.0
    %1177 = vmatprep.subr.mxu0 0.0
    %1178 = vmatpush1.msra.mxu0 0.0
    %1179 = vmatprep.subr.mxu0 0.0
    %1180 = vmatpush1.msra.mxu0 0.0
    %1181 = vmatprep.subr.mxu0 0.0
    %1182 = vmatpush1.msra.mxu0 0.0
    %1183 = vmatprep.subr.mxu0 0.0
    %1184 = vmatpush1.msra.mxu0 0.0
    %1185 = vmatprep.subr.mxu0 0.0
    %1186 = vmatpush1.msra.mxu0 0.0
    %1187 = vmatprep.subr.mxu0 0.0
    %1188 = vmatpush1.msra.mxu0 0.0
    %1189 = vmatprep.subr.mxu0 0.0
    %1190 = vmatpush1.msra.mxu0 0.0
    %1191 = vmatprep.subr.mxu0 0.0
    %1192 = vmatpush1.msra.mxu0 0.0
    %1193 = vmatprep.subr.mxu0 0.0
    %1194 = vmatpush1.msra.mxu0 0.0
    %1195 = vmatprep.subr.mxu0 0.0
    %1196 = vmatpush1.msra.mxu0 0.0
    %1197 = vmatprep.subr.mxu0 0.0
    %1198 = vmatpush1.msra.mxu0 0.0
    %1199 = vmatprep.subr.mxu0 0.0
    %1200 = vmatpush1.msra.mxu0 0.0
    %1201 = vmatprep.subr.mxu0 0.0
    %1202 = vmatpush1.msra.mxu0 0.0
    %1203 = vmatprep.mubr.f32.mxu0 0.0
    %1204 = vmatmul.mubr.f32.gmra.mrb[0].mxu0 %v1137
    %v1205 = vpop.f32.mrb[0].mxu0
    %v1206 = vadd.f32 0.0, %v1205
    %v1207 = vpop.f32.mrb[0].mxu0
    %1208 = vdwg.mxu0
    %v1209 = vadd.f32 %v160, %v1206
    %1210 = vrot.lane.b32.xlu0 %v1121, 32
    %v1211 = vpop.permute.xlu0 %1210
    %v1212 = vsel %vm259, %v1211, 0
    %1214 = vmatprep.subr.mxu0 0.0
    %1215 = vmatpush1.msra.mxu0 %v255
    %1216 = vmatprep.subr.mxu0 0.0
    %1217 = vmatpush1.msra.mxu0 %v256
    %1218 = vmatprep.subr.mxu0 0.0
    %1219 = vmatpush1.msra.mxu0 %v257
    %1220 = vmatprep.subr.mxu0 0.0
    %1221 = vmatpush1.msra.mxu0 %v258
    %1222 = vmatprep.subr.mxu0 0.0
    %1223 = vmatpush1.msra.mxu0 0.0
    %1224 = vmatprep.subr.mxu0 0.0
    %1225 = vmatpush1.msra.mxu0 0.0
    %1226 = vmatprep.subr.mxu0 0.0
    %1227 = vmatpush1.msra.mxu0 0.0
    %1228 = vmatprep.subr.mxu0 0.0
    %1229 = vmatpush1.msra.mxu0 0.0
    %1230 = vmatprep.subr.mxu0 0.0
    %1231 = vmatpush1.msra.mxu0 0.0
    %1232 = vmatprep.subr.mxu0 0.0
    %1233 = vmatpush1.msra.mxu0 0.0
    %1234 = vmatprep.subr.mxu0 0.0
    %1235 = vmatpush1.msra.mxu0 0.0
    %1236 = vmatprep.subr.mxu0 0.0
    %1237 = vmatpush1.msra.mxu0 0.0
    %1238 = vmatprep.subr.mxu0 0.0
    %1239 = vmatpush1.msra.mxu0 0.0
    %1240 = vmatprep.subr.mxu0 0.0
    %1241 = vmatpush1.msra.mxu0 0.0
    %1242 = vmatprep.subr.mxu0 0.0
    %1243 = vmatpush1.msra.mxu0 0.0
    %1244 = vmatprep.subr.mxu0 0.0
    %1245 = vmatpush1.msra.mxu0 0.0
    %1246 = vmatprep.subr.mxu0 0.0
    %1247 = vmatpush1.msra.mxu0 0.0
    %1248 = vmatprep.subr.mxu0 0.0
    %1249 = vmatpush1.msra.mxu0 0.0
    %1250 = vmatprep.subr.mxu0 0.0
    %1251 = vmatpush1.msra.mxu0 0.0
    %1252 = vmatprep.subr.mxu0 0.0
    %1253 = vmatpush1.msra.mxu0 0.0
    %1254 = vmatprep.subr.mxu0 0.0
    %1255 = vmatpush1.msra.mxu0 0.0
    %1256 = vmatprep.subr.mxu0 0.0
    %1257 = vmatpush1.msra.mxu0 0.0
    %1258 = vmatprep.subr.mxu0 0.0
    %1259 = vmatpush1.msra.mxu0 0.0
    %1260 = vmatprep.subr.mxu0 0.0
    %1261 = vmatpush1.msra.mxu0 0.0
    %1262 = vmatprep.subr.mxu0 0.0
    %1263 = vmatpush1.msra.mxu0 0.0
    %1264 = vmatprep.subr.mxu0 0.0
    %1265 = vmatpush1.msra.mxu0 0.0
    %1266 = vmatprep.subr.mxu0 0.0
    %1267 = vmatpush1.msra.mxu0 0.0
    %1268 = vmatprep.subr.mxu0 0.0
    %1269 = vmatpush1.msra.mxu0 0.0
    %1270 = vmatprep.subr.mxu0 0.0
    %1271 = vmatpush1.msra.mxu0 0.0
    %1272 = vmatprep.subr.mxu0 0.0
    %1273 = vmatpush1.msra.mxu0 0.0
    %1274 = vmatprep.subr.mxu0 0.0
    %1275 = vmatpush1.msra.mxu0 0.0
    %1276 = vmatprep.subr.mxu0 0.0
    %1277 = vmatpush1.msra.mxu0 0.0
    %1278 = vmatprep.mubr.f32.mxu0 0.0
    %1279 = vmatmul.mubr.f32.gmra.mrb[0].mxu0 %v1212
    %v1280 = vpop.f32.mrb[0].mxu0
    %v1281 = vadd.f32 0.0, %v1280
    %v1282 = vpop.f32.mrb[0].mxu0
    %1283 = vdwg.mxu0
    %v1285 = vrot.slane %v1281, 2
    %v1287 = vadd.f32 %v242, %v1285
    %v1288 = vxor.u32 %v1209, 2147483648
    %v1289 = vmul.f32 %v1288, 1.442695
    %v1290 = vpow.pop %v1289
    %v1291 = vadd.f32 %v1290, 1.0
    %v1292 = vrcp.pop %v1291
    %v1293 = vmul.f32 1.0, %v1292
    %v1294 = vtanh.pop %v1209
    %v1296 = vrot.slane %v1088, 6
    %v1298 = vmul.f32 %v1293, %v1296
    %1300 = vrot.lane.b32.xlu0 %v1294, 64
    %v1301 = vpop.permute.xlu0 %1300
    %v1303 = vmul.f32 %v1293, %v1301
    %1305 = vrot.lane.b32.xlu0 %v1303, 32
    %v1306 = vpop.permute.xlu0 %1305
    %v1308 = vadd.f32 %v1298, %v1306
    %v1309 = vtanh.pop %v1308
    %1311 = vrot.lane.b32.xlu0 %v1309, 64
    %v1312 = vpop.permute.xlu0 %1311
    %v1314 = vmul.f32 %v1293, %v1312
    %v1315 = vxor.u32 %v1287, 2147483648
    %v1316 = vmul.f32 %v1315, 1.442695
    %v1317 = vpow.pop %v1316
    %v1318 = vadd.f32 %v1317, 1.0
    %v1319 = vrcp.pop %v1318
    %v1320 = vmul.f32 1.0, %v1319
    %v1321 = vtanh.pop %v1287
    %v1323 = vrot.slane %v1115, 2
    %v1325 = vmul.f32 %v1320, %v1323
    %1327 = vrot.lane.b32.xlu0 %v1321, 64
    %v1328 = vpop.permute.xlu0 %1327
    %v1330 = vmul.f32 %v1320, %v1328
    %1332 = vrot.lane.b32.xlu0 %v1330, 32
    %v1333 = vpop.permute.xlu0 %1332
    %v1335 = vadd.f32 %v1325, %v1333
    %v1336 = vtanh.pop %v1335
    %1338 = vrot.lane.b32.xlu0 %v1336, 64
    %v1339 = vpop.permute.xlu0 %1338
    %v1341 = vmul.f32 %v1320, %v1339
    %1343 = vrot.lane.b32.xlu0 %v1314, 32
    %v1344 = vpop.permute.xlu0 %1343
    %1346 = vst.msk [vmem:[#allocation2 + $0x8] sm:$0x3] %vm460, %v1344
    %1348 = vrot.lane.b32.xlu0 %v1341, 64
    %v1349 = vpop.permute.xlu0 %1348
    %1351 = vst.msk [vmem:[#allocation2] sm:$0xc0] %vm466, %v1349
    %v1352 = vsel %vm259, %v1344, 0
    %1354 = vmatprep.subr.mxu0 0.0
    %1355 = vmatpush1.msra.mxu0 %v250
    %1356 = vmatprep.subr.mxu0 0.0
    %1357 = vmatpush1.msra.mxu0 %v251
    %1358 = vmatprep.subr.mxu0 0.0
    %1359 = vmatpush1.msra.mxu0 %v252
    %1360 = vmatprep.subr.mxu0 0.0
    %1361 = vmatpush1.msra.mxu0 %v253
    %1362 = vmatprep.subr.mxu0 0.0
    %1363 = vmatpush1.msra.mxu0 0.0
    %1364 = vmatprep.subr.mxu0 0.0
    %1365 = vmatpush1.msra.mxu0 0.0
    %1366 = vmatprep.subr.mxu0 0.0
    %1367 = vmatpush1.msra.mxu0 0.0
    %1368 = vmatprep.subr.mxu0 0.0
    %1369 = vmatpush1.msra.mxu0 0.0
    %1370 = vmatprep.subr.mxu0 0.0
    %1371 = vmatpush1.msra.mxu0 0.0
    %1372 = vmatprep.subr.mxu0 0.0
    %1373 = vmatpush1.msra.mxu0 0.0
    %1374 = vmatprep.subr.mxu0 0.0
    %1375 = vmatpush1.msra.mxu0 0.0
    %1376 = vmatprep.subr.mxu0 0.0
    %1377 = vmatpush1.msra.mxu0 0.0
    %1378 = vmatprep.subr.mxu0 0.0
    %1379 = vmatpush1.msra.mxu0 0.0
    %1380 = vmatprep.subr.mxu0 0.0
    %1381 = vmatpush1.msra.mxu0 0.0
    %1382 = vmatprep.subr.mxu0 0.0
    %1383 = vmatpush1.msra.mxu0 0.0
    %1384 = vmatprep.subr.mxu0 0.0
    %1385 = vmatpush1.msra.mxu0 0.0
    %1386 = vmatprep.subr.mxu0 0.0
    %1387 = vmatpush1.msra.mxu0 0.0
    %1388 = vmatprep.subr.mxu0 0.0
    %1389 = vmatpush1.msra.mxu0 0.0
    %1390 = vmatprep.subr.mxu0 0.0
    %1391 = vmatpush1.msra.mxu0 0.0
    %1392 = vmatprep.subr.mxu0 0.0
    %1393 = vmatpush1.msra.mxu0 0.0
    %1394 = vmatprep.subr.mxu0 0.0
    %1395 = vmatpush1.msra.mxu0 0.0
    %1396 = vmatprep.subr.mxu0 0.0
    %1397 = vmatpush1.msra.mxu0 0.0
    %1398 = vmatprep.subr.mxu0 0.0
    %1399 = vmatpush1.msra.mxu0 0.0
    %1400 = vmatprep.subr.mxu0 0.0
    %1401 = vmatpush1.msra.mxu0 0.0
    %1402 = vmatprep.subr.mxu0 0.0
    %1403 = vmatpush1.msra.mxu0 0.0
    %1404 = vmatprep.subr.mxu0 0.0
    %1405 = vmatpush1.msra.mxu0 0.0
    %1406 = vmatprep.subr.mxu0 0.0
    %1407 = vmatpush1.msra.mxu0 0.0
    %1408 = vmatprep.subr.mxu0 0.0
    %1409 = vmatpush1.msra.mxu0 0.0
    %1410 = vmatprep.subr.mxu0 0.0
    %1411 = vmatpush1.msra.mxu0 0.0
    %1412 = vmatprep.subr.mxu0 0.0
    %1413 = vmatpush1.msra.mxu0 0.0
    %1414 = vmatprep.subr.mxu0 0.0
    %1415 = vmatpush1.msra.mxu0 0.0
    %1416 = vmatprep.subr.mxu0 0.0
    %1417 = vmatpush1.msra.mxu0 0.0
    %1418 = vmatprep.mubr.f32.mxu0 0.0
    %1419 = vmatmul.mubr.f32.gmra.mrb[0].mxu0 %v1352
    %v1420 = vpop.f32.mrb[0].mxu0
    %v1421 = vadd.f32 0.0, %v1420
    %v1422 = vpop.f32.mrb[0].mxu0
    %1423 = vdwg.mxu0
    %v1425 = vrot.slane %v1421, 6
    %v1427 = vadd.f32 %v160, %v1425
    %v1428 = vrot.slane %v1341, 6
    %1429 = vrot.lane.b32.xlu0 %v1428, 32
    %v1430 = vpop.permute.xlu0 %1429
    %v1431 = vsel %vm259, %v1430, 0
    %1433 = vmatprep.subr.mxu0 0.0
    %1434 = vmatpush1.msra.mxu0 %v255
    %1435 = vmatprep.subr.mxu0 0.0
    %1436 = vmatpush1.msra.mxu0 %v256
    %1437 = vmatprep.subr.mxu0 0.0
    %1438 = vmatpush1.msra.mxu0 %v257
    %1439 = vmatprep.subr.mxu0 0.0
    %1440 = vmatpush1.msra.mxu0 %v258
    %1441 = vmatprep.subr.mxu0 0.0
    %1442 = vmatpush1.msra.mxu0 0.0
    %1443 = vmatprep.subr.mxu0 0.0
    %1444 = vmatpush1.msra.mxu0 0.0
    %1445 = vmatprep.subr.mxu0 0.0
    %1446 = vmatpush1.msra.mxu0 0.0
    %1447 = vmatprep.subr.mxu0 0.0
    %1448 = vmatpush1.msra.mxu0 0.0
    %1449 = vmatprep.subr.mxu0 0.0
    %1450 = vmatpush1.msra.mxu0 0.0
    %1451 = vmatprep.subr.mxu0 0.0
    %1452 = vmatpush1.msra.mxu0 0.0
    %1453 = vmatprep.subr.mxu0 0.0
    %1454 = vmatpush1.msra.mxu0 0.0
    %1455 = vmatprep.subr.mxu0 0.0
    %1456 = vmatpush1.msra.mxu0 0.0
    %1457 = vmatprep.subr.mxu0 0.0
    %1458 = vmatpush1.msra.mxu0 0.0
    %1459 = vmatprep.subr.mxu0 0.0
    %1460 = vmatpush1.msra.mxu0 0.0
    %1461 = vmatprep.subr.mxu0 0.0
    %1462 = vmatpush1.msra.mxu0 0.0
    %1463 = vmatprep.subr.mxu0 0.0
    %1464 = vmatpush1.msra.mxu0 0.0
    %1465 = vmatprep.subr.mxu0 0.0
    %1466 = vmatpush1.msra.mxu0 0.0
    %1467 = vmatprep.subr.mxu0 0.0
    %1468 = vmatpush1.msra.mxu0 0.0
    %1469 = vmatprep.subr.mxu0 0.0
    %1470 = vmatpush1.msra.mxu0 0.0
    %1471 = vmatprep.subr.mxu0 0.0
    %1472 = vmatpush1.msra.mxu0 0.0
    %1473 = vmatprep.subr.mxu0 0.0
    %1474 = vmatpush1.msra.mxu0 0.0
    %1475 = vmatprep.subr.mxu0 0.0
    %1476 = vmatpush1.msra.mxu0 0.0
    %1477 = vmatprep.subr.mxu0 0.0
    %1478 = vmatpush1.msra.mxu0 0.0
    %1479 = vmatprep.subr.mxu0 0.0
    %1480 = vmatpush1.msra.mxu0 0.0
    %1481 = vmatprep.subr.mxu0 0.0
    %1482 = vmatpush1.msra.mxu0 0.0
    %1483 = vmatprep.subr.mxu0 0.0
    %1484 = vmatpush1.msra.mxu0 0.0
    %1485 = vmatprep.subr.mxu0 0.0
    %1486 = vmatpush1.msra.mxu0 0.0
    %1487 = vmatprep.subr.mxu0 0.0
    %1488 = vmatpush1.msra.mxu0 0.0
    %1489 = vmatprep.subr.mxu0 0.0
    %1490 = vmatpush1.msra.mxu0 0.0
    %1491 = vmatprep.subr.mxu0 0.0
    %1492 = vmatpush1.msra.mxu0 0.0
    %1493 = vmatprep.subr.mxu0 0.0
    %1494 = vmatpush1.msra.mxu0 0.0
    %1495 = vmatprep.subr.mxu0 0.0
    %1496 = vmatpush1.msra.mxu0 0.0
    %1497 = vmatprep.mubr.f32.mxu0 0.0
    %1498 = vmatmul.mubr.f32.gmra.mrb[0].mxu0 %v1431
    %v1499 = vpop.f32.mrb[0].mxu0
    %v1500 = vadd.f32 0.0, %v1499
    %v1501 = vpop.f32.mrb[0].mxu0
    %1502 = vdwg.mxu0
    %v1504 = vrot.slane %v1500, 4
    %v1506 = vadd.f32 %v242, %v1504
    %v1507 = vxor.u32 %v1427, 2147483648
    %v1508 = vmul.f32 %v1507, 1.442695
    %v1509 = vpow.pop %v1508
    %v1510 = vadd.f32 %v1509, 1.0
    %v1511 = vrcp.pop %v1510
    %v1512 = vmul.f32 1.0, %v1511
    %v1513 = vtanh.pop %v1427
    %v1515 = vrot.slane %v1308, 6
    %v1517 = vmul.f32 %v1512, %v1515
    %1519 = vrot.lane.b32.xlu0 %v1513, 64
    %v1520 = vpop.permute.xlu0 %1519
    %v1522 = vmul.f32 %v1512, %v1520
    %1524 = vrot.lane.b32.xlu0 %v1522, 32
    %v1525 = vpop.permute.xlu0 %1524
    %v1527 = vadd.f32 %v1517, %v1525
    %v1528 = vtanh.pop %v1527
    %1530 = vrot.lane.b32.xlu0 %v1528, 64
    %v1531 = vpop.permute.xlu0 %1530
    %v1533 = vmul.f32 %v1512, %v1531
    %v1534 = vxor.u32 %v1506, 2147483648
    %v1535 = vmul.f32 %v1534, 1.442695
    %v1536 = vpow.pop %v1535
    %v1537 = vadd.f32 %v1536, 1.0
    %v1538 = vrcp.pop %v1537
    %v1539 = vmul.f32 1.0, %v1538
    %v1540 = vtanh.pop %v1506
    %v1542 = vrot.slane %v1335, 2
    %v1544 = vmul.f32 %v1539, %v1542
    %1546 = vrot.lane.b32.xlu0 %v1540, 64
    %v1547 = vpop.permute.xlu0 %1546
    %v1549 = vmul.f32 %v1539, %v1547
    %1551 = vrot.lane.b32.xlu0 %v1549, 32
    %v1552 = vpop.permute.xlu0 %1551
    %v1554 = vadd.f32 %v1544, %v1552
    %v1555 = vtanh.pop %v1554
    %1557 = vrot.lane.b32.xlu0 %v1555, 64
    %v1558 = vpop.permute.xlu0 %1557
    %v1560 = vmul.f32 %v1539, %v1558
    %1562 = vrot.lane.b32.xlu0 %v1533, 32
    %v1563 = vpop.permute.xlu0 %1562
    %1565 = vst.msk [vmem:[#allocation2 + $0x8] sm:$0xc] %vm681, %v1563
    %1567 = vrot.lane.b32.xlu0 %v1560, 64
    %v1568 = vpop.permute.xlu0 %1567
    %1570 = vst.msk [vmem:[#allocation2] sm:$0x30] %vm687, %v1568
    %v1571 = vrot.slane %v1533, 2
    %1572 = vrot.lane.b32.xlu0 %v1571, 32
    %v1573 = vpop.permute.xlu0 %1572
    %v1574 = vsel %vm259, %v1573, 0
    %1576 = vmatprep.subr.mxu0 0.0
    %1577 = vmatpush1.msra.mxu0 %v250
    %1578 = vmatprep.subr.mxu0 0.0
    %1579 = vmatpush1.msra.mxu0 %v251
    %1580 = vmatprep.subr.mxu0 0.0
    %1581 = vmatpush1.msra.mxu0 %v252
    %1582 = vmatprep.subr.mxu0 0.0
    %1583 = vmatpush1.msra.mxu0 %v253
    %1584 = vmatprep.subr.mxu0 0.0
    %1585 = vmatpush1.msra.mxu0 0.0
    %1586 = vmatprep.subr.mxu0 0.0
    %1587 = vmatpush1.msra.mxu0 0.0
    %1588 = vmatprep.subr.mxu0 0.0
    %1589 = vmatpush1.msra.mxu0 0.0
    %1590 = vmatprep.subr.mxu0 0.0
    %1591 = vmatpush1.msra.mxu0 0.0
    %1592 = vmatprep.subr.mxu0 0.0
    %1593 = vmatpush1.msra.mxu0 0.0
    %1594 = vmatprep.subr.mxu0 0.0
    %1595 = vmatpush1.msra.mxu0 0.0
    %1596 = vmatprep.subr.mxu0 0.0
    %1597 = vmatpush1.msra.mxu0 0.0
    %1598 = vmatprep.subr.mxu0 0.0
    %1599 = vmatpush1.msra.mxu0 0.0
    %1600 = vmatprep.subr.mxu0 0.0
    %1601 = vmatpush1.msra.mxu0 0.0
    %1602 = vmatprep.subr.mxu0 0.0
    %1603 = vmatpush1.msra.mxu0 0.0
    %1604 = vmatprep.subr.mxu0 0.0
    %1605 = vmatpush1.msra.mxu0 0.0
    %1606 = vmatprep.subr.mxu0 0.0
    %1607 = vmatpush1.msra.mxu0 0.0
    %1608 = vmatprep.subr.mxu0 0.0
    %1609 = vmatpush1.msra.mxu0 0.0
    %1610 = vmatprep.subr.mxu0 0.0
    %1611 = vmatpush1.msra.mxu0 0.0
    %1612 = vmatprep.subr.mxu0 0.0
    %1613 = vmatpush1.msra.mxu0 0.0
    %1614 = vmatprep.subr.mxu0 0.0
    %1615 = vmatpush1.msra.mxu0 0.0
    %1616 = vmatprep.subr.mxu0 0.0
    %1617 = vmatpush1.msra.mxu0 0.0
    %1618 = vmatprep.subr.mxu0 0.0
    %1619 = vmatpush1.msra.mxu0 0.0
    %1620 = vmatprep.subr.mxu0 0.0
    %1621 = vmatpush1.msra.mxu0 0.0
    %1622 = vmatprep.subr.mxu0 0.0
    %1623 = vmatpush1.msra.mxu0 0.0
    %1624 = vmatprep.subr.mxu0 0.0
    %1625 = vmatpush1.msra.mxu0 0.0
    %1626 = vmatprep.subr.mxu0 0.0
    %1627 = vmatpush1.msra.mxu0 0.0
    %1628 = vmatprep.subr.mxu0 0.0
    %1629 = vmatpush1.msra.mxu0 0.0
    %1630 = vmatprep.subr.mxu0 0.0
    %1631 = vmatpush1.msra.mxu0 0.0
    %1632 = vmatprep.subr.mxu0 0.0
    %1633 = vmatpush1.msra.mxu0 0.0
    %1634 = vmatprep.subr.mxu0 0.0
    %1635 = vmatpush1.msra.mxu0 0.0
    %1636 = vmatprep.subr.mxu0 0.0
    %1637 = vmatpush1.msra.mxu0 0.0
    %1638 = vmatprep.subr.mxu0 0.0
    %1639 = vmatpush1.msra.mxu0 0.0
    %1640 = vmatprep.mubr.f32.mxu0 0.0
    %1641 = vmatmul.mubr.f32.gmra.mrb[0].mxu0 %v1574
    %v1642 = vpop.f32.mrb[0].mxu0
    %v1643 = vadd.f32 0.0, %v1642
    %v1644 = vpop.f32.mrb[0].mxu0
    %1645 = vdwg.mxu0
    %v1647 = vrot.slane %v1643, 4
    %v1649 = vadd.f32 %v160, %v1647
    %v1650 = vrot.slane %v1560, 4
    %1651 = vrot.lane.b32.xlu0 %v1650, 32
    %v1652 = vpop.permute.xlu0 %1651
    %v1653 = vsel %vm259, %v1652, 0
    %1655 = vmatprep.subr.mxu0 0.0
    %1656 = vmatpush1.msra.mxu0 %v255
    %1657 = vmatprep.subr.mxu0 0.0
    %1658 = vmatpush1.msra.mxu0 %v256
    %1659 = vmatprep.subr.mxu0 0.0
    %1660 = vmatpush1.msra.mxu0 %v257
    %1661 = vmatprep.subr.mxu0 0.0
    %1662 = vmatpush1.msra.mxu0 %v258
    %1663 = vmatprep.subr.mxu0 0.0
    %1664 = vmatpush1.msra.mxu0 0.0
    %1665 = vmatprep.subr.mxu0 0.0
    %1666 = vmatpush1.msra.mxu0 0.0
    %1667 = vmatprep.subr.mxu0 0.0
    %1668 = vmatpush1.msra.mxu0 0.0
    %1669 = vmatprep.subr.mxu0 0.0
    %1670 = vmatpush1.msra.mxu0 0.0
    %1671 = vmatprep.subr.mxu0 0.0
    %1672 = vmatpush1.msra.mxu0 0.0
    %1673 = vmatprep.subr.mxu0 0.0
    %1674 = vmatpush1.msra.mxu0 0.0
    %1675 = vmatprep.subr.mxu0 0.0
    %1676 = vmatpush1.msra.mxu0 0.0
    %1677 = vmatprep.subr.mxu0 0.0
    %1678 = vmatpush1.msra.mxu0 0.0
    %1679 = vmatprep.subr.mxu0 0.0
    %1680 = vmatpush1.msra.mxu0 0.0
    %1681 = vmatprep.subr.mxu0 0.0
    %1682 = vmatpush1.msra.mxu0 0.0
    %1683 = vmatprep.subr.mxu0 0.0
    %1684 = vmatpush1.msra.mxu0 0.0
    %1685 = vmatprep.subr.mxu0 0.0
    %1686 = vmatpush1.msra.mxu0 0.0
    %1687 = vmatprep.subr.mxu0 0.0
    %1688 = vmatpush1.msra.mxu0 0.0
    %1689 = vmatprep.subr.mxu0 0.0
    %1690 = vmatpush1.msra.mxu0 0.0
    %1691 = vmatprep.subr.mxu0 0.0
    %1692 = vmatpush1.msra.mxu0 0.0
    %1693 = vmatprep.subr.mxu0 0.0
    %1694 = vmatpush1.msra.mxu0 0.0
    %1695 = vmatprep.subr.mxu0 0.0
    %1696 = vmatpush1.msra.mxu0 0.0
    %1697 = vmatprep.subr.mxu0 0.0
    %1698 = vmatpush1.msra.mxu0 0.0
    %1699 = vmatprep.subr.mxu0 0.0
    %1700 = vmatpush1.msra.mxu0 0.0
    %1701 = vmatprep.subr.mxu0 0.0
    %1702 = vmatpush1.msra.mxu0 0.0
    %1703 = vmatprep.subr.mxu0 0.0
    %1704 = vmatpush1.msra.mxu0 0.0
    %1705 = vmatprep.subr.mxu0 0.0
    %1706 = vmatpush1.msra.mxu0 0.0
    %1707 = vmatprep.subr.mxu0 0.0
    %1708 = vmatpush1.msra.mxu0 0.0
    %1709 = vmatprep.subr.mxu0 0.0
    %1710 = vmatpush1.msra.mxu0 0.0
    %1711 = vmatprep.subr.mxu0 0.0
    %1712 = vmatpush1.msra.mxu0 0.0
    %1713 = vmatprep.subr.mxu0 0.0
    %1714 = vmatpush1.msra.mxu0 0.0
    %1715 = vmatprep.subr.mxu0 0.0
    %1716 = vmatpush1.msra.mxu0 0.0
    %1717 = vmatprep.subr.mxu0 0.0
    %1718 = vmatpush1.msra.mxu0 0.0
    %1719 = vmatprep.mubr.f32.mxu0 0.0
    %1720 = vmatmul.mubr.f32.gmra.mrb[0].mxu0 %v1653
    %v1721 = vpop.f32.mrb[0].mxu0
    %v1722 = vadd.f32 0.0, %v1721
    %v1723 = vpop.f32.mrb[0].mxu0
    %1724 = vdwg.mxu0
    %v1726 = vrot.slane %v1722, 6
    %v1728 = vadd.f32 %v242, %v1726
    %v1729 = vxor.u32 %v1649, 2147483648
    %v1730 = vmul.f32 %v1729, 1.442695
    %v1731 = vpow.pop %v1730
    %v1732 = vadd.f32 %v1731, 1.0
    %v1733 = vrcp.pop %v1732
    %v1734 = vmul.f32 1.0, %v1733
    %v1735 = vtanh.pop %v1649
    %v1737 = vrot.slane %v1527, 6
    %v1739 = vmul.f32 %v1734, %v1737
    %1741 = vrot.lane.b32.xlu0 %v1735, 64
    %v1742 = vpop.permute.xlu0 %1741
    %v1744 = vmul.f32 %v1734, %v1742
    %1746 = vrot.lane.b32.xlu0 %v1744, 32
    %v1747 = vpop.permute.xlu0 %1746
    %v1749 = vadd.f32 %v1739, %v1747
    %v1750 = vtanh.pop %v1749
    %1752 = vrot.lane.b32.xlu0 %v1750, 64
    %v1753 = vpop.permute.xlu0 %1752
    %v1755 = vmul.f32 %v1734, %v1753
    %v1756 = vxor.u32 %v1728, 2147483648
    %v1757 = vmul.f32 %v1756, 1.442695
    %v1758 = vpow.pop %v1757
    %v1759 = vadd.f32 %v1758, 1.0
    %v1760 = vrcp.pop %v1759
    %v1761 = vmul.f32 1.0, %v1760
    %v1762 = vtanh.pop %v1728
    %v1764 = vrot.slane %v1554, 2
    %v1766 = vmul.f32 %v1761, %v1764
    %1768 = vrot.lane.b32.xlu0 %v1762, 64
    %v1769 = vpop.permute.xlu0 %1768
    %v1771 = vmul.f32 %v1761, %v1769
    %1773 = vrot.lane.b32.xlu0 %v1771, 32
    %v1774 = vpop.permute.xlu0 %1773
    %v1776 = vadd.f32 %v1766, %v1774
    %v1777 = vtanh.pop %v1776
    %1779 = vrot.lane.b32.xlu0 %v1777, 64
    %v1780 = vpop.permute.xlu0 %1779
    %v1782 = vmul.f32 %v1761, %v1780
    %1784 = vrot.lane.b32.xlu0 %v1755, 32
    %v1785 = vpop.permute.xlu0 %1784
    %1787 = vst.msk [vmem:[#allocation2 + $0x8] sm:$0x30] %vm905, %v1785
    %1789 = vrot.lane.b32.xlu0 %v1782, 64
    %v1790 = vpop.permute.xlu0 %1789
    %1792 = vst.msk [vmem:[#allocation2] sm:$0xc] %vm911, %v1790
    %v1793 = vrot.slane %v1755, 4
    %1794 = vrot.lane.b32.xlu0 %v1793, 32
    %v1795 = vpop.permute.xlu0 %1794
    %v1796 = vsel %vm259, %v1795, 0
    %1798 = vmatprep.subr.mxu0 0.0
    %1799 = vmatpush1.msra.mxu0 %v250
    %1800 = vmatprep.subr.mxu0 0.0
    %1801 = vmatpush1.msra.mxu0 %v251
    %1802 = vmatprep.subr.mxu0 0.0
    %1803 = vmatpush1.msra.mxu0 %v252
    %1804 = vmatprep.subr.mxu0 0.0
    %1805 = vmatpush1.msra.mxu0 %v253
    %1806 = vmatprep.subr.mxu0 0.0
    %1807 = vmatpush1.msra.mxu0 0.0
    %1808 = vmatprep.subr.mxu0 0.0
    %1809 = vmatpush1.msra.mxu0 0.0
    %1810 = vmatprep.subr.mxu0 0.0
    %1811 = vmatpush1.msra.mxu0 0.0
    %1812 = vmatprep.subr.mxu0 0.0
    %1813 = vmatpush1.msra.mxu0 0.0
    %1814 = vmatprep.subr.mxu0 0.0
    %1815 = vmatpush1.msra.mxu0 0.0
    %1816 = vmatprep.subr.mxu0 0.0
    %1817 = vmatpush1.msra.mxu0 0.0
    %1818 = vmatprep.subr.mxu0 0.0
    %1819 = vmatpush1.msra.mxu0 0.0
    %1820 = vmatprep.subr.mxu0 0.0
    %1821 = vmatpush1.msra.mxu0 0.0
    %1822 = vmatprep.subr.mxu0 0.0
    %1823 = vmatpush1.msra.mxu0 0.0
    %1824 = vmatprep.subr.mxu0 0.0
    %1825 = vmatpush1.msra.mxu0 0.0
    %1826 = vmatprep.subr.mxu0 0.0
    %1827 = vmatpush1.msra.mxu0 0.0
    %1828 = vmatprep.subr.mxu0 0.0
    %1829 = vmatpush1.msra.mxu0 0.0
    %1830 = vmatprep.subr.mxu0 0.0
    %1831 = vmatpush1.msra.mxu0 0.0
    %1832 = vmatprep.subr.mxu0 0.0
    %1833 = vmatpush1.msra.mxu0 0.0
    %1834 = vmatprep.subr.mxu0 0.0
    %1835 = vmatpush1.msra.mxu0 0.0
    %1836 = vmatprep.subr.mxu0 0.0
    %1837 = vmatpush1.msra.mxu0 0.0
    %1838 = vmatprep.subr.mxu0 0.0
    %1839 = vmatpush1.msra.mxu0 0.0
    %1840 = vmatprep.subr.mxu0 0.0
    %1841 = vmatpush1.msra.mxu0 0.0
    %1842 = vmatprep.subr.mxu0 0.0
    %1843 = vmatpush1.msra.mxu0 0.0
    %1844 = vmatprep.subr.mxu0 0.0
    %1845 = vmatpush1.msra.mxu0 0.0
    %1846 = vmatprep.subr.mxu0 0.0
    %1847 = vmatpush1.msra.mxu0 0.0
    %1848 = vmatprep.subr.mxu0 0.0
    %1849 = vmatpush1.msra.mxu0 0.0
    %1850 = vmatprep.subr.mxu0 0.0
    %1851 = vmatpush1.msra.mxu0 0.0
    %1852 = vmatprep.subr.mxu0 0.0
    %1853 = vmatpush1.msra.mxu0 0.0
    %1854 = vmatprep.subr.mxu0 0.0
    %1855 = vmatpush1.msra.mxu0 0.0
    %1856 = vmatprep.subr.mxu0 0.0
    %1857 = vmatpush1.msra.mxu0 0.0
    %1858 = vmatprep.subr.mxu0 0.0
    %1859 = vmatpush1.msra.mxu0 0.0
    %1860 = vmatprep.subr.mxu0 0.0
    %1861 = vmatpush1.msra.mxu0 0.0
    %1862 = vmatprep.mubr.f32.mxu0 0.0
    %1863 = vmatmul.mubr.f32.gmra.mrb[0].mxu0 %v1796
    %v1864 = vpop.f32.mrb[0].mxu0
    %v1865 = vadd.f32 0.0, %v1864
    %v1866 = vpop.f32.mrb[0].mxu0
    %1867 = vdwg.mxu0
    %v1869 = vrot.slane %v1865, 2
    %v1871 = vadd.f32 %v160, %v1869
    %v1872 = vrot.slane %v1782, 2
    %1873 = vrot.lane.b32.xlu0 %v1872, 32
    %v1874 = vpop.permute.xlu0 %1873
    %v1875 = vsel %vm259, %v1874, 0
    %1877 = vmatprep.subr.mxu0 0.0
    %1878 = vmatpush1.msra.mxu0 %v255
    %1879 = vmatprep.subr.mxu0 0.0
    %1880 = vmatpush1.msra.mxu0 %v256
    %1881 = vmatprep.subr.mxu0 0.0
    %1882 = vmatpush1.msra.mxu0 %v257
    %1883 = vmatprep.subr.mxu0 0.0
    %1884 = vmatpush1.msra.mxu0 %v258
    %1885 = vmatprep.subr.mxu0 0.0
    %1886 = vmatpush1.msra.mxu0 0.0
    %1887 = vmatprep.subr.mxu0 0.0
    %1888 = vmatpush1.msra.mxu0 0.0
    %1889 = vmatprep.subr.mxu0 0.0
    %1890 = vmatpush1.msra.mxu0 0.0
    %1891 = vmatprep.subr.mxu0 0.0
    %1892 = vmatpush1.msra.mxu0 0.0
    %1893 = vmatprep.subr.mxu0 0.0
    %1894 = vmatpush1.msra.mxu0 0.0
    %1895 = vmatprep.subr.mxu0 0.0
    %1896 = vmatpush1.msra.mxu0 0.0
    %1897 = vmatprep.subr.mxu0 0.0
    %1898 = vmatpush1.msra.mxu0 0.0
    %1899 = vmatprep.subr.mxu0 0.0
    %1900 = vmatpush1.msra.mxu0 0.0
    %1901 = vmatprep.subr.mxu0 0.0
    %1902 = vmatpush1.msra.mxu0 0.0
    %1903 = vmatprep.subr.mxu0 0.0
    %1904 = vmatpush1.msra.mxu0 0.0
    %1905 = vmatprep.subr.mxu0 0.0
    %1906 = vmatpush1.msra.mxu0 0.0
    %1907 = vmatprep.subr.mxu0 0.0
    %1908 = vmatpush1.msra.mxu0 0.0
    %1909 = vmatprep.subr.mxu0 0.0
    %1910 = vmatpush1.msra.mxu0 0.0
    %1911 = vmatprep.subr.mxu0 0.0
    %1912 = vmatpush1.msra.mxu0 0.0
    %1913 = vmatprep.subr.mxu0 0.0
    %1914 = vmatpush1.msra.mxu0 0.0
    %1915 = vmatprep.subr.mxu0 0.0
    %1916 = vmatpush1.msra.mxu0 0.0
    %1917 = vmatprep.subr.mxu0 0.0
    %1918 = vmatpush1.msra.mxu0 0.0
    %1919 = vmatprep.subr.mxu0 0.0
    %1920 = vmatpush1.msra.mxu0 0.0
    %1921 = vmatprep.subr.mxu0 0.0
    %1922 = vmatpush1.msra.mxu0 0.0
    %1923 = vmatprep.subr.mxu0 0.0
    %1924 = vmatpush1.msra.mxu0 0.0
    %1925 = vmatprep.subr.mxu0 0.0
    %1926 = vmatpush1.msra.mxu0 0.0
    %1927 = vmatprep.subr.mxu0 0.0
    %1928 = vmatpush1.msra.mxu0 0.0
    %1929 = vmatprep.subr.mxu0 0.0
    %1930 = vmatpush1.msra.mxu0 0.0
    %1931 = vmatprep.subr.mxu0 0.0
    %1932 = vmatpush1.msra.mxu0 0.0
    %1933 = vmatprep.subr.mxu0 0.0
    %1934 = vmatpush1.msra.mxu0 0.0
    %1935 = vmatprep.subr.mxu0 0.0
    %1936 = vmatpush1.msra.mxu0 0.0
    %1937 = vmatprep.subr.mxu0 0.0
    %1938 = vmatpush1.msra.mxu0 0.0
    %1939 = vmatprep.subr.mxu0 0.0
    %1940 = vmatpush1.msra.mxu0 0.0
    %1941 = vmatprep.mubr.f32.mxu0 0.0
    %1942 = vmatmul.mubr.f32.gmra.mrb[0].mxu0 %v1875
    %v1943 = vpop.f32.mrb[0].mxu0
    %v1944 = vadd.f32 0.0, %v1943
    %v1945 = vpop.f32.mrb[0].mxu0
    %1946 = vdwg.mxu0
    %v1947 = vadd.f32 %v242, %v1944
    %v1948 = vxor.u32 %v1871, 2147483648
    %v1949 = vmul.f32 %v1948, 1.442695
    %v1950 = vpow.pop %v1949
    %v1951 = vadd.f32 %v1950, 1.0
    %v1952 = vrcp.pop %v1951
    %v1953 = vmul.f32 1.0, %v1952
    %v1954 = vtanh.pop %v1871
    %v1956 = vrot.slane %v1749, 6
    %v1958 = vmul.f32 %v1953, %v1956
    %1960 = vrot.lane.b32.xlu0 %v1954, 64
    %v1961 = vpop.permute.xlu0 %1960
    %v1963 = vmul.f32 %v1953, %v1961
    %1965 = vrot.lane.b32.xlu0 %v1963, 32
    %v1966 = vpop.permute.xlu0 %1965
    %v1968 = vadd.f32 %v1958, %v1966
    %v1969 = vtanh.pop %v1968
    %1971 = vrot.lane.b32.xlu0 %v1969, 64
    %v1972 = vpop.permute.xlu0 %1971
    %v1974 = vmul.f32 %v1953, %v1972
    %v1975 = vxor.u32 %v1947, 2147483648
    %v1976 = vmul.f32 %v1975, 1.442695
    %v1977 = vpow.pop %v1976
    %v1978 = vadd.f32 %v1977, 1.0
    %v1979 = vrcp.pop %v1978
    %v1980 = vmul.f32 1.0, %v1979
    %v1981 = vtanh.pop %v1947
    %v1983 = vrot.slane %v1776, 2
    %v1985 = vmul.f32 %v1980, %v1983
    %1987 = vrot.lane.b32.xlu0 %v1981, 64
    %v1988 = vpop.permute.xlu0 %1987
    %v1990 = vmul.f32 %v1980, %v1988
    %1992 = vrot.lane.b32.xlu0 %v1990, 32
    %v1993 = vpop.permute.xlu0 %1992
    %v1995 = vadd.f32 %v1985, %v1993
    %v1996 = vtanh.pop %v1995
    %1998 = vrot.lane.b32.xlu0 %v1996, 64
    %v1999 = vpop.permute.xlu0 %1998
    %v2001 = vmul.f32 %v1980, %v1999
    %2003 = vrot.lane.b32.xlu0 %v1974, 32
    %v2004 = vpop.permute.xlu0 %2003
    %2006 = vst.msk [vmem:[#allocation2 + $0x8] sm:$0xc0] %vm1126, %v2004
    %2008 = vrot.lane.b32.xlu0 %v2001, 64
    %v2009 = vpop.permute.xlu0 %2008
    %2011 = vst.msk [vmem:[#allocation2] sm:$0x3] %vm1132, %v2009
    %2012 = vst.msk [vmem:[#allocation9 - $0x6] sm:$0xc0] %vm1126, %v2004
    %2014 = vrot.lane.b32.xlu0 %v1968, 96
    %v2015 = vpop.permute.xlu0 %2014
    %2017 = vst.msk [vmem:[#allocation11 - $0x6] sm:$0xc0] %vm1126, %v2015
    %2018 = vrot.lane.b32.xlu0 %v2001, 32
    %v2019 = vpop.permute.xlu0 %2018
    %2021 = vst.msk [vmem:[#allocation9 + $0x2] sm:$0x3] %vm460, %v2019
    %2023 = vrot.lane.b32.xlu0 %v1995, 96
    %v2024 = vpop.permute.xlu0 %2023
    %2026 = vst.msk [vmem:[#allocation11 + $0x2] sm:$0x3] %vm460, %v2024
    %v2027 = vld [vmem:[#allocation2] sm:$0xff]
    %v2028 = vld [vmem:[#allocation2 + $0x8] sm:$0xff]
    %v2029 = vld [vmem:[#allocation3] sm:$0xff]
    %v2030 = vld [vmem:[#allocation3 + $0x8] sm:$0xff]
    %v2031 = vld [vmem:[#allocation3 + $0x10] sm:$0xff]
    %v2032 = vld [vmem:[#allocation3 + $0x18] sm:$0xff]
    %v2033 = vld [vmem:[#allocation3 + $0x20] sm:$0xff]
    %v2034 = vld [vmem:[#allocation3 + $0x28] sm:$0xff]
    %v2035 = vld [vmem:[#allocation3 + $0x30] sm:$0xff]
    %v2036 = vld [vmem:[#allocation3 + $0x38] sm:$0xff]
    %v2037 = vld [vmem:[%s4 + $0x2] sm:$0x1]
    %v2038 = vlaneseq
    %v2039 = vshrl.u32 %v2038, 7
    %v2040 = vsub.s32 0, %v2039
    %v2041 = vrot.slane %v2037, %v2040
    %vm2042 = vcmask 523264
    %v2044 = vsel %vm2042, %v2027, 0
    %v2047 = vsel %vm2042, %v2028, 0
    %2049 = vmatprep.subr.mxu0 0.0
    %2050 = vmatpush1.msra.mxu0 %v2029
    %2051 = vmatprep.subr.mxu0 0.0
    %2052 = vmatpush1.msra.mxu0 %v2030
    %2053 = vmatprep.subr.mxu0 0.0
    %2054 = vmatpush1.msra.mxu0 %v2031
    %2055 = vmatprep.subr.mxu0 0.0
    %2056 = vmatpush1.msra.mxu0 %v2032
    %2057 = vmatprep.subr.mxu0 0.0
    %2058 = vmatpush1.msra.mxu0 %v2033
    %2059 = vmatprep.subr.mxu0 0.0
    %2060 = vmatpush1.msra.mxu0 %v2034
    %2061 = vmatprep.subr.mxu0 0.0
    %2062 = vmatpush1.msra.mxu0 %v2035
    %2063 = vmatprep.subr.mxu0 0.0
    %2064 = vmatpush1.msra.mxu0 %v2036
    %2065 = vmatprep.subr.mxu0 0.0
    %2066 = vmatpush1.msra.mxu0 0.0
    %2067 = vmatprep.subr.mxu0 0.0
    %2068 = vmatpush1.msra.mxu0 0.0
    %2069 = vmatprep.subr.mxu0 0.0
    %2070 = vmatpush1.msra.mxu0 0.0
    %2071 = vmatprep.subr.mxu0 0.0
    %2072 = vmatpush1.msra.mxu0 0.0
    %2073 = vmatprep.subr.mxu0 0.0
    %2074 = vmatpush1.msra.mxu0 0.0
    %2075 = vmatprep.subr.mxu0 0.0
    %2076 = vmatpush1.msra.mxu0 0.0
    %2077 = vmatprep.subr.mxu0 0.0
    %2078 = vmatpush1.msra.mxu0 0.0
    %2079 = vmatprep.subr.mxu0 0.0
    %2080 = vmatpush1.msra.mxu0 0.0
    %2081 = vmatprep.subr.mxu0 0.0
    %2082 = vmatpush1.msra.mxu0 0.0
    %2083 = vmatprep.subr.mxu0 0.0
    %2084 = vmatpush1.msra.mxu0 0.0
    %2085 = vmatprep.subr.mxu0 0.0
    %2086 = vmatpush1.msra.mxu0 0.0
    %2087 = vmatprep.subr.mxu0 0.0
    %2088 = vmatpush1.msra.mxu0 0.0
    %2089 = vmatprep.subr.mxu0 0.0
    %2090 = vmatpush1.msra.mxu0 0.0
    %2091 = vmatprep.subr.mxu0 0.0
    %2092 = vmatpush1.msra.mxu0 0.0
    %2093 = vmatprep.subr.mxu0 0.0
    %2094 = vmatpush1.msra.mxu0 0.0
    %2095 = vmatprep.subr.mxu0 0.0
    %2096 = vmatpush1.msra.mxu0 0.0
    %2097 = vmatprep.subr.mxu0 0.0
    %2098 = vmatpush1.msra.mxu0 0.0
    %2099 = vmatprep.subr.mxu0 0.0
    %2100 = vmatpush1.msra.mxu0 0.0
    %2101 = vmatprep.subr.mxu0 0.0
    %2102 = vmatpush1.msra.mxu0 0.0
    %2103 = vmatprep.subr.mxu0 0.0
    %2104 = vmatpush1.msra.mxu0 0.0
    %2105 = vmatprep.subr.mxu0 0.0
    %2106 = vmatpush1.msra.mxu0 0.0
    %2107 = vmatprep.subr.mxu0 0.0
    %2108 = vmatpush1.msra.mxu0 0.0
    %2109 = vmatprep.subr.mxu0 0.0
    %2110 = vmatpush1.msra.mxu0 0.0
    %2111 = vmatprep.subr.mxu0 0.0
    %2112 = vmatpush1.msra.mxu0 0.0
    %2113 = vmatprep.mubr.f32.mxu0 0.0
    %2114 = vmatmul.mubr.f32.gmra.mrb[0].mxu0 %v2044
    %v2115 = vpop.f32.mrb[0].mxu0
    %v2116 = vadd.f32 %v2041, %v2115
    %v2117 = vpop.f32.mrb[0].mxu0
    %2118 = vmatprep.mubr.f32.mxu0 0.0
    %2119 = vmatmul.mubr.f32.gmra.mrb[0].mxu0 %v2047
    %v2120 = vpop.f32.mrb[0].mxu0
    %v2121 = vadd.f32 %v2041, %v2120
    %v2122 = vpop.f32.mrb[0].mxu0
    %2123 = vdwg.mxu0
    %s2124 = scalar_lea.vmem [#allocation3], 64
    %v2125 = vld [vmem:[%s2124] sm:$0xff]
    %v2126 = vld [vmem:[%s2124 + $0x8] sm:$0xff]
    %v2127 = vld [vmem:[%s2124 + $0x10] sm:$0xff]
    %v2128 = vld [vmem:[%s2124 + $0x18] sm:$0xff]
    %v2129 = vld [vmem:[%s2124 + $0x20] sm:$0xff]
    %v2130 = vld [vmem:[%s2124 + $0x28] sm:$0xff]
    %v2131 = vld [vmem:[%s2124 + $0x30] sm:$0xff]
    %v2132 = vld [vmem:[%s2124 + $0x38] sm:$0xff]
    %v2133 = vld [vmem:[%s4 + $0x3] sm:$0x1]
    %v2134 = vlaneseq
    %v2135 = vshrl.u32 %v2134, 7
    %v2136 = vsub.s32 0, %v2135
    %v2137 = vrot.slane %v2133, %v2136
    %2138 = vmatprep.subr.mxu0 0.0
    %2139 = vmatpush1.msra.mxu0 %v2125
    %2140 = vmatprep.subr.mxu0 0.0
    %2141 = vmatpush1.msra.mxu0 %v2126
    %2142 = vmatprep.subr.mxu0 0.0
    %2143 = vmatpush1.msra.mxu0 %v2127
    %2144 = vmatprep.subr.mxu0 0.0
    %2145 = vmatpush1.msra.mxu0 %v2128
    %2146 = vmatprep.subr.mxu0 0.0
    %2147 = vmatpush1.msra.mxu0 %v2129
    %2148 = vmatprep.subr.mxu0 0.0
    %2149 = vmatpush1.msra.mxu0 %v2130
    %2150 = vmatprep.subr.mxu0 0.0
    %2151 = vmatpush1.msra.mxu0 %v2131
    %2152 = vmatprep.subr.mxu0 0.0
    %2153 = vmatpush1.msra.mxu0 %v2132
    %2154 = vmatprep.subr.mxu0 0.0
    %2155 = vmatpush1.msra.mxu0 0.0
    %2156 = vmatprep.subr.mxu0 0.0
    %2157 = vmatpush1.msra.mxu0 0.0
    %2158 = vmatprep.subr.mxu0 0.0
    %2159 = vmatpush1.msra.mxu0 0.0
    %2160 = vmatprep.subr.mxu0 0.0
    %2161 = vmatpush1.msra.mxu0 0.0
    %2162 = vmatprep.subr.mxu0 0.0
    %2163 = vmatpush1.msra.mxu0 0.0
    %2164 = vmatprep.subr.mxu0 0.0
    %2165 = vmatpush1.msra.mxu0 0.0
    %2166 = vmatprep.subr.mxu0 0.0
    %2167 = vmatpush1.msra.mxu0 0.0
    %2168 = vmatprep.subr.mxu0 0.0
    %2169 = vmatpush1.msra.mxu0 0.0
    %2170 = vmatprep.subr.mxu0 0.0
    %2171 = vmatpush1.msra.mxu0 0.0
    %2172 = vmatprep.subr.mxu0 0.0
    %2173 = vmatpush1.msra.mxu0 0.0
    %2174 = vmatprep.subr.mxu0 0.0
    %2175 = vmatpush1.msra.mxu0 0.0
    %2176 = vmatprep.subr.mxu0 0.0
    %2177 = vmatpush1.msra.mxu0 0.0
    %2178 = vmatprep.subr.mxu0 0.0
    %2179 = vmatpush1.msra.mxu0 0.0
    %2180 = vmatprep.subr.mxu0 0.0
    %2181 = vmatpush1.msra.mxu0 0.0
    %2182 = vmatprep.subr.mxu0 0.0
    %2183 = vmatpush1.msra.mxu0 0.0
    %2184 = vmatprep.subr.mxu0 0.0
    %2185 = vmatpush1.msra.mxu0 0.0
    %2186 = vmatprep.subr.mxu0 0.0
    %2187 = vmatpush1.msra.mxu0 0.0
    %2188 = vmatprep.subr.mxu0 0.0
    %2189 = vmatpush1.msra.mxu0 0.0
    %2190 = vmatprep.subr.mxu0 0.0
    %2191 = vmatpush1.msra.mxu0 0.0
    %2192 = vmatprep.subr.mxu0 0.0
    %2193 = vmatpush1.msra.mxu0 0.0
    %2194 = vmatprep.subr.mxu0 0.0
    %2195 = vmatpush1.msra.mxu0 0.0
    %2196 = vmatprep.subr.mxu0 0.0
    %2197 = vmatpush1.msra.mxu0 0.0
    %2198 = vmatprep.subr.mxu0 0.0
    %2199 = vmatpush1.msra.mxu0 0.0
    %2200 = vmatprep.subr.mxu0 0.0
    %2201 = vmatpush1.msra.mxu0 0.0
    %2202 = vmatprep.mubr.f32.mxu0 0.0
    %2203 = vmatmul.mubr.f32.gmra.mrb[0].mxu0 %v2044
    %v2204 = vpop.f32.mrb[0].mxu0
    %v2205 = vadd.f32 %v2137, %v2204
    %v2206 = vpop.f32.mrb[0].mxu0
    %2207 = vmatprep.mubr.f32.mxu0 0.0
    %2208 = vmatmul.mubr.f32.gmra.mrb[0].mxu0 %v2047
    %v2209 = vpop.f32.mrb[0].mxu0
    %v2210 = vadd.f32 %v2137, %v2209
    %v2211 = vpop.f32.mrb[0].mxu0
    %2212 = vdwg.mxu0
    %s2213 = scalar_lea.vmem [#allocation6], 64
    %v2214 = vld [vmem:[%s2213] sm:$0xff]
    %v2215 = vld [vmem:[%s2213 + $0x8] sm:$0xff]
    %v2216 = vld [vmem:[%s2213 + $0x10] sm:$0xff]
    %v2217 = vld [vmem:[%s2213 + $0x18] sm:$0xff]
    %s2218 = scalar_lea.vmem [#allocation6], 96
    %v2219 = vld [vmem:[%s2218] sm:$0xff]
    %v2220 = vld [vmem:[%s2218 + $0x8] sm:$0xff]
    %v2221 = vld [vmem:[%s2218 + $0x10] sm:$0xff]
    %v2222 = vld [vmem:[%s2218 + $0x18] sm:$0xff]
    %2223 = vmatprep.subr.mxu0 0.0
    %2224 = vmatpush1.msra.mxu0 %v2214
    %2225 = vmatprep.subr.mxu0 0.0
    %2226 = vmatpush1.msra.mxu0 %v2215
    %2227 = vmatprep.subr.mxu0 0.0
    %2228 = vmatpush1.msra.mxu0 %v2216
    %2229 = vmatprep.subr.mxu0 0.0
    %2230 = vmatpush1.msra.mxu0 %v2217
    %2231 = vmatprep.subr.mxu0 0.0
    %2232 = vmatpush1.msra.mxu0 0.0
    %2233 = vmatprep.subr.mxu0 0.0
    %2234 = vmatpush1.msra.mxu0 0.0
    %2235 = vmatprep.subr.mxu0 0.0
    %2236 = vmatpush1.msra.mxu0 0.0
    %2237 = vmatprep.subr.mxu0 0.0
    %2238 = vmatpush1.msra.mxu0 0.0
    %2239 = vmatprep.subr.mxu0 0.0
    %2240 = vmatpush1.msra.mxu0 0.0
    %2241 = vmatprep.subr.mxu0 0.0
    %2242 = vmatpush1.msra.mxu0 0.0
    %2243 = vmatprep.subr.mxu0 0.0
    %2244 = vmatpush1.msra.mxu0 0.0
    %2245 = vmatprep.subr.mxu0 0.0
    %2246 = vmatpush1.msra.mxu0 0.0
    %2247 = vmatprep.subr.mxu0 0.0
    %2248 = vmatpush1.msra.mxu0 0.0
    %2249 = vmatprep.subr.mxu0 0.0
    %2250 = vmatpush1.msra.mxu0 0.0
    %2251 = vmatprep.subr.mxu0 0.0
    %2252 = vmatpush1.msra.mxu0 0.0
    %2253 = vmatprep.subr.mxu0 0.0
    %2254 = vmatpush1.msra.mxu0 0.0
    %2255 = vmatprep.subr.mxu0 0.0
    %2256 = vmatpush1.msra.mxu0 0.0
    %2257 = vmatprep.subr.mxu0 0.0
    %2258 = vmatpush1.msra.mxu0 0.0
    %2259 = vmatprep.subr.mxu0 0.0
    %2260 = vmatpush1.msra.mxu0 0.0
    %2261 = vmatprep.subr.mxu0 0.0
    %2262 = vmatpush1.msra.mxu0 0.0
    %2263 = vmatprep.subr.mxu0 0.0
    %2264 = vmatpush1.msra.mxu0 0.0
    %2265 = vmatprep.subr.mxu0 0.0
    %2266 = vmatpush1.msra.mxu0 0.0
    %2267 = vmatprep.subr.mxu0 0.0
    %2268 = vmatpush1.msra.mxu0 0.0
    %2269 = vmatprep.subr.mxu0 0.0
    %2270 = vmatpush1.msra.mxu0 0.0
    %2271 = vmatprep.subr.mxu0 0.0
    %2272 = vmatpush1.msra.mxu0 0.0
    %2273 = vmatprep.subr.mxu0 0.0
    %2274 = vmatpush1.msra.mxu0 0.0
    %2275 = vmatprep.subr.mxu0 0.0
    %2276 = vmatpush1.msra.mxu0 0.0
    %2277 = vmatprep.subr.mxu0 0.0
    %2278 = vmatpush1.msra.mxu0 0.0
    %2279 = vmatprep.subr.mxu0 0.0
    %2280 = vmatpush1.msra.mxu0 0.0
    %2281 = vmatprep.subr.mxu0 0.0
    %2282 = vmatpush1.msra.mxu0 0.0
    %2283 = vmatprep.subr.mxu0 0.0
    %2284 = vmatpush1.msra.mxu0 0.0
    %2285 = vmatprep.subr.mxu0 0.0
    %2286 = vmatpush1.msra.mxu0 0.0
    %2287 = vmatprep.mubr.f32.mxu0 0.0
    %2288 = vmatmul.mubr.f32.gmra.mrb[0].mxu0 %v261
    %v2289 = vpop.f32.mrb[0].mxu0
    %v2290 = vadd.f32 0.0, %v2289
    %v2291 = vpop.f32.mrb[0].mxu0
    %2292 = vdwg.mxu0
    %v2293 = vadd.f32 %v2116, %v2290
    %2294 = vmatprep.subr.mxu0 0.0
    %2295 = vmatpush1.msra.mxu0 %v2219
    %2296 = vmatprep.subr.mxu0 0.0
    %2297 = vmatpush1.msra.mxu0 %v2220
    %2298 = vmatprep.subr.mxu0 0.0
    %2299 = vmatpush1.msra.mxu0 %v2221
    %2300 = vmatprep.subr.mxu0 0.0
    %2301 = vmatpush1.msra.mxu0 %v2222
    %2302 = vmatprep.subr.mxu0 0.0
    %2303 = vmatpush1.msra.mxu0 0.0
    %2304 = vmatprep.subr.mxu0 0.0
    %2305 = vmatpush1.msra.mxu0 0.0
    %2306 = vmatprep.subr.mxu0 0.0
    %2307 = vmatpush1.msra.mxu0 0.0
    %2308 = vmatprep.subr.mxu0 0.0
    %2309 = vmatpush1.msra.mxu0 0.0
    %2310 = vmatprep.subr.mxu0 0.0
    %2311 = vmatpush1.msra.mxu0 0.0
    %2312 = vmatprep.subr.mxu0 0.0
    %2313 = vmatpush1.msra.mxu0 0.0
    %2314 = vmatprep.subr.mxu0 0.0
    %2315 = vmatpush1.msra.mxu0 0.0
    %2316 = vmatprep.subr.mxu0 0.0
    %2317 = vmatpush1.msra.mxu0 0.0
    %2318 = vmatprep.subr.mxu0 0.0
    %2319 = vmatpush1.msra.mxu0 0.0
    %2320 = vmatprep.subr.mxu0 0.0
    %2321 = vmatpush1.msra.mxu0 0.0
    %2322 = vmatprep.subr.mxu0 0.0
    %2323 = vmatpush1.msra.mxu0 0.0
    %2324 = vmatprep.subr.mxu0 0.0
    %2325 = vmatpush1.msra.mxu0 0.0
    %2326 = vmatprep.subr.mxu0 0.0
    %2327 = vmatpush1.msra.mxu0 0.0
    %2328 = vmatprep.subr.mxu0 0.0
    %2329 = vmatpush1.msra.mxu0 0.0
    %2330 = vmatprep.subr.mxu0 0.0
    %2331 = vmatpush1.msra.mxu0 0.0
    %2332 = vmatprep.subr.mxu0 0.0
    %2333 = vmatpush1.msra.mxu0 0.0
    %2334 = vmatprep.subr.mxu0 0.0
    %2335 = vmatpush1.msra.mxu0 0.0
    %2336 = vmatprep.subr.mxu0 0.0
    %2337 = vmatpush1.msra.mxu0 0.0
    %2338 = vmatprep.subr.mxu0 0.0
    %2339 = vmatpush1.msra.mxu0 0.0
    %2340 = vmatprep.subr.mxu0 0.0
    %2341 = vmatpush1.msra.mxu0 0.0
    %2342 = vmatprep.subr.mxu0 0.0
    %2343 = vmatpush1.msra.mxu0 0.0
    %2344 = vmatprep.subr.mxu0 0.0
    %2345 = vmatpush1.msra.mxu0 0.0
    %2346 = vmatprep.subr.mxu0 0.0
    %2347 = vmatpush1.msra.mxu0 0.0
    %2348 = vmatprep.subr.mxu0 0.0
    %2349 = vmatpush1.msra.mxu0 0.0
    %2350 = vmatprep.subr.mxu0 0.0
    %2351 = vmatpush1.msra.mxu0 0.0
    %2352 = vmatprep.subr.mxu0 0.0
    %2353 = vmatpush1.msra.mxu0 0.0
    %2354 = vmatprep.subr.mxu0 0.0
    %2355 = vmatpush1.msra.mxu0 0.0
    %2356 = vmatprep.subr.mxu0 0.0
    %2357 = vmatpush1.msra.mxu0 0.0
    %2358 = vmatprep.mubr.f32.mxu0 0.0
    %2359 = vmatmul.mubr.f32.gmra.mrb[0].mxu0 %v261
    %v2360 = vpop.f32.mrb[0].mxu0
    %v2361 = vadd.f32 0.0, %v2360
    %v2362 = vpop.f32.mrb[0].mxu0
    %2363 = vdwg.mxu0
    %v2365 = vrot.slane %v2361, 2
    %v2367 = vadd.f32 %v2210, %v2365
    %v2368 = vxor.u32 %v2293, 2147483648
    %v2369 = vmul.f32 %v2368, 1.442695
    %v2370 = vpow.pop %v2369
    %v2371 = vadd.f32 %v2370, 1.0
    %v2372 = vrcp.pop %v2371
    %v2373 = vmul.f32 1.0, %v2372
    %v2374 = vtanh.pop %v2293
    %v2375 = vmul.f32 %v2373, 0.0
    %2377 = vrot.lane.b32.xlu0 %v2374, 64
    %v2378 = vpop.permute.xlu0 %2377
    %v2380 = vmul.f32 %v2373, %v2378
    %2382 = vrot.lane.b32.xlu0 %v2380, 32
    %v2383 = vpop.permute.xlu0 %2382
    %v2385 = vadd.f32 %v2375, %v2383
    %v2386 = vtanh.pop %v2385
    %2388 = vrot.lane.b32.xlu0 %v2386, 64
    %v2389 = vpop.permute.xlu0 %2388
    %v2391 = vmul.f32 %v2373, %v2389
    %v2392 = vxor.u32 %v2367, 2147483648
    %v2393 = vmul.f32 %v2392, 1.442695
    %v2394 = vpow.pop %v2393
    %v2395 = vadd.f32 %v2394, 1.0
    %v2396 = vrcp.pop %v2395
    %v2397 = vmul.f32 1.0, %v2396
    %v2398 = vtanh.pop %v2367
    %v2399 = vmul.f32 %v2397, 0.0
    %2401 = vrot.lane.b32.xlu0 %v2398, 64
    %v2402 = vpop.permute.xlu0 %2401
    %v2404 = vmul.f32 %v2397, %v2402
    %2406 = vrot.lane.b32.xlu0 %v2404, 32
    %v2407 = vpop.permute.xlu0 %2406
    %v2409 = vadd.f32 %v2399, %v2407
    %v2410 = vtanh.pop %v2409
    %2412 = vrot.lane.b32.xlu0 %v2410, 64
    %v2413 = vpop.permute.xlu0 %2412
    %v2415 = vmul.f32 %v2397, %v2413
    %2417 = vrot.lane.b32.xlu0 %v2391, 32
    %v2418 = vpop.permute.xlu0 %2417
    %2420 = vst.msk [vmem:[#allocation8] sm:$0x3] %vm460, %v2418
    %2422 = vrot.lane.b32.xlu0 %v2415, 64
    %v2423 = vpop.permute.xlu0 %2422
    %2425 = vst.msk [vmem:[#allocation8 + $0x8] sm:$0xc0] %vm466, %v2423
    %v2426 = vsel %vm259, %v2418, 0
    %2428 = vmatprep.subr.mxu0 0.0
    %2429 = vmatpush1.msra.mxu0 %v2214
    %2430 = vmatprep.subr.mxu0 0.0
    %2431 = vmatpush1.msra.mxu0 %v2215
    %2432 = vmatprep.subr.mxu0 0.0
    %2433 = vmatpush1.msra.mxu0 %v2216
    %2434 = vmatprep.subr.mxu0 0.0
    %2435 = vmatpush1.msra.mxu0 %v2217
    %2436 = vmatprep.subr.mxu0 0.0
    %2437 = vmatpush1.msra.mxu0 0.0
    %2438 = vmatprep.subr.mxu0 0.0
    %2439 = vmatpush1.msra.mxu0 0.0
    %2440 = vmatprep.subr.mxu0 0.0
    %2441 = vmatpush1.msra.mxu0 0.0
    %2442 = vmatprep.subr.mxu0 0.0
    %2443 = vmatpush1.msra.mxu0 0.0
    %2444 = vmatprep.subr.mxu0 0.0
    %2445 = vmatpush1.msra.mxu0 0.0
    %2446 = vmatprep.subr.mxu0 0.0
    %2447 = vmatpush1.msra.mxu0 0.0
    %2448 = vmatprep.subr.mxu0 0.0
    %2449 = vmatpush1.msra.mxu0 0.0
    %2450 = vmatprep.subr.mxu0 0.0
    %2451 = vmatpush1.msra.mxu0 0.0
    %2452 = vmatprep.subr.mxu0 0.0
    %2453 = vmatpush1.msra.mxu0 0.0
    %2454 = vmatprep.subr.mxu0 0.0
    %2455 = vmatpush1.msra.mxu0 0.0
    %2456 = vmatprep.subr.mxu0 0.0
    %2457 = vmatpush1.msra.mxu0 0.0
    %2458 = vmatprep.subr.mxu0 0.0
    %2459 = vmatpush1.msra.mxu0 0.0
    %2460 = vmatprep.subr.mxu0 0.0
    %2461 = vmatpush1.msra.mxu0 0.0
    %2462 = vmatprep.subr.mxu0 0.0
    %2463 = vmatpush1.msra.mxu0 0.0
    %2464 = vmatprep.subr.mxu0 0.0
    %2465 = vmatpush1.msra.mxu0 0.0
    %2466 = vmatprep.subr.mxu0 0.0
    %2467 = vmatpush1.msra.mxu0 0.0
    %2468 = vmatprep.subr.mxu0 0.0
    %2469 = vmatpush1.msra.mxu0 0.0
    %2470 = vmatprep.subr.mxu0 0.0
    %2471 = vmatpush1.msra.mxu0 0.0
    %2472 = vmatprep.subr.mxu0 0.0
    %2473 = vmatpush1.msra.mxu0 0.0
    %2474 = vmatprep.subr.mxu0 0.0
    %2475 = vmatpush1.msra.mxu0 0.0
    %2476 = vmatprep.subr.mxu0 0.0
    %2477 = vmatpush1.msra.mxu0 0.0
    %2478 = vmatprep.subr.mxu0 0.0
    %2479 = vmatpush1.msra.mxu0 0.0
    %2480 = vmatprep.subr.mxu0 0.0
    %2481 = vmatpush1.msra.mxu0 0.0
    %2482 = vmatprep.subr.mxu0 0.0
    %2483 = vmatpush1.msra.mxu0 0.0
    %2484 = vmatprep.subr.mxu0 0.0
    %2485 = vmatpush1.msra.mxu0 0.0
    %2486 = vmatprep.subr.mxu0 0.0
    %2487 = vmatpush1.msra.mxu0 0.0
    %2488 = vmatprep.subr.mxu0 0.0
    %2489 = vmatpush1.msra.mxu0 0.0
    %2490 = vmatprep.subr.mxu0 0.0
    %2491 = vmatpush1.msra.mxu0 0.0
    %2492 = vmatprep.mubr.f32.mxu0 0.0
    %2493 = vmatmul.mubr.f32.gmra.mrb[0].mxu0 %v2426
    %v2494 = vpop.f32.mrb[0].mxu0
    %v2495 = vadd.f32 0.0, %v2494
    %v2496 = vpop.f32.mrb[0].mxu0
    %2497 = vdwg.mxu0
    %v2499 = vrot.slane %v2495, 6
    %v2501 = vadd.f32 %v2116, %v2499
    %v2502 = vrot.slane %v2415, 6
    %2503 = vrot.lane.b32.xlu0 %v2502, 32
    %v2504 = vpop.permute.xlu0 %2503
    %v2505 = vsel %vm259, %v2504, 0
    %2507 = vmatprep.subr.mxu0 0.0
    %2508 = vmatpush1.msra.mxu0 %v2219
    %2509 = vmatprep.subr.mxu0 0.0
    %2510 = vmatpush1.msra.mxu0 %v2220
    %2511 = vmatprep.subr.mxu0 0.0
    %2512 = vmatpush1.msra.mxu0 %v2221
    %2513 = vmatprep.subr.mxu0 0.0
    %2514 = vmatpush1.msra.mxu0 %v2222
    %2515 = vmatprep.subr.mxu0 0.0
    %2516 = vmatpush1.msra.mxu0 0.0
    %2517 = vmatprep.subr.mxu0 0.0
    %2518 = vmatpush1.msra.mxu0 0.0
    %2519 = vmatprep.subr.mxu0 0.0
    %2520 = vmatpush1.msra.mxu0 0.0
    %2521 = vmatprep.subr.mxu0 0.0
    %2522 = vmatpush1.msra.mxu0 0.0
    %2523 = vmatprep.subr.mxu0 0.0
    %2524 = vmatpush1.msra.mxu0 0.0
    %2525 = vmatprep.subr.mxu0 0.0
    %2526 = vmatpush1.msra.mxu0 0.0
    %2527 = vmatprep.subr.mxu0 0.0
    %2528 = vmatpush1.msra.mxu0 0.0
    %2529 = vmatprep.subr.mxu0 0.0
    %2530 = vmatpush1.msra.mxu0 0.0
    %2531 = vmatprep.subr.mxu0 0.0
    %2532 = vmatpush1.msra.mxu0 0.0
    %2533 = vmatprep.subr.mxu0 0.0
    %2534 = vmatpush1.msra.mxu0 0.0
    %2535 = vmatprep.subr.mxu0 0.0
    %2536 = vmatpush1.msra.mxu0 0.0
    %2537 = vmatprep.subr.mxu0 0.0
    %2538 = vmatpush1.msra.mxu0 0.0
    %2539 = vmatprep.subr.mxu0 0.0
    %2540 = vmatpush1.msra.mxu0 0.0
    %2541 = vmatprep.subr.mxu0 0.0
    %2542 = vmatpush1.msra.mxu0 0.0
    %2543 = vmatprep.subr.mxu0 0.0
    %2544 = vmatpush1.msra.mxu0 0.0
    %2545 = vmatprep.subr.mxu0 0.0
    %2546 = vmatpush1.msra.mxu0 0.0
    %2547 = vmatprep.subr.mxu0 0.0
    %2548 = vmatpush1.msra.mxu0 0.0
    %2549 = vmatprep.subr.mxu0 0.0
    %2550 = vmatpush1.msra.mxu0 0.0
    %2551 = vmatprep.subr.mxu0 0.0
    %2552 = vmatpush1.msra.mxu0 0.0
    %2553 = vmatprep.subr.mxu0 0.0
    %2554 = vmatpush1.msra.mxu0 0.0
    %2555 = vmatprep.subr.mxu0 0.0
    %2556 = vmatpush1.msra.mxu0 0.0
    %2557 = vmatprep.subr.mxu0 0.0
    %2558 = vmatpush1.msra.mxu0 0.0
    %2559 = vmatprep.subr.mxu0 0.0
    %2560 = vmatpush1.msra.mxu0 0.0
    %2561 = vmatprep.subr.mxu0 0.0
    %2562 = vmatpush1.msra.mxu0 0.0
    %2563 = vmatprep.subr.mxu0 0.0
    %2564 = vmatpush1.msra.mxu0 0.0
    %2565 = vmatprep.subr.mxu0 0.0
    %2566 = vmatpush1.msra.mxu0 0.0
    %2567 = vmatprep.subr.mxu0 0.0
    %2568 = vmatpush1.msra.mxu0 0.0
    %2569 = vmatprep.subr.mxu0 0.0
    %2570 = vmatpush1.msra.mxu0 0.0
    %2571 = vmatprep.mubr.f32.mxu0 0.0
    %2572 = vmatmul.mubr.f32.gmra.mrb[0].mxu0 %v2505
    %v2573 = vpop.f32.mrb[0].mxu0
    %v2574 = vadd.f32 0.0, %v2573
    %v2575 = vpop.f32.mrb[0].mxu0
    %2576 = vdwg.mxu0
    %v2578 = vrot.slane %v2574, 4
    %v2580 = vadd.f32 %v2210, %v2578
    %v2581 = vxor.u32 %v2501, 2147483648
    %v2582 = vmul.f32 %v2581, 1.442695
    %v2583 = vpow.pop %v2582
    %v2584 = vadd.f32 %v2583, 1.0
    %v2585 = vrcp.pop %v2584
    %v2586 = vmul.f32 1.0, %v2585
    %v2587 = vtanh.pop %v2501
    %v2589 = vrot.slane %v2385, 6
    %v2591 = vmul.f32 %v2586, %v2589
    %2593 = vrot.lane.b32.xlu0 %v2587, 64
    %v2594 = vpop.permute.xlu0 %2593
    %v2596 = vmul.f32 %v2586, %v2594
    %2598 = vrot.lane.b32.xlu0 %v2596, 32
    %v2599 = vpop.permute.xlu0 %2598
    %v2601 = vadd.f32 %v2591, %v2599
    %v2602 = vtanh.pop %v2601
    %2604 = vrot.lane.b32.xlu0 %v2602, 64
    %v2605 = vpop.permute.xlu0 %2604
    %v2607 = vmul.f32 %v2586, %v2605
    %v2608 = vxor.u32 %v2580, 2147483648
    %v2609 = vmul.f32 %v2608, 1.442695
    %v2610 = vpow.pop %v2609
    %v2611 = vadd.f32 %v2610, 1.0
    %v2612 = vrcp.pop %v2611
    %v2613 = vmul.f32 1.0, %v2612
    %v2614 = vtanh.pop %v2580
    %v2616 = vrot.slane %v2409, 2
    %v2618 = vmul.f32 %v2613, %v2616
    %2620 = vrot.lane.b32.xlu0 %v2614, 64
    %v2621 = vpop.permute.xlu0 %2620
    %v2623 = vmul.f32 %v2613, %v2621
    %2625 = vrot.lane.b32.xlu0 %v2623, 32
    %v2626 = vpop.permute.xlu0 %2625
    %v2628 = vadd.f32 %v2618, %v2626
    %v2629 = vtanh.pop %v2628
    %2631 = vrot.lane.b32.xlu0 %v2629, 64
    %v2632 = vpop.permute.xlu0 %2631
    %v2634 = vmul.f32 %v2613, %v2632
    %2636 = vrot.lane.b32.xlu0 %v2607, 32
    %v2637 = vpop.permute.xlu0 %2636
    %2639 = vst.msk [vmem:[#allocation8] sm:$0xc] %vm681, %v2637
    %2641 = vrot.lane.b32.xlu0 %v2634, 64
    %v2642 = vpop.permute.xlu0 %2641
    %2644 = vst.msk [vmem:[#allocation8 + $0x8] sm:$0x30] %vm687, %v2642
    %v2645 = vrot.slane %v2607, 2
    %2646 = vrot.lane.b32.xlu0 %v2645, 32
    %v2647 = vpop.permute.xlu0 %2646
    %v2648 = vsel %vm259, %v2647, 0
    %2650 = vmatprep.subr.mxu0 0.0
    %2651 = vmatpush1.msra.mxu0 %v2214
    %2652 = vmatprep.subr.mxu0 0.0
    %2653 = vmatpush1.msra.mxu0 %v2215
    %2654 = vmatprep.subr.mxu0 0.0
    %2655 = vmatpush1.msra.mxu0 %v2216
    %2656 = vmatprep.subr.mxu0 0.0
    %2657 = vmatpush1.msra.mxu0 %v2217
    %2658 = vmatprep.subr.mxu0 0.0
    %2659 = vmatpush1.msra.mxu0 0.0
    %2660 = vmatprep.subr.mxu0 0.0
    %2661 = vmatpush1.msra.mxu0 0.0
    %2662 = vmatprep.subr.mxu0 0.0
    %2663 = vmatpush1.msra.mxu0 0.0
    %2664 = vmatprep.subr.mxu0 0.0
    %2665 = vmatpush1.msra.mxu0 0.0
    %2666 = vmatprep.subr.mxu0 0.0
    %2667 = vmatpush1.msra.mxu0 0.0
    %2668 = vmatprep.subr.mxu0 0.0
    %2669 = vmatpush1.msra.mxu0 0.0
    %2670 = vmatprep.subr.mxu0 0.0
    %2671 = vmatpush1.msra.mxu0 0.0
    %2672 = vmatprep.subr.mxu0 0.0
    %2673 = vmatpush1.msra.mxu0 0.0
    %2674 = vmatprep.subr.mxu0 0.0
    %2675 = vmatpush1.msra.mxu0 0.0
    %2676 = vmatprep.subr.mxu0 0.0
    %2677 = vmatpush1.msra.mxu0 0.0
    %2678 = vmatprep.subr.mxu0 0.0
    %2679 = vmatpush1.msra.mxu0 0.0
    %2680 = vmatprep.subr.mxu0 0.0
    %2681 = vmatpush1.msra.mxu0 0.0
    %2682 = vmatprep.subr.mxu0 0.0
    %2683 = vmatpush1.msra.mxu0 0.0
    %2684 = vmatprep.subr.mxu0 0.0
    %2685 = vmatpush1.msra.mxu0 0.0
    %2686 = vmatprep.subr.mxu0 0.0
    %2687 = vmatpush1.msra.mxu0 0.0
    %2688 = vmatprep.subr.mxu0 0.0
    %2689 = vmatpush1.msra.mxu0 0.0
    %2690 = vmatprep.subr.mxu0 0.0
    %2691 = vmatpush1.msra.mxu0 0.0
    %2692 = vmatprep.subr.mxu0 0.0
    %2693 = vmatpush1.msra.mxu0 0.0
    %2694 = vmatprep.subr.mxu0 0.0
    %2695 = vmatpush1.msra.mxu0 0.0
    %2696 = vmatprep.subr.mxu0 0.0
    %2697 = vmatpush1.msra.mxu0 0.0
    %2698 = vmatprep.subr.mxu0 0.0
    %2699 = vmatpush1.msra.mxu0 0.0
    %2700 = vmatprep.subr.mxu0 0.0
    %2701 = vmatpush1.msra.mxu0 0.0
    %2702 = vmatprep.subr.mxu0 0.0
    %2703 = vmatpush1.msra.mxu0 0.0
    %2704 = vmatprep.subr.mxu0 0.0
    %2705 = vmatpush1.msra.mxu0 0.0
    %2706 = vmatprep.subr.mxu0 0.0
    %2707 = vmatpush1.msra.mxu0 0.0
    %2708 = vmatprep.subr.mxu0 0.0
    %2709 = vmatpush1.msra.mxu0 0.0
    %2710 = vmatprep.subr.mxu0 0.0
    %2711 = vmatpush1.msra.mxu0 0.0
    %2712 = vmatprep.subr.mxu0 0.0
    %2713 = vmatpush1.msra.mxu0 0.0
    %2714 = vmatprep.mubr.f32.mxu0 0.0
    %2715 = vmatmul.mubr.f32.gmra.mrb[0].mxu0 %v2648
    %v2716 = vpop.f32.mrb[0].mxu0
    %v2717 = vadd.f32 0.0, %v2716
    %v2718 = vpop.f32.mrb[0].mxu0
    %2719 = vdwg.mxu0
    %v2721 = vrot.slane %v2717, 4
    %v2723 = vadd.f32 %v2116, %v2721
    %v2724 = vrot.slane %v2634, 4
    %2725 = vrot.lane.b32.xlu0 %v2724, 32
    %v2726 = vpop.permute.xlu0 %2725
    %v2727 = vsel %vm259, %v2726, 0
    %2729 = vmatprep.subr.mxu0 0.0
    %2730 = vmatpush1.msra.mxu0 %v2219
    %2731 = vmatprep.subr.mxu0 0.0
    %2732 = vmatpush1.msra.mxu0 %v2220
    %2733 = vmatprep.subr.mxu0 0.0
    %2734 = vmatpush1.msra.mxu0 %v2221
    %2735 = vmatprep.subr.mxu0 0.0
    %2736 = vmatpush1.msra.mxu0 %v2222
    %2737 = vmatprep.subr.mxu0 0.0
    %2738 = vmatpush1.msra.mxu0 0.0
    %2739 = vmatprep.subr.mxu0 0.0
    %2740 = vmatpush1.msra.mxu0 0.0
    %2741 = vmatprep.subr.mxu0 0.0
    %2742 = vmatpush1.msra.mxu0 0.0
    %2743 = vmatprep.subr.mxu0 0.0
    %2744 = vmatpush1.msra.mxu0 0.0
    %2745 = vmatprep.subr.mxu0 0.0
    %2746 = vmatpush1.msra.mxu0 0.0
    %2747 = vmatprep.subr.mxu0 0.0
    %2748 = vmatpush1.msra.mxu0 0.0
    %2749 = vmatprep.subr.mxu0 0.0
    %2750 = vmatpush1.msra.mxu0 0.0
    %2751 = vmatprep.subr.mxu0 0.0
    %2752 = vmatpush1.msra.mxu0 0.0
    %2753 = vmatprep.subr.mxu0 0.0
    %2754 = vmatpush1.msra.mxu0 0.0
    %2755 = vmatprep.subr.mxu0 0.0
    %2756 = vmatpush1.msra.mxu0 0.0
    %2757 = vmatprep.subr.mxu0 0.0
    %2758 = vmatpush1.msra.mxu0 0.0
    %2759 = vmatprep.subr.mxu0 0.0
    %2760 = vmatpush1.msra.mxu0 0.0
    %2761 = vmatprep.subr.mxu0 0.0
    %2762 = vmatpush1.msra.mxu0 0.0
    %2763 = vmatprep.subr.mxu0 0.0
    %2764 = vmatpush1.msra.mxu0 0.0
    %2765 = vmatprep.subr.mxu0 0.0
    %2766 = vmatpush1.msra.mxu0 0.0
    %2767 = vmatprep.subr.mxu0 0.0
    %2768 = vmatpush1.msra.mxu0 0.0
    %2769 = vmatprep.subr.mxu0 0.0
    %2770 = vmatpush1.msra.mxu0 0.0
    %2771 = vmatprep.subr.mxu0 0.0
    %2772 = vmatpush1.msra.mxu0 0.0
    %2773 = vmatprep.subr.mxu0 0.0
    %2774 = vmatpush1.msra.mxu0 0.0
    %2775 = vmatprep.subr.mxu0 0.0
    %2776 = vmatpush1.msra.mxu0 0.0
    %2777 = vmatprep.subr.mxu0 0.0
    %2778 = vmatpush1.msra.mxu0 0.0
    %2779 = vmatprep.subr.mxu0 0.0
    %2780 = vmatpush1.msra.mxu0 0.0
    %2781 = vmatprep.subr.mxu0 0.0
    %2782 = vmatpush1.msra.mxu0 0.0
    %2783 = vmatprep.subr.mxu0 0.0
    %2784 = vmatpush1.msra.mxu0 0.0
    %2785 = vmatprep.subr.mxu0 0.0
    %2786 = vmatpush1.msra.mxu0 0.0
    %2787 = vmatprep.subr.mxu0 0.0
    %2788 = vmatpush1.msra.mxu0 0.0
    %2789 = vmatprep.subr.mxu0 0.0
    %2790 = vmatpush1.msra.mxu0 0.0
    %2791 = vmatprep.subr.mxu0 0.0
    %2792 = vmatpush1.msra.mxu0 0.0
    %2793 = vmatprep.mubr.f32.mxu0 0.0
    %2794 = vmatmul.mubr.f32.gmra.mrb[0].mxu0 %v2727
    %v2795 = vpop.f32.mrb[0].mxu0
    %v2796 = vadd.f32 0.0, %v2795
    %v2797 = vpop.f32.mrb[0].mxu0
    %2798 = vdwg.mxu0
    %v2800 = vrot.slane %v2796, 6
    %v2802 = vadd.f32 %v2210, %v2800
    %v2803 = vxor.u32 %v2723, 2147483648
    %v2804 = vmul.f32 %v2803, 1.442695
    %v2805 = vpow.pop %v2804
    %v2806 = vadd.f32 %v2805, 1.0
    %v2807 = vrcp.pop %v2806
    %v2808 = vmul.f32 1.0, %v2807
    %v2809 = vtanh.pop %v2723
    %v2811 = vrot.slane %v2601, 6
    %v2813 = vmul.f32 %v2808, %v2811
    %2815 = vrot.lane.b32.xlu0 %v2809, 64
    %v2816 = vpop.permute.xlu0 %2815
    %v2818 = vmul.f32 %v2808, %v2816
    %2820 = vrot.lane.b32.xlu0 %v2818, 32
    %v2821 = vpop.permute.xlu0 %2820
    %v2823 = vadd.f32 %v2813, %v2821
    %v2824 = vtanh.pop %v2823
    %2826 = vrot.lane.b32.xlu0 %v2824, 64
    %v2827 = vpop.permute.xlu0 %2826
    %v2829 = vmul.f32 %v2808, %v2827
    %v2830 = vxor.u32 %v2802, 2147483648
    %v2831 = vmul.f32 %v2830, 1.442695
    %v2832 = vpow.pop %v2831
    %v2833 = vadd.f32 %v2832, 1.0
    %v2834 = vrcp.pop %v2833
    %v2835 = vmul.f32 1.0, %v2834
    %v2836 = vtanh.pop %v2802
    %v2838 = vrot.slane %v2628, 2
    %v2840 = vmul.f32 %v2835, %v2838
    %2842 = vrot.lane.b32.xlu0 %v2836, 64
    %v2843 = vpop.permute.xlu0 %2842
    %v2845 = vmul.f32 %v2835, %v2843
    %2847 = vrot.lane.b32.xlu0 %v2845, 32
    %v2848 = vpop.permute.xlu0 %2847
    %v2850 = vadd.f32 %v2840, %v2848
    %v2851 = vtanh.pop %v2850
    %2853 = vrot.lane.b32.xlu0 %v2851, 64
    %v2854 = vpop.permute.xlu0 %2853
    %v2856 = vmul.f32 %v2835, %v2854
    %2858 = vrot.lane.b32.xlu0 %v2829, 32
    %v2859 = vpop.permute.xlu0 %2858
    %2861 = vst.msk [vmem:[#allocation8] sm:$0x30] %vm905, %v2859
    %2863 = vrot.lane.b32.xlu0 %v2856, 64
    %v2864 = vpop.permute.xlu0 %2863
    %2866 = vst.msk [vmem:[#allocation8 + $0x8] sm:$0xc] %vm911, %v2864
    %v2867 = vrot.slane %v2829, 4
    %2868 = vrot.lane.b32.xlu0 %v2867, 32
    %v2869 = vpop.permute.xlu0 %2868
    %v2870 = vsel %vm259, %v2869, 0
    %2872 = vmatprep.subr.mxu0 0.0
    %2873 = vmatpush1.msra.mxu0 %v2214
    %2874 = vmatprep.subr.mxu0 0.0
    %2875 = vmatpush1.msra.mxu0 %v2215
    %2876 = vmatprep.subr.mxu0 0.0
    %2877 = vmatpush1.msra.mxu0 %v2216
    %2878 = vmatprep.subr.mxu0 0.0
    %2879 = vmatpush1.msra.mxu0 %v2217
    %2880 = vmatprep.subr.mxu0 0.0
    %2881 = vmatpush1.msra.mxu0 0.0
    %2882 = vmatprep.subr.mxu0 0.0
    %2883 = vmatpush1.msra.mxu0 0.0
    %2884 = vmatprep.subr.mxu0 0.0
    %2885 = vmatpush1.msra.mxu0 0.0
    %2886 = vmatprep.subr.mxu0 0.0
    %2887 = vmatpush1.msra.mxu0 0.0
    %2888 = vmatprep.subr.mxu0 0.0
    %2889 = vmatpush1.msra.mxu0 0.0
    %2890 = vmatprep.subr.mxu0 0.0
    %2891 = vmatpush1.msra.mxu0 0.0
    %2892 = vmatprep.subr.mxu0 0.0
    %2893 = vmatpush1.msra.mxu0 0.0
    %2894 = vmatprep.subr.mxu0 0.0
    %2895 = vmatpush1.msra.mxu0 0.0
    %2896 = vmatprep.subr.mxu0 0.0
    %2897 = vmatpush1.msra.mxu0 0.0
    %2898 = vmatprep.subr.mxu0 0.0
    %2899 = vmatpush1.msra.mxu0 0.0
    %2900 = vmatprep.subr.mxu0 0.0
    %2901 = vmatpush1.msra.mxu0 0.0
    %2902 = vmatprep.subr.mxu0 0.0
    %2903 = vmatpush1.msra.mxu0 0.0
    %2904 = vmatprep.subr.mxu0 0.0
    %2905 = vmatpush1.msra.mxu0 0.0
    %2906 = vmatprep.subr.mxu0 0.0
    %2907 = vmatpush1.msra.mxu0 0.0
    %2908 = vmatprep.subr.mxu0 0.0
    %2909 = vmatpush1.msra.mxu0 0.0
    %2910 = vmatprep.subr.mxu0 0.0
    %2911 = vmatpush1.msra.mxu0 0.0
    %2912 = vmatprep.subr.mxu0 0.0
    %2913 = vmatpush1.msra.mxu0 0.0
    %2914 = vmatprep.subr.mxu0 0.0
    %2915 = vmatpush1.msra.mxu0 0.0
    %2916 = vmatprep.subr.mxu0 0.0
    %2917 = vmatpush1.msra.mxu0 0.0
    %2918 = vmatprep.subr.mxu0 0.0
    %2919 = vmatpush1.msra.mxu0 0.0
    %2920 = vmatprep.subr.mxu0 0.0
    %2921 = vmatpush1.msra.mxu0 0.0
    %2922 = vmatprep.subr.mxu0 0.0
    %2923 = vmatpush1.msra.mxu0 0.0
    %2924 = vmatprep.subr.mxu0 0.0
    %2925 = vmatpush1.msra.mxu0 0.0
    %2926 = vmatprep.subr.mxu0 0.0
    %2927 = vmatpush1.msra.mxu0 0.0
    %2928 = vmatprep.subr.mxu0 0.0
    %2929 = vmatpush1.msra.mxu0 0.0
    %2930 = vmatprep.subr.mxu0 0.0
    %2931 = vmatpush1.msra.mxu0 0.0
    %2932 = vmatprep.subr.mxu0 0.0
    %2933 = vmatpush1.msra.mxu0 0.0
    %2934 = vmatprep.subr.mxu0 0.0
    %2935 = vmatpush1.msra.mxu0 0.0
    %2936 = vmatprep.mubr.f32.mxu0 0.0
    %2937 = vmatmul.mubr.f32.gmra.mrb[0].mxu0 %v2870
    %v2938 = vpop.f32.mrb[0].mxu0
    %v2939 = vadd.f32 0.0, %v2938
    %v2940 = vpop.f32.mrb[0].mxu0
    %2941 = vdwg.mxu0
    %v2943 = vrot.slane %v2939, 2
    %v2945 = vadd.f32 %v2116, %v2943
    %v2946 = vrot.slane %v2856, 2
    %2947 = vrot.lane.b32.xlu0 %v2946, 32
    %v2948 = vpop.permute.xlu0 %2947
    %v2949 = vsel %vm259, %v2948, 0
    %2951 = vmatprep.subr.mxu0 0.0
    %2952 = vmatpush1.msra.mxu0 %v2219
    %2953 = vmatprep.subr.mxu0 0.0
    %2954 = vmatpush1.msra.mxu0 %v2220
    %2955 = vmatprep.subr.mxu0 0.0
    %2956 = vmatpush1.msra.mxu0 %v2221
    %2957 = vmatprep.subr.mxu0 0.0
    %2958 = vmatpush1.msra.mxu0 %v2222
    %2959 = vmatprep.subr.mxu0 0.0
    %2960 = vmatpush1.msra.mxu0 0.0
    %2961 = vmatprep.subr.mxu0 0.0
    %2962 = vmatpush1.msra.mxu0 0.0
    %2963 = vmatprep.subr.mxu0 0.0
    %2964 = vmatpush1.msra.mxu0 0.0
    %2965 = vmatprep.subr.mxu0 0.0
    %2966 = vmatpush1.msra.mxu0 0.0
    %2967 = vmatprep.subr.mxu0 0.0
    %2968 = vmatpush1.msra.mxu0 0.0
    %2969 = vmatprep.subr.mxu0 0.0
    %2970 = vmatpush1.msra.mxu0 0.0
    %2971 = vmatprep.subr.mxu0 0.0
    %2972 = vmatpush1.msra.mxu0 0.0
    %2973 = vmatprep.subr.mxu0 0.0
    %2974 = vmatpush1.msra.mxu0 0.0
    %2975 = vmatprep.subr.mxu0 0.0
    %2976 = vmatpush1.msra.mxu0 0.0
    %2977 = vmatprep.subr.mxu0 0.0
    %2978 = vmatpush1.msra.mxu0 0.0
    %2979 = vmatprep.subr.mxu0 0.0
    %2980 = vmatpush1.msra.mxu0 0.0
    %2981 = vmatprep.subr.mxu0 0.0
    %2982 = vmatpush1.msra.mxu0 0.0
    %2983 = vmatprep.subr.mxu0 0.0
    %2984 = vmatpush1.msra.mxu0 0.0
    %2985 = vmatprep.subr.mxu0 0.0
    %2986 = vmatpush1.msra.mxu0 0.0
    %2987 = vmatprep.subr.mxu0 0.0
    %2988 = vmatpush1.msra.mxu0 0.0
    %2989 = vmatprep.subr.mxu0 0.0
    %2990 = vmatpush1.msra.mxu0 0.0
    %2991 = vmatprep.subr.mxu0 0.0
    %2992 = vmatpush1.msra.mxu0 0.0
    %2993 = vmatprep.subr.mxu0 0.0
    %2994 = vmatpush1.msra.mxu0 0.0
    %2995 = vmatprep.subr.mxu0 0.0
    %2996 = vmatpush1.msra.mxu0 0.0
    %2997 = vmatprep.subr.mxu0 0.0
    %2998 = vmatpush1.msra.mxu0 0.0
    %2999 = vmatprep.subr.mxu0 0.0
    %3000 = vmatpush1.msra.mxu0 0.0
    %3001 = vmatprep.subr.mxu0 0.0
    %3002 = vmatpush1.msra.mxu0 0.0
    %3003 = vmatprep.subr.mxu0 0.0
    %3004 = vmatpush1.msra.mxu0 0.0
    %3005 = vmatprep.subr.mxu0 0.0
    %3006 = vmatpush1.msra.mxu0 0.0
    %3007 = vmatprep.subr.mxu0 0.0
    %3008 = vmatpush1.msra.mxu0 0.0
    %3009 = vmatprep.subr.mxu0 0.0
    %3010 = vmatpush1.msra.mxu0 0.0
    %3011 = vmatprep.subr.mxu0 0.0
    %3012 = vmatpush1.msra.mxu0 0.0
    %3013 = vmatprep.subr.mxu0 0.0
    %3014 = vmatpush1.msra.mxu0 0.0
    %3015 = vmatprep.mubr.f32.mxu0 0.0
    %3016 = vmatmul.mubr.f32.gmra.mrb[0].mxu0 %v2949
    %v3017 = vpop.f32.mrb[0].mxu0
    %v3018 = vadd.f32 0.0, %v3017
    %v3019 = vpop.f32.mrb[0].mxu0
    %3020 = vdwg.mxu0
    %v3021 = vadd.f32 %v2210, %v3018
    %v3022 = vxor.u32 %v2945, 2147483648
    %v3023 = vmul.f32 %v3022, 1.442695
    %v3024 = vpow.pop %v3023
    %v3025 = vadd.f32 %v3024, 1.0
    %v3026 = vrcp.pop %v3025
    %v3027 = vmul.f32 1.0, %v3026
    %v3028 = vtanh.pop %v2945
    %v3030 = vrot.slane %v2823, 6
    %v3032 = vmul.f32 %v3027, %v3030
    %3034 = vrot.lane.b32.xlu0 %v3028, 64
    %v3035 = vpop.permute.xlu0 %3034
    %v3037 = vmul.f32 %v3027, %v3035
    %3039 = vrot.lane.b32.xlu0 %v3037, 32
    %v3040 = vpop.permute.xlu0 %3039
    %v3042 = vadd.f32 %v3032, %v3040
    %v3043 = vtanh.pop %v3042
    %3045 = vrot.lane.b32.xlu0 %v3043, 64
    %v3046 = vpop.permute.xlu0 %3045
    %v3048 = vmul.f32 %v3027, %v3046
    %v3049 = vxor.u32 %v3021, 2147483648
    %v3050 = vmul.f32 %v3049, 1.442695
    %v3051 = vpow.pop %v3050
    %v3052 = vadd.f32 %v3051, 1.0
    %v3053 = vrcp.pop %v3052
    %v3054 = vmul.f32 1.0, %v3053
    %v3055 = vtanh.pop %v3021
    %v3057 = vrot.slane %v2850, 2
    %v3059 = vmul.f32 %v3054, %v3057
    %3061 = vrot.lane.b32.xlu0 %v3055, 64
    %v3062 = vpop.permute.xlu0 %3061
    %v3064 = vmul.f32 %v3054, %v3062
    %3066 = vrot.lane.b32.xlu0 %v3064, 32
    %v3067 = vpop.permute.xlu0 %3066
    %v3069 = vadd.f32 %v3059, %v3067
    %v3070 = vtanh.pop %v3069
    %3072 = vrot.lane.b32.xlu0 %v3070, 64
    %v3073 = vpop.permute.xlu0 %3072
    %v3075 = vmul.f32 %v3054, %v3073
    %3077 = vrot.lane.b32.xlu0 %v3048, 32
    %v3078 = vpop.permute.xlu0 %3077
    %3080 = vst.msk [vmem:[#allocation8] sm:$0xc0] %vm1126, %v3078
    %3082 = vrot.lane.b32.xlu0 %v3075, 64
    %v3083 = vpop.permute.xlu0 %3082
    %3085 = vst.msk [vmem:[#allocation8 + $0x8] sm:$0x3] %vm1132, %v3083
    %v3086 = vrot.slane %v3048, 6
    %3087 = vrot.lane.b32.xlu0 %v3086, 32
    %v3088 = vpop.permute.xlu0 %3087
    %v3089 = vsel %vm259, %v3088, 0
    %3091 = vmatprep.subr.mxu0 0.0
    %3092 = vmatpush1.msra.mxu0 %v2214
    %3093 = vmatprep.subr.mxu0 0.0
    %3094 = vmatpush1.msra.mxu0 %v2215
    %3095 = vmatprep.subr.mxu0 0.0
    %3096 = vmatpush1.msra.mxu0 %v2216
    %3097 = vmatprep.subr.mxu0 0.0
    %3098 = vmatpush1.msra.mxu0 %v2217
    %3099 = vmatprep.subr.mxu0 0.0
    %3100 = vmatpush1.msra.mxu0 0.0
    %3101 = vmatprep.subr.mxu0 0.0
    %3102 = vmatpush1.msra.mxu0 0.0
    %3103 = vmatprep.subr.mxu0 0.0
    %3104 = vmatpush1.msra.mxu0 0.0
    %3105 = vmatprep.subr.mxu0 0.0
    %3106 = vmatpush1.msra.mxu0 0.0
    %3107 = vmatprep.subr.mxu0 0.0
    %3108 = vmatpush1.msra.mxu0 0.0
    %3109 = vmatprep.subr.mxu0 0.0
    %3110 = vmatpush1.msra.mxu0 0.0
    %3111 = vmatprep.subr.mxu0 0.0
    %3112 = vmatpush1.msra.mxu0 0.0
    %3113 = vmatprep.subr.mxu0 0.0
    %3114 = vmatpush1.msra.mxu0 0.0
    %3115 = vmatprep.subr.mxu0 0.0
    %3116 = vmatpush1.msra.mxu0 0.0
    %3117 = vmatprep.subr.mxu0 0.0
    %3118 = vmatpush1.msra.mxu0 0.0
    %3119 = vmatprep.subr.mxu0 0.0
    %3120 = vmatpush1.msra.mxu0 0.0
    %3121 = vmatprep.subr.mxu0 0.0
    %3122 = vmatpush1.msra.mxu0 0.0
    %3123 = vmatprep.subr.mxu0 0.0
    %3124 = vmatpush1.msra.mxu0 0.0
    %3125 = vmatprep.subr.mxu0 0.0
    %3126 = vmatpush1.msra.mxu0 0.0
    %3127 = vmatprep.subr.mxu0 0.0
    %3128 = vmatpush1.msra.mxu0 0.0
    %3129 = vmatprep.subr.mxu0 0.0
    %3130 = vmatpush1.msra.mxu0 0.0
    %3131 = vmatprep.subr.mxu0 0.0
    %3132 = vmatpush1.msra.mxu0 0.0
    %3133 = vmatprep.subr.mxu0 0.0
    %3134 = vmatpush1.msra.mxu0 0.0
    %3135 = vmatprep.subr.mxu0 0.0
    %3136 = vmatpush1.msra.mxu0 0.0
    %3137 = vmatprep.subr.mxu0 0.0
    %3138 = vmatpush1.msra.mxu0 0.0
    %3139 = vmatprep.subr.mxu0 0.0
    %3140 = vmatpush1.msra.mxu0 0.0
    %3141 = vmatprep.subr.mxu0 0.0
    %3142 = vmatpush1.msra.mxu0 0.0
    %3143 = vmatprep.subr.mxu0 0.0
    %3144 = vmatpush1.msra.mxu0 0.0
    %3145 = vmatprep.subr.mxu0 0.0
    %3146 = vmatpush1.msra.mxu0 0.0
    %3147 = vmatprep.subr.mxu0 0.0
    %3148 = vmatpush1.msra.mxu0 0.0
    %3149 = vmatprep.subr.mxu0 0.0
    %3150 = vmatpush1.msra.mxu0 0.0
    %3151 = vmatprep.subr.mxu0 0.0
    %3152 = vmatpush1.msra.mxu0 0.0
    %3153 = vmatprep.subr.mxu0 0.0
    %3154 = vmatpush1.msra.mxu0 0.0
    %3155 = vmatprep.mubr.f32.mxu0 0.0
    %3156 = vmatmul.mubr.f32.gmra.mrb[0].mxu0 %v3089
    %v3157 = vpop.f32.mrb[0].mxu0
    %v3158 = vadd.f32 0.0, %v3157
    %v3159 = vpop.f32.mrb[0].mxu0
    %3160 = vdwg.mxu0
    %v3161 = vadd.f32 %v2121, %v3158
    %3162 = vrot.lane.b32.xlu0 %v3075, 32
    %v3163 = vpop.permute.xlu0 %3162
    %v3164 = vsel %vm259, %v3163, 0
    %3166 = vmatprep.subr.mxu0 0.0
    %3167 = vmatpush1.msra.mxu0 %v2219
    %3168 = vmatprep.subr.mxu0 0.0
    %3169 = vmatpush1.msra.mxu0 %v2220
    %3170 = vmatprep.subr.mxu0 0.0
    %3171 = vmatpush1.msra.mxu0 %v2221
    %3172 = vmatprep.subr.mxu0 0.0
    %3173 = vmatpush1.msra.mxu0 %v2222
    %3174 = vmatprep.subr.mxu0 0.0
    %3175 = vmatpush1.msra.mxu0 0.0
    %3176 = vmatprep.subr.mxu0 0.0
    %3177 = vmatpush1.msra.mxu0 0.0
    %3178 = vmatprep.subr.mxu0 0.0
    %3179 = vmatpush1.msra.mxu0 0.0
    %3180 = vmatprep.subr.mxu0 0.0
    %3181 = vmatpush1.msra.mxu0 0.0
    %3182 = vmatprep.subr.mxu0 0.0
    %3183 = vmatpush1.msra.mxu0 0.0
    %3184 = vmatprep.subr.mxu0 0.0
    %3185 = vmatpush1.msra.mxu0 0.0
    %3186 = vmatprep.subr.mxu0 0.0
    %3187 = vmatpush1.msra.mxu0 0.0
    %3188 = vmatprep.subr.mxu0 0.0
    %3189 = vmatpush1.msra.mxu0 0.0
    %3190 = vmatprep.subr.mxu0 0.0
    %3191 = vmatpush1.msra.mxu0 0.0
    %3192 = vmatprep.subr.mxu0 0.0
    %3193 = vmatpush1.msra.mxu0 0.0
    %3194 = vmatprep.subr.mxu0 0.0
    %3195 = vmatpush1.msra.mxu0 0.0
    %3196 = vmatprep.subr.mxu0 0.0
    %3197 = vmatpush1.msra.mxu0 0.0
    %3198 = vmatprep.subr.mxu0 0.0
    %3199 = vmatpush1.msra.mxu0 0.0
    %3200 = vmatprep.subr.mxu0 0.0
    %3201 = vmatpush1.msra.mxu0 0.0
    %3202 = vmatprep.subr.mxu0 0.0
    %3203 = vmatpush1.msra.mxu0 0.0
    %3204 = vmatprep.subr.mxu0 0.0
    %3205 = vmatpush1.msra.mxu0 0.0
    %3206 = vmatprep.subr.mxu0 0.0
    %3207 = vmatpush1.msra.mxu0 0.0
    %3208 = vmatprep.subr.mxu0 0.0
    %3209 = vmatpush1.msra.mxu0 0.0
    %3210 = vmatprep.subr.mxu0 0.0
    %3211 = vmatpush1.msra.mxu0 0.0
    %3212 = vmatprep.subr.mxu0 0.0
    %3213 = vmatpush1.msra.mxu0 0.0
    %3214 = vmatprep.subr.mxu0 0.0
    %3215 = vmatpush1.msra.mxu0 0.0
    %3216 = vmatprep.subr.mxu0 0.0
    %3217 = vmatpush1.msra.mxu0 0.0
    %3218 = vmatprep.subr.mxu0 0.0
    %3219 = vmatpush1.msra.mxu0 0.0
    %3220 = vmatprep.subr.mxu0 0.0
    %3221 = vmatpush1.msra.mxu0 0.0
    %3222 = vmatprep.subr.mxu0 0.0
    %3223 = vmatpush1.msra.mxu0 0.0
    %3224 = vmatprep.subr.mxu0 0.0
    %3225 = vmatpush1.msra.mxu0 0.0
    %3226 = vmatprep.subr.mxu0 0.0
    %3227 = vmatpush1.msra.mxu0 0.0
    %3228 = vmatprep.subr.mxu0 0.0
    %3229 = vmatpush1.msra.mxu0 0.0
    %3230 = vmatprep.mubr.f32.mxu0 0.0
    %3231 = vmatmul.mubr.f32.gmra.mrb[0].mxu0 %v3164
    %v3232 = vpop.f32.mrb[0].mxu0
    %v3233 = vadd.f32 0.0, %v3232
    %v3234 = vpop.f32.mrb[0].mxu0
    %3235 = vdwg.mxu0
    %v3237 = vrot.slane %v3233, 2
    %v3239 = vadd.f32 %v2205, %v3237
    %v3240 = vxor.u32 %v3161, 2147483648
    %v3241 = vmul.f32 %v3240, 1.442695
    %v3242 = vpow.pop %v3241
    %v3243 = vadd.f32 %v3242, 1.0
    %v3244 = vrcp.pop %v3243
    %v3245 = vmul.f32 1.0, %v3244
    %v3246 = vtanh.pop %v3161
    %v3248 = vrot.slane %v3042, 6
    %v3250 = vmul.f32 %v3245, %v3248
    %3252 = vrot.lane.b32.xlu0 %v3246, 64
    %v3253 = vpop.permute.xlu0 %3252
    %v3255 = vmul.f32 %v3245, %v3253
    %3257 = vrot.lane.b32.xlu0 %v3255, 32
    %v3258 = vpop.permute.xlu0 %3257
    %v3260 = vadd.f32 %v3250, %v3258
    %v3261 = vtanh.pop %v3260
    %3263 = vrot.lane.b32.xlu0 %v3261, 64
    %v3264 = vpop.permute.xlu0 %3263
    %v3266 = vmul.f32 %v3245, %v3264
    %v3267 = vxor.u32 %v3239, 2147483648
    %v3268 = vmul.f32 %v3267, 1.442695
    %v3269 = vpow.pop %v3268
    %v3270 = vadd.f32 %v3269, 1.0
    %v3271 = vrcp.pop %v3270
    %v3272 = vmul.f32 1.0, %v3271
    %v3273 = vtanh.pop %v3239
    %v3275 = vrot.slane %v3069, 2
    %v3277 = vmul.f32 %v3272, %v3275
    %3279 = vrot.lane.b32.xlu0 %v3273, 64
    %v3280 = vpop.permute.xlu0 %3279
    %v3282 = vmul.f32 %v3272, %v3280
    %3284 = vrot.lane.b32.xlu0 %v3282, 32
    %v3285 = vpop.permute.xlu0 %3284
    %v3287 = vadd.f32 %v3277, %v3285
    %v3288 = vtanh.pop %v3287
    %3290 = vrot.lane.b32.xlu0 %v3288, 64
    %v3291 = vpop.permute.xlu0 %3290
    %v3293 = vmul.f32 %v3272, %v3291
    %3295 = vrot.lane.b32.xlu0 %v3266, 32
    %v3296 = vpop.permute.xlu0 %3295
    %3298 = vst.msk [vmem:[#allocation8 + $0x8] sm:$0x3] %vm460, %v3296
    %3300 = vrot.lane.b32.xlu0 %v3293, 64
    %v3301 = vpop.permute.xlu0 %3300
    %3303 = vst.msk [vmem:[#allocation8] sm:$0xc0] %vm466, %v3301
    %v3304 = vsel %vm259, %v3296, 0
    %3306 = vmatprep.subr.mxu0 0.0
    %3307 = vmatpush1.msra.mxu0 %v2214
    %3308 = vmatprep.subr.mxu0 0.0
    %3309 = vmatpush1.msra.mxu0 %v2215
    %3310 = vmatprep.subr.mxu0 0.0
    %3311 = vmatpush1.msra.mxu0 %v2216
    %3312 = vmatprep.subr.mxu0 0.0
    %3313 = vmatpush1.msra.mxu0 %v2217
    %3314 = vmatprep.subr.mxu0 0.0
    %3315 = vmatpush1.msra.mxu0 0.0
    %3316 = vmatprep.subr.mxu0 0.0
    %3317 = vmatpush1.msra.mxu0 0.0
    %3318 = vmatprep.subr.mxu0 0.0
    %3319 = vmatpush1.msra.mxu0 0.0
    %3320 = vmatprep.subr.mxu0 0.0
    %3321 = vmatpush1.msra.mxu0 0.0
    %3322 = vmatprep.subr.mxu0 0.0
    %3323 = vmatpush1.msra.mxu0 0.0
    %3324 = vmatprep.subr.mxu0 0.0
    %3325 = vmatpush1.msra.mxu0 0.0
    %3326 = vmatprep.subr.mxu0 0.0
    %3327 = vmatpush1.msra.mxu0 0.0
    %3328 = vmatprep.subr.mxu0 0.0
    %3329 = vmatpush1.msra.mxu0 0.0
    %3330 = vmatprep.subr.mxu0 0.0
    %3331 = vmatpush1.msra.mxu0 0.0
    %3332 = vmatprep.subr.mxu0 0.0
    %3333 = vmatpush1.msra.mxu0 0.0
    %3334 = vmatprep.subr.mxu0 0.0
    %3335 = vmatpush1.msra.mxu0 0.0
    %3336 = vmatprep.subr.mxu0 0.0
    %3337 = vmatpush1.msra.mxu0 0.0
    %3338 = vmatprep.subr.mxu0 0.0
    %3339 = vmatpush1.msra.mxu0 0.0
    %3340 = vmatprep.subr.mxu0 0.0
    %3341 = vmatpush1.msra.mxu0 0.0
    %3342 = vmatprep.subr.mxu0 0.0
    %3343 = vmatpush1.msra.mxu0 0.0
    %3344 = vmatprep.subr.mxu0 0.0
    %3345 = vmatpush1.msra.mxu0 0.0
    %3346 = vmatprep.subr.mxu0 0.0
    %3347 = vmatpush1.msra.mxu0 0.0
    %3348 = vmatprep.subr.mxu0 0.0
    %3349 = vmatpush1.msra.mxu0 0.0
    %3350 = vmatprep.subr.mxu0 0.0
    %3351 = vmatpush1.msra.mxu0 0.0
    %3352 = vmatprep.subr.mxu0 0.0
    %3353 = vmatpush1.msra.mxu0 0.0
    %3354 = vmatprep.subr.mxu0 0.0
    %3355 = vmatpush1.msra.mxu0 0.0
    %3356 = vmatprep.subr.mxu0 0.0
    %3357 = vmatpush1.msra.mxu0 0.0
    %3358 = vmatprep.subr.mxu0 0.0
    %3359 = vmatpush1.msra.mxu0 0.0
    %3360 = vmatprep.subr.mxu0 0.0
    %3361 = vmatpush1.msra.mxu0 0.0
    %3362 = vmatprep.subr.mxu0 0.0
    %3363 = vmatpush1.msra.mxu0 0.0
    %3364 = vmatprep.subr.mxu0 0.0
    %3365 = vmatpush1.msra.mxu0 0.0
    %3366 = vmatprep.subr.mxu0 0.0
    %3367 = vmatpush1.msra.mxu0 0.0
    %3368 = vmatprep.subr.mxu0 0.0
    %3369 = vmatpush1.msra.mxu0 0.0
    %3370 = vmatprep.mubr.f32.mxu0 0.0
    %3371 = vmatmul.mubr.f32.gmra.mrb[0].mxu0 %v3304
    %v3372 = vpop.f32.mrb[0].mxu0
    %v3373 = vadd.f32 0.0, %v3372
    %v3374 = vpop.f32.mrb[0].mxu0
    %3375 = vdwg.mxu0
    %v3377 = vrot.slane %v3373, 6
    %v3379 = vadd.f32 %v2121, %v3377
    %v3380 = vrot.slane %v3293, 6
    %3381 = vrot.lane.b32.xlu0 %v3380, 32
    %v3382 = vpop.permute.xlu0 %3381
    %v3383 = vsel %vm259, %v3382, 0
    %3385 = vmatprep.subr.mxu0 0.0
    %3386 = vmatpush1.msra.mxu0 %v2219
    %3387 = vmatprep.subr.mxu0 0.0
    %3388 = vmatpush1.msra.mxu0 %v2220
    %3389 = vmatprep.subr.mxu0 0.0
    %3390 = vmatpush1.msra.mxu0 %v2221
    %3391 = vmatprep.subr.mxu0 0.0
    %3392 = vmatpush1.msra.mxu0 %v2222
    %3393 = vmatprep.subr.mxu0 0.0
    %3394 = vmatpush1.msra.mxu0 0.0
    %3395 = vmatprep.subr.mxu0 0.0
    %3396 = vmatpush1.msra.mxu0 0.0
    %3397 = vmatprep.subr.mxu0 0.0
    %3398 = vmatpush1.msra.mxu0 0.0
    %3399 = vmatprep.subr.mxu0 0.0
    %3400 = vmatpush1.msra.mxu0 0.0
    %3401 = vmatprep.subr.mxu0 0.0
    %3402 = vmatpush1.msra.mxu0 0.0
    %3403 = vmatprep.subr.mxu0 0.0
    %3404 = vmatpush1.msra.mxu0 0.0
    %3405 = vmatprep.subr.mxu0 0.0
    %3406 = vmatpush1.msra.mxu0 0.0
    %3407 = vmatprep.subr.mxu0 0.0
    %3408 = vmatpush1.msra.mxu0 0.0
    %3409 = vmatprep.subr.mxu0 0.0
    %3410 = vmatpush1.msra.mxu0 0.0
    %3411 = vmatprep.subr.mxu0 0.0
    %3412 = vmatpush1.msra.mxu0 0.0
    %3413 = vmatprep.subr.mxu0 0.0
    %3414 = vmatpush1.msra.mxu0 0.0
    %3415 = vmatprep.subr.mxu0 0.0
    %3416 = vmatpush1.msra.mxu0 0.0
    %3417 = vmatprep.subr.mxu0 0.0
    %3418 = vmatpush1.msra.mxu0 0.0
    %3419 = vmatprep.subr.mxu0 0.0
    %3420 = vmatpush1.msra.mxu0 0.0
    %3421 = vmatprep.subr.mxu0 0.0
    %3422 = vmatpush1.msra.mxu0 0.0
    %3423 = vmatprep.subr.mxu0 0.0
    %3424 = vmatpush1.msra.mxu0 0.0
    %3425 = vmatprep.subr.mxu0 0.0
    %3426 = vmatpush1.msra.mxu0 0.0
    %3427 = vmatprep.subr.mxu0 0.0
    %3428 = vmatpush1.msra.mxu0 0.0
    %3429 = vmatprep.subr.mxu0 0.0
    %3430 = vmatpush1.msra.mxu0 0.0
    %3431 = vmatprep.subr.mxu0 0.0
    %3432 = vmatpush1.msra.mxu0 0.0
    %3433 = vmatprep.subr.mxu0 0.0
    %3434 = vmatpush1.msra.mxu0 0.0
    %3435 = vmatprep.subr.mxu0 0.0
    %3436 = vmatpush1.msra.mxu0 0.0
    %3437 = vmatprep.subr.mxu0 0.0
    %3438 = vmatpush1.msra.mxu0 0.0
    %3439 = vmatprep.subr.mxu0 0.0
    %3440 = vmatpush1.msra.mxu0 0.0
    %3441 = vmatprep.subr.mxu0 0.0
    %3442 = vmatpush1.msra.mxu0 0.0
    %3443 = vmatprep.subr.mxu0 0.0
    %3444 = vmatpush1.msra.mxu0 0.0
    %3445 = vmatprep.subr.mxu0 0.0
    %3446 = vmatpush1.msra.mxu0 0.0
    %3447 = vmatprep.subr.mxu0 0.0
    %3448 = vmatpush1.msra.mxu0 0.0
    %3449 = vmatprep.mubr.f32.mxu0 0.0
    %3450 = vmatmul.mubr.f32.gmra.mrb[0].mxu0 %v3383
    %v3451 = vpop.f32.mrb[0].mxu0
    %v3452 = vadd.f32 0.0, %v3451
    %v3453 = vpop.f32.mrb[0].mxu0
    %3454 = vdwg.mxu0
    %v3456 = vrot.slane %v3452, 4
    %v3458 = vadd.f32 %v2205, %v3456
    %v3459 = vxor.u32 %v3379, 2147483648
    %v3460 = vmul.f32 %v3459, 1.442695
    %v3461 = vpow.pop %v3460
    %v3462 = vadd.f32 %v3461, 1.0
    %v3463 = vrcp.pop %v3462
    %v3464 = vmul.f32 1.0, %v3463
    %v3465 = vtanh.pop %v3379
    %v3467 = vrot.slane %v3260, 6
    %v3469 = vmul.f32 %v3464, %v3467
    %3471 = vrot.lane.b32.xlu0 %v3465, 64
    %v3472 = vpop.permute.xlu0 %3471
    %v3474 = vmul.f32 %v3464, %v3472
    %3476 = vrot.lane.b32.xlu0 %v3474, 32
    %v3477 = vpop.permute.xlu0 %3476
    %v3479 = vadd.f32 %v3469, %v3477
    %v3480 = vtanh.pop %v3479
    %3482 = vrot.lane.b32.xlu0 %v3480, 64
    %v3483 = vpop.permute.xlu0 %3482
    %v3485 = vmul.f32 %v3464, %v3483
    %v3486 = vxor.u32 %v3458, 2147483648
    %v3487 = vmul.f32 %v3486, 1.442695
    %v3488 = vpow.pop %v3487
    %v3489 = vadd.f32 %v3488, 1.0
    %v3490 = vrcp.pop %v3489
    %v3491 = vmul.f32 1.0, %v3490
    %v3492 = vtanh.pop %v3458
    %v3494 = vrot.slane %v3287, 2
    %v3496 = vmul.f32 %v3491, %v3494
    %3498 = vrot.lane.b32.xlu0 %v3492, 64
    %v3499 = vpop.permute.xlu0 %3498
    %v3501 = vmul.f32 %v3491, %v3499
    %3503 = vrot.lane.b32.xlu0 %v3501, 32
    %v3504 = vpop.permute.xlu0 %3503
    %v3506 = vadd.f32 %v3496, %v3504
    %v3507 = vtanh.pop %v3506
    %3509 = vrot.lane.b32.xlu0 %v3507, 64
    %v3510 = vpop.permute.xlu0 %3509
    %v3512 = vmul.f32 %v3491, %v3510
    %3514 = vrot.lane.b32.xlu0 %v3485, 32
    %v3515 = vpop.permute.xlu0 %3514
    %3517 = vst.msk [vmem:[#allocation8 + $0x8] sm:$0xc] %vm681, %v3515
    %3519 = vrot.lane.b32.xlu0 %v3512, 64
    %v3520 = vpop.permute.xlu0 %3519
    %3522 = vst.msk [vmem:[#allocation8] sm:$0x30] %vm687, %v3520
    %v3523 = vrot.slane %v3485, 2
    %3524 = vrot.lane.b32.xlu0 %v3523, 32
    %v3525 = vpop.permute.xlu0 %3524
    %v3526 = vsel %vm259, %v3525, 0
    %3528 = vmatprep.subr.mxu0 0.0
    %3529 = vmatpush1.msra.mxu0 %v2214
    %3530 = vmatprep.subr.mxu0 0.0
    %3531 = vmatpush1.msra.mxu0 %v2215
    %3532 = vmatprep.subr.mxu0 0.0
    %3533 = vmatpush1.msra.mxu0 %v2216
    %3534 = vmatprep.subr.mxu0 0.0
    %3535 = vmatpush1.msra.mxu0 %v2217
    %3536 = vmatprep.subr.mxu0 0.0
    %3537 = vmatpush1.msra.mxu0 0.0
    %3538 = vmatprep.subr.mxu0 0.0
    %3539 = vmatpush1.msra.mxu0 0.0
    %3540 = vmatprep.subr.mxu0 0.0
    %3541 = vmatpush1.msra.mxu0 0.0
    %3542 = vmatprep.subr.mxu0 0.0
    %3543 = vmatpush1.msra.mxu0 0.0
    %3544 = vmatprep.subr.mxu0 0.0
    %3545 = vmatpush1.msra.mxu0 0.0
    %3546 = vmatprep.subr.mxu0 0.0
    %3547 = vmatpush1.msra.mxu0 0.0
    %3548 = vmatprep.subr.mxu0 0.0
    %3549 = vmatpush1.msra.mxu0 0.0
    %3550 = vmatprep.subr.mxu0 0.0
    %3551 = vmatpush1.msra.mxu0 0.0
    %3552 = vmatprep.subr.mxu0 0.0
    %3553 = vmatpush1.msra.mxu0 0.0
    %3554 = vmatprep.subr.mxu0 0.0
    %3555 = vmatpush1.msra.mxu0 0.0
    %3556 = vmatprep.subr.mxu0 0.0
    %3557 = vmatpush1.msra.mxu0 0.0
    %3558 = vmatprep.subr.mxu0 0.0
    %3559 = vmatpush1.msra.mxu0 0.0
    %3560 = vmatprep.subr.mxu0 0.0
    %3561 = vmatpush1.msra.mxu0 0.0
    %3562 = vmatprep.subr.mxu0 0.0
    %3563 = vmatpush1.msra.mxu0 0.0
    %3564 = vmatprep.subr.mxu0 0.0
    %3565 = vmatpush1.msra.mxu0 0.0
    %3566 = vmatprep.subr.mxu0 0.0
    %3567 = vmatpush1.msra.mxu0 0.0
    %3568 = vmatprep.subr.mxu0 0.0
    %3569 = vmatpush1.msra.mxu0 0.0
    %3570 = vmatprep.subr.mxu0 0.0
    %3571 = vmatpush1.msra.mxu0 0.0
    %3572 = vmatprep.subr.mxu0 0.0
    %3573 = vmatpush1.msra.mxu0 0.0
    %3574 = vmatprep.subr.mxu0 0.0
    %3575 = vmatpush1.msra.mxu0 0.0
    %3576 = vmatprep.subr.mxu0 0.0
    %3577 = vmatpush1.msra.mxu0 0.0
    %3578 = vmatprep.subr.mxu0 0.0
    %3579 = vmatpush1.msra.mxu0 0.0
    %3580 = vmatprep.subr.mxu0 0.0
    %3581 = vmatpush1.msra.mxu0 0.0
    %3582 = vmatprep.subr.mxu0 0.0
    %3583 = vmatpush1.msra.mxu0 0.0
    %3584 = vmatprep.subr.mxu0 0.0
    %3585 = vmatpush1.msra.mxu0 0.0
    %3586 = vmatprep.subr.mxu0 0.0
    %3587 = vmatpush1.msra.mxu0 0.0
    %3588 = vmatprep.subr.mxu0 0.0
    %3589 = vmatpush1.msra.mxu0 0.0
    %3590 = vmatprep.subr.mxu0 0.0
    %3591 = vmatpush1.msra.mxu0 0.0
    %3592 = vmatprep.mubr.f32.mxu0 0.0
    %3593 = vmatmul.mubr.f32.gmra.mrb[0].mxu0 %v3526
    %v3594 = vpop.f32.mrb[0].mxu0
    %v3595 = vadd.f32 0.0, %v3594
    %v3596 = vpop.f32.mrb[0].mxu0
    %3597 = vdwg.mxu0
    %v3599 = vrot.slane %v3595, 4
    %v3601 = vadd.f32 %v2121, %v3599
    %v3602 = vrot.slane %v3512, 4
    %3603 = vrot.lane.b32.xlu0 %v3602, 32
    %v3604 = vpop.permute.xlu0 %3603
    %v3605 = vsel %vm259, %v3604, 0
    %3607 = vmatprep.subr.mxu0 0.0
    %3608 = vmatpush1.msra.mxu0 %v2219
    %3609 = vmatprep.subr.mxu0 0.0
    %3610 = vmatpush1.msra.mxu0 %v2220
    %3611 = vmatprep.subr.mxu0 0.0
    %3612 = vmatpush1.msra.mxu0 %v2221
    %3613 = vmatprep.subr.mxu0 0.0
    %3614 = vmatpush1.msra.mxu0 %v2222
    %3615 = vmatprep.subr.mxu0 0.0
    %3616 = vmatpush1.msra.mxu0 0.0
    %3617 = vmatprep.subr.mxu0 0.0
    %3618 = vmatpush1.msra.mxu0 0.0
    %3619 = vmatprep.subr.mxu0 0.0
    %3620 = vmatpush1.msra.mxu0 0.0
    %3621 = vmatprep.subr.mxu0 0.0
    %3622 = vmatpush1.msra.mxu0 0.0
    %3623 = vmatprep.subr.mxu0 0.0
    %3624 = vmatpush1.msra.mxu0 0.0
    %3625 = vmatprep.subr.mxu0 0.0
    %3626 = vmatpush1.msra.mxu0 0.0
    %3627 = vmatprep.subr.mxu0 0.0
    %3628 = vmatpush1.msra.mxu0 0.0
    %3629 = vmatprep.subr.mxu0 0.0
    %3630 = vmatpush1.msra.mxu0 0.0
    %3631 = vmatprep.subr.mxu0 0.0
    %3632 = vmatpush1.msra.mxu0 0.0
    %3633 = vmatprep.subr.mxu0 0.0
    %3634 = vmatpush1.msra.mxu0 0.0
    %3635 = vmatprep.subr.mxu0 0.0
    %3636 = vmatpush1.msra.mxu0 0.0
    %3637 = vmatprep.subr.mxu0 0.0
    %3638 = vmatpush1.msra.mxu0 0.0
    %3639 = vmatprep.subr.mxu0 0.0
    %3640 = vmatpush1.msra.mxu0 0.0
    %3641 = vmatprep.subr.mxu0 0.0
    %3642 = vmatpush1.msra.mxu0 0.0
    %3643 = vmatprep.subr.mxu0 0.0
    %3644 = vmatpush1.msra.mxu0 0.0
    %3645 = vmatprep.subr.mxu0 0.0
    %3646 = vmatpush1.msra.mxu0 0.0
    %3647 = vmatprep.subr.mxu0 0.0
    %3648 = vmatpush1.msra.mxu0 0.0
    %3649 = vmatprep.subr.mxu0 0.0
    %3650 = vmatpush1.msra.mxu0 0.0
    %3651 = vmatprep.subr.mxu0 0.0
    %3652 = vmatpush1.msra.mxu0 0.0
    %3653 = vmatprep.subr.mxu0 0.0
    %3654 = vmatpush1.msra.mxu0 0.0
    %3655 = vmatprep.subr.mxu0 0.0
    %3656 = vmatpush1.msra.mxu0 0.0
    %3657 = vmatprep.subr.mxu0 0.0
    %3658 = vmatpush1.msra.mxu0 0.0
    %3659 = vmatprep.subr.mxu0 0.0
    %3660 = vmatpush1.msra.mxu0 0.0
    %3661 = vmatprep.subr.mxu0 0.0
    %3662 = vmatpush1.msra.mxu0 0.0
    %3663 = vmatprep.subr.mxu0 0.0
    %3664 = vmatpush1.msra.mxu0 0.0
    %3665 = vmatprep.subr.mxu0 0.0
    %3666 = vmatpush1.msra.mxu0 0.0
    %3667 = vmatprep.subr.mxu0 0.0
    %3668 = vmatpush1.msra.mxu0 0.0
    %3669 = vmatprep.subr.mxu0 0.0
    %3670 = vmatpush1.msra.mxu0 0.0
    %3671 = vmatprep.mubr.f32.mxu0 0.0
    %3672 = vmatmul.mubr.f32.gmra.mrb[0].mxu0 %v3605
    %v3673 = vpop.f32.mrb[0].mxu0
    %v3674 = vadd.f32 0.0, %v3673
    %v3675 = vpop.f32.mrb[0].mxu0
    %3676 = vdwg.mxu0
    %v3678 = vrot.slane %v3674, 6
    %v3680 = vadd.f32 %v2205, %v3678
    %v3681 = vxor.u32 %v3601, 2147483648
    %v3682 = vmul.f32 %v3681, 1.442695
    %v3683 = vpow.pop %v3682
    %v3684 = vadd.f32 %v3683, 1.0
    %v3685 = vrcp.pop %v3684
    %v3686 = vmul.f32 1.0, %v3685
    %v3687 = vtanh.pop %v3601
    %v3689 = vrot.slane %v3479, 6
    %v3691 = vmul.f32 %v3686, %v3689
    %3693 = vrot.lane.b32.xlu0 %v3687, 64
    %v3694 = vpop.permute.xlu0 %3693
    %v3696 = vmul.f32 %v3686, %v3694
    %3698 = vrot.lane.b32.xlu0 %v3696, 32
    %v3699 = vpop.permute.xlu0 %3698
    %v3701 = vadd.f32 %v3691, %v3699
    %v3702 = vtanh.pop %v3701
    %3704 = vrot.lane.b32.xlu0 %v3702, 64
    %v3705 = vpop.permute.xlu0 %3704
    %v3707 = vmul.f32 %v3686, %v3705
    %v3708 = vxor.u32 %v3680, 2147483648
    %v3709 = vmul.f32 %v3708, 1.442695
    %v3710 = vpow.pop %v3709
    %v3711 = vadd.f32 %v3710, 1.0
    %v3712 = vrcp.pop %v3711
    %v3713 = vmul.f32 1.0, %v3712
    %v3714 = vtanh.pop %v3680
    %v3716 = vrot.slane %v3506, 2
    %v3718 = vmul.f32 %v3713, %v3716
    %3720 = vrot.lane.b32.xlu0 %v3714, 64
    %v3721 = vpop.permute.xlu0 %3720
    %v3723 = vmul.f32 %v3713, %v3721
    %3725 = vrot.lane.b32.xlu0 %v3723, 32
    %v3726 = vpop.permute.xlu0 %3725
    %v3728 = vadd.f32 %v3718, %v3726
    %v3729 = vtanh.pop %v3728
    %3731 = vrot.lane.b32.xlu0 %v3729, 64
    %v3732 = vpop.permute.xlu0 %3731
    %v3734 = vmul.f32 %v3713, %v3732
    %3736 = vrot.lane.b32.xlu0 %v3707, 32
    %v3737 = vpop.permute.xlu0 %3736
    %3739 = vst.msk [vmem:[#allocation8 + $0x8] sm:$0x30] %vm905, %v3737
    %3741 = vrot.lane.b32.xlu0 %v3734, 64
    %v3742 = vpop.permute.xlu0 %3741
    %3744 = vst.msk [vmem:[#allocation8] sm:$0xc] %vm911, %v3742
    %v3745 = vrot.slane %v3707, 4
    %3746 = vrot.lane.b32.xlu0 %v3745, 32
    %v3747 = vpop.permute.xlu0 %3746
    %v3748 = vsel %vm259, %v3747, 0
    %3750 = vmatprep.subr.mxu0 0.0
    %3751 = vmatpush1.msra.mxu0 %v2214
    %3752 = vmatprep.subr.mxu0 0.0
    %3753 = vmatpush1.msra.mxu0 %v2215
    %3754 = vmatprep.subr.mxu0 0.0
    %3755 = vmatpush1.msra.mxu0 %v2216
    %3756 = vmatprep.subr.mxu0 0.0
    %3757 = vmatpush1.msra.mxu0 %v2217
    %3758 = vmatprep.subr.mxu0 0.0
    %3759 = vmatpush1.msra.mxu0 0.0
    %3760 = vmatprep.subr.mxu0 0.0
    %3761 = vmatpush1.msra.mxu0 0.0
    %3762 = vmatprep.subr.mxu0 0.0
    %3763 = vmatpush1.msra.mxu0 0.0
    %3764 = vmatprep.subr.mxu0 0.0
    %3765 = vmatpush1.msra.mxu0 0.0
    %3766 = vmatprep.subr.mxu0 0.0
    %3767 = vmatpush1.msra.mxu0 0.0
    %3768 = vmatprep.subr.mxu0 0.0
    %3769 = vmatpush1.msra.mxu0 0.0
    %3770 = vmatprep.subr.mxu0 0.0
    %3771 = vmatpush1.msra.mxu0 0.0
    %3772 = vmatprep.subr.mxu0 0.0
    %3773 = vmatpush1.msra.mxu0 0.0
    %3774 = vmatprep.subr.mxu0 0.0
    %3775 = vmatpush1.msra.mxu0 0.0
    %3776 = vmatprep.subr.mxu0 0.0
    %3777 = vmatpush1.msra.mxu0 0.0
    %3778 = vmatprep.subr.mxu0 0.0
    %3779 = vmatpush1.msra.mxu0 0.0
    %3780 = vmatprep.subr.mxu0 0.0
    %3781 = vmatpush1.msra.mxu0 0.0
    %3782 = vmatprep.subr.mxu0 0.0
    %3783 = vmatpush1.msra.mxu0 0.0
    %3784 = vmatprep.subr.mxu0 0.0
    %3785 = vmatpush1.msra.mxu0 0.0
    %3786 = vmatprep.subr.mxu0 0.0
    %3787 = vmatpush1.msra.mxu0 0.0
    %3788 = vmatprep.subr.mxu0 0.0
    %3789 = vmatpush1.msra.mxu0 0.0
    %3790 = vmatprep.subr.mxu0 0.0
    %3791 = vmatpush1.msra.mxu0 0.0
    %3792 = vmatprep.subr.mxu0 0.0
    %3793 = vmatpush1.msra.mxu0 0.0
    %3794 = vmatprep.subr.mxu0 0.0
    %3795 = vmatpush1.msra.mxu0 0.0
    %3796 = vmatprep.subr.mxu0 0.0
    %3797 = vmatpush1.msra.mxu0 0.0
    %3798 = vmatprep.subr.mxu0 0.0
    %3799 = vmatpush1.msra.mxu0 0.0
    %3800 = vmatprep.subr.mxu0 0.0
    %3801 = vmatpush1.msra.mxu0 0.0
    %3802 = vmatprep.subr.mxu0 0.0
    %3803 = vmatpush1.msra.mxu0 0.0
    %3804 = vmatprep.subr.mxu0 0.0
    %3805 = vmatpush1.msra.mxu0 0.0
    %3806 = vmatprep.subr.mxu0 0.0
    %3807 = vmatpush1.msra.mxu0 0.0
    %3808 = vmatprep.subr.mxu0 0.0
    %3809 = vmatpush1.msra.mxu0 0.0
    %3810 = vmatprep.subr.mxu0 0.0
    %3811 = vmatpush1.msra.mxu0 0.0
    %3812 = vmatprep.subr.mxu0 0.0
    %3813 = vmatpush1.msra.mxu0 0.0
    %3814 = vmatprep.mubr.f32.mxu0 0.0
    %3815 = vmatmul.mubr.f32.gmra.mrb[0].mxu0 %v3748
    %v3816 = vpop.f32.mrb[0].mxu0
    %v3817 = vadd.f32 0.0, %v3816
    %v3818 = vpop.f32.mrb[0].mxu0
    %3819 = vdwg.mxu0
    %v3821 = vrot.slane %v3817, 2
    %v3823 = vadd.f32 %v2121, %v3821
    %v3824 = vrot.slane %v3734, 2
    %3825 = vrot.lane.b32.xlu0 %v3824, 32
    %v3826 = vpop.permute.xlu0 %3825
    %v3827 = vsel %vm259, %v3826, 0
    %3829 = vmatprep.subr.mxu0 0.0
    %3830 = vmatpush1.msra.mxu0 %v2219
    %3831 = vmatprep.subr.mxu0 0.0
    %3832 = vmatpush1.msra.mxu0 %v2220
    %3833 = vmatprep.subr.mxu0 0.0
    %3834 = vmatpush1.msra.mxu0 %v2221
    %3835 = vmatprep.subr.mxu0 0.0
    %3836 = vmatpush1.msra.mxu0 %v2222
    %3837 = vmatprep.subr.mxu0 0.0
    %3838 = vmatpush1.msra.mxu0 0.0
    %3839 = vmatprep.subr.mxu0 0.0
    %3840 = vmatpush1.msra.mxu0 0.0
    %3841 = vmatprep.subr.mxu0 0.0
    %3842 = vmatpush1.msra.mxu0 0.0
    %3843 = vmatprep.subr.mxu0 0.0
    %3844 = vmatpush1.msra.mxu0 0.0
    %3845 = vmatprep.subr.mxu0 0.0
    %3846 = vmatpush1.msra.mxu0 0.0
    %3847 = vmatprep.subr.mxu0 0.0
    %3848 = vmatpush1.msra.mxu0 0.0
    %3849 = vmatprep.subr.mxu0 0.0
    %3850 = vmatpush1.msra.mxu0 0.0
    %3851 = vmatprep.subr.mxu0 0.0
    %3852 = vmatpush1.msra.mxu0 0.0
    %3853 = vmatprep.subr.mxu0 0.0
    %3854 = vmatpush1.msra.mxu0 0.0
    %3855 = vmatprep.subr.mxu0 0.0
    %3856 = vmatpush1.msra.mxu0 0.0
    %3857 = vmatprep.subr.mxu0 0.0
    %3858 = vmatpush1.msra.mxu0 0.0
    %3859 = vmatprep.subr.mxu0 0.0
    %3860 = vmatpush1.msra.mxu0 0.0
    %3861 = vmatprep.subr.mxu0 0.0
    %3862 = vmatpush1.msra.mxu0 0.0
    %3863 = vmatprep.subr.mxu0 0.0
    %3864 = vmatpush1.msra.mxu0 0.0
    %3865 = vmatprep.subr.mxu0 0.0
    %3866 = vmatpush1.msra.mxu0 0.0
    %3867 = vmatprep.subr.mxu0 0.0
    %3868 = vmatpush1.msra.mxu0 0.0
    %3869 = vmatprep.subr.mxu0 0.0
    %3870 = vmatpush1.msra.mxu0 0.0
    %3871 = vmatprep.subr.mxu0 0.0
    %3872 = vmatpush1.msra.mxu0 0.0
    %3873 = vmatprep.subr.mxu0 0.0
    %3874 = vmatpush1.msra.mxu0 0.0
    %3875 = vmatprep.subr.mxu0 0.0
    %3876 = vmatpush1.msra.mxu0 0.0
    %3877 = vmatprep.subr.mxu0 0.0
    %3878 = vmatpush1.msra.mxu0 0.0
    %3879 = vmatprep.subr.mxu0 0.0
    %3880 = vmatpush1.msra.mxu0 0.0
    %3881 = vmatprep.subr.mxu0 0.0
    %3882 = vmatpush1.msra.mxu0 0.0
    %3883 = vmatprep.subr.mxu0 0.0
    %3884 = vmatpush1.msra.mxu0 0.0
    %3885 = vmatprep.subr.mxu0 0.0
    %3886 = vmatpush1.msra.mxu0 0.0
    %3887 = vmatprep.subr.mxu0 0.0
    %3888 = vmatpush1.msra.mxu0 0.0
    %3889 = vmatprep.subr.mxu0 0.0
    %3890 = vmatpush1.msra.mxu0 0.0
    %3891 = vmatprep.subr.mxu0 0.0
    %3892 = vmatpush1.msra.mxu0 0.0
    %3893 = vmatprep.mubr.f32.mxu0 0.0
    %3894 = vmatmul.mubr.f32.gmra.mrb[0].mxu0 %v3827
    %v3895 = vpop.f32.mrb[0].mxu0
    %v3896 = vadd.f32 0.0, %v3895
    %v3897 = vpop.f32.mrb[0].mxu0
    %3898 = vdwg.mxu0
    %v3899 = vadd.f32 %v2205, %v3896
    %v3900 = vxor.u32 %v3823, 2147483648
    %v3901 = vmul.f32 %v3900, 1.442695
    %v3902 = vpow.pop %v3901
    %v3903 = vadd.f32 %v3902, 1.0
    %v3904 = vrcp.pop %v3903
    %v3905 = vmul.f32 1.0, %v3904
    %v3906 = vtanh.pop %v3823
    %v3908 = vrot.slane %v3701, 6
    %v3910 = vmul.f32 %v3905, %v3908
    %3912 = vrot.lane.b32.xlu0 %v3906, 64
    %v3913 = vpop.permute.xlu0 %3912
    %v3915 = vmul.f32 %v3905, %v3913
    %3917 = vrot.lane.b32.xlu0 %v3915, 32
    %v3918 = vpop.permute.xlu0 %3917
    %v3920 = vadd.f32 %v3910, %v3918
    %v3921 = vtanh.pop %v3920
    %3923 = vrot.lane.b32.xlu0 %v3921, 64
    %v3924 = vpop.permute.xlu0 %3923
    %v3926 = vmul.f32 %v3905, %v3924
    %v3927 = vxor.u32 %v3899, 2147483648
    %v3928 = vmul.f32 %v3927, 1.442695
    %v3929 = vpow.pop %v3928
    %v3930 = vadd.f32 %v3929, 1.0
    %v3931 = vrcp.pop %v3930
    %v3932 = vmul.f32 1.0, %v3931
    %v3933 = vtanh.pop %v3899
    %v3935 = vrot.slane %v3728, 2
    %v3937 = vmul.f32 %v3932, %v3935
    %3939 = vrot.lane.b32.xlu0 %v3933, 64
    %v3940 = vpop.permute.xlu0 %3939
    %v3942 = vmul.f32 %v3932, %v3940
    %3944 = vrot.lane.b32.xlu0 %v3942, 32
    %v3945 = vpop.permute.xlu0 %3944
    %v3947 = vadd.f32 %v3937, %v3945
    %v3948 = vtanh.pop %v3947
    %3950 = vrot.lane.b32.xlu0 %v3948, 64
    %v3951 = vpop.permute.xlu0 %3950
    %v3953 = vmul.f32 %v3932, %v3951
    %3955 = vrot.lane.b32.xlu0 %v3926, 32
    %v3956 = vpop.permute.xlu0 %3955
    %3958 = vst.msk [vmem:[#allocation8 + $0x8] sm:$0xc0] %vm1126, %v3956
    %3960 = vrot.lane.b32.xlu0 %v3953, 64
    %v3961 = vpop.permute.xlu0 %3960
    %3963 = vst.msk [vmem:[#allocation8] sm:$0x3] %vm1132, %v3961
    %3964 = vst.msk [vmem:[#allocation9 - $0x2] sm:$0xc0] %vm1126, %v3956
    %3966 = vrot.lane.b32.xlu0 %v3920, 96
    %v3967 = vpop.permute.xlu0 %3966
    %3969 = vst.msk [vmem:[#allocation11 - $0x2] sm:$0xc0] %vm1126, %v3967
    %3970 = vrot.lane.b32.xlu0 %v3953, 32
    %v3971 = vpop.permute.xlu0 %3970
    %3973 = vst.msk [vmem:[#allocation9 + $0x6] sm:$0x3] %vm460, %v3971
    %3975 = vrot.lane.b32.xlu0 %v3947, 96
    %v3976 = vpop.permute.xlu0 %3975
    %3978 = vst.msk [vmem:[#allocation11 + $0x6] sm:$0x3] %vm460, %v3976
    // Predicated region
    $region30: #{tpu_custom_call.1} parent=1 // pred_check
      _
    $region31: #{tpu_custom_call.1} parent=1 // pred_check_branch
      %3980 = sbr.rel (0) target = $region33
    $region32: #{tpu_custom_call.1} parent=1 // pred_region
      %s3982 = ssub.s32 256, 256
      %3983 = vsyncadd [#allocation5], %s3982
      %s3984 = sshll.u32 [#allocation8], 4
      %s3985 = int_to_ptr.vmem [resolvable:$true] %s3984
      %3990 = dma.vmem_to_hbm [thread:$0]  %s3985, 256, %s5, [#allocation5], 128, 128, 8
    $region33: #{tpu_custom_call.1} parent=1 // pred_fallthru
      _
    // Predicated region
    $region34: #{tpu_custom_call.1} parent=1 // pred_check
      _
    $region35: #{tpu_custom_call.1} parent=1 // pred_check_branch
      %3992 = sbr.rel (0) target = $region37
    $region36: #{tpu_custom_call.1} parent=1 // pred_region
      %s3994 = ssub.s32 128, 128
      %3995 = vsyncadd [#allocation10], %s3994
      %s3997 = sshll.u32 [#allocation9], 4
      %s3998 = int_to_ptr.vmem [resolvable:$true] %s3997
      %4000 = dma.vmem_to_hbm [thread:$0]  %s3998, 128, %s6, [#allocation10]
    $region37: #{tpu_custom_call.1} parent=1 // pred_fallthru
      _
    // Predicated region
    $region38: #{tpu_custom_call.1} parent=1 // pred_check
      _
    $region39: #{tpu_custom_call.1} parent=1 // pred_check_branch
      %4002 = sbr.rel (0) target = $region41
    $region40: #{tpu_custom_call.1} parent=1 // pred_region
      %s4004 = ssub.s32 128, 128
      %4005 = vsyncadd [#allocation10], %s4004
      %s4007 = sshll.u32 [#allocation11], 4
      %s4008 = int_to_ptr.vmem [resolvable:$true] %s4007
      %4010 = dma.vmem_to_hbm [thread:$0]  %s4008, 128, %s7, [#allocation10]
    $region41: #{tpu_custom_call.1} parent=1 // pred_fallthru
      _
    // Predicated region
    $region42: #{tpu_custom_call.1} parent=1 // pred_check
      _
    $region43: #{tpu_custom_call.1} parent=1 // pred_check_branch
      %4012 = sbr.rel (0) target = $region45
    $region44: #{tpu_custom_call.1} parent=1 // pred_region
      %4013 = dma.done [#allocation5], 256
    $region45: #{tpu_custom_call.1} parent=1 // pred_fallthru
      _
    // Predicated region
    $region46: #{tpu_custom_call.1} parent=1 // pred_check
      _
    $region47: #{tpu_custom_call.1} parent=1 // pred_check_branch
      %4015 = sbr.rel (0) target = $region49
    $region48: #{tpu_custom_call.1} parent=1 // pred_region
      %4016 = dma.done [#allocation10], 128
    $region49: #{tpu_custom_call.1} parent=1 // pred_fallthru
      _
    // Predicated region
    $region50: #{tpu_custom_call.1} parent=1 // pred_check
      _
    $region51: #{tpu_custom_call.1} parent=1 // pred_check_branch
      %4018 = sbr.rel (0) target = $region53
    $region52: #{tpu_custom_call.1} parent=1 // pred_region
      %4019 = dma.done [#allocation10], 128
    $region53: #{tpu_custom_call.1} parent=1 // pred_fallthru
      _
    %4020 = vsyncpa [#allocation4], 1
    %4021 = vsyncpa [#allocation7], 1
    %4022 = vsyncpa [#allocation5], 1
    %4023 = vsyncpa [#allocation10], 1

</llo_original>
